<compile_context>
chip_gen: v7x
topology: tpu7x:2x2x1
jax: 0.10.0
libtpu: 0.0.40
codegen_flags: <defaults>
</compile_context>

<pallas_src>
import functools

import jax
import jax.numpy as jnp
from jax import lax
from jax.experimental import pallas as pl
from jax.experimental.pallas import tpu as pltpu


_VMEM = pl.BlockSpec(memory_space=pltpu.MemorySpace.VMEM)


# ------------------------------ slab layout ----------------------------------

def _layout(input_dim, hidden, num_lstm, output_dim):
    """Static row/col offsets of every parameter inside the packed slabs."""
    r8 = lambda n: ((n + 7) // 8) * 8
    r128 = lambda n: ((n + 127) // 128) * 128
    lay = {}
    # 32-wide conv weight slab (columns = hidden)
    r = 0
    lay["conv_w"] = []
    for fin in [input_dim] + [hidden] * 4:
        lay["conv_w"].append(r)
        r += r8(fin)
    lay["conv_rows"] = r
    # 128-wide slab: LSTM W_ih / W_hh per layer + padded fc_w
    r = 0
    lay["wih"], lay["whh"] = [], []
    for _ in range(num_lstm):
        lay["wih"].append(r); r += r8(hidden)
        lay["whh"].append(r); r += r8(hidden)
    lay["fc_w"] = r; r += r8(hidden)
    lay["wide_rows"] = r
    lay["wide_width"] = max(4 * hidden, r128(output_dim))
    # bias slab rows
    lay["conv_b"] = list(range(5))
    lay["lstm_b"] = [5 + l for l in range(num_lstm)]
    lay["fc_b"] = 5 + num_lstm
    lay["bias_rows"] = 6 + num_lstm
    return lay


def _reorder_gates(w, hidden, axis=-1):
    """PyTorch gate order (i, f, g, o) -> lane-dense (i, f, o, g)."""
    parts = [lax.slice_in_dim(w, k * hidden, (k + 1) * hidden, axis=axis)
             for k in (0, 1, 3, 2)]
    return jnp.concatenate(parts, axis=axis)


# ------------------------------ fused kernel --------------------------------

def make_glstm7_kernel(n_nodes, t_seq, input_dim, hidden, num_lstm, lay):
    """Build the fully fused forward kernel (everything VMEM-resident)."""
    nt = n_nodes * t_seq
    h4 = 4 * hidden
    bf16 = jnp.bfloat16
    f32 = jnp.float32
    conv_fins = [input_dim] + [hidden] * 4

    def kernel(x_ref, adj_ref, w32_ref, w128_ref, bias_ref, out_ref,
               gx_ref, seq_ref):

        def gcn(h, conv_idx, adj_idx):
            # relu(A_exp @ (h @ W) + b); A_exp also encodes any row re-ordering.
            w = w32_ref[pl.ds(lay["conv_w"][conv_idx], conv_fins[conv_idx]), :]
            hw = jnp.dot(h.astype(bf16), w, preferred_element_type=f32)
            a = adj_ref[pl.ds(adj_idx * nt, nt), :]
            agg = jnp.dot(a, hw.astype(bf16), preferred_element_type=f32)
            b = bias_ref[pl.ds(lay["conv_b"][conv_idx], 1), pl.ds(0, hidden)]
            return jnp.maximum(agg + b, 0.0)

        # conv1: node-major input -> time-major output (reorder folded into adj 0)
        cur = gcn(x_ref[...], 0, 0)
        # F.dropout(training=False) -> identity.

        # ---- stacked LSTM, wavefront-interleaved across layers -------------
        wih = [w128_ref[pl.ds(lay["wih"][l], hidden), pl.ds(0, h4)]
               for l in range(num_lstm)]
        whh = [w128_ref[pl.ds(lay["whh"][l], hidden), pl.ds(0, h4)]
               for l in range(num_lstm)]
        lb = [bias_ref[pl.ds(lay["lstm_b"][l], 1), pl.ds(0, h4)]
              for l in range(num_lstm)]

        # layer-0 input projection hoisted over all time steps (one big matmul)
        gx_ref[...] = (jnp.dot(cur.astype(bf16), wih[0],
                               preferred_element_type=f32) + lb[0])

        h_st = [jnp.zeros((n_nodes, hidden), f32) for _ in range(num_lstm)]
        c_st = [jnp.zeros((n_nodes, hidden), f32) for _ in range(num_lstm)]
        last_out = [None] * num_lstm

        def cell(pre, l):
            gates = pre + jnp.dot(h_st[l].astype(bf16), whh[l],
                                  preferred_element_type=f32)
            # gate columns reordered to (i, f, o, g) -> lane-dense nonlinearities
            sig = jax.nn.sigmoid(gates[:, :3 * hidden])
            g_g = jnp.tanh(gates[:, 3 * hidden:])
            i_g = sig[:, :hidden]
            f_g = sig[:, hidden:2 * hidden]
            o_g = sig[:, 2 * hidden:3 * hidden]
            c_st[l] = f_g * c_st[l] + i_g * g_g
            h_st[l] = o_g * jnp.tanh(c_st[l])
            return h_st[l]

        # wavefront: super-step s runs layer l at time t = s - l; layer l>0
        # consumes layer l-1's output from the previous super-step (1-step lag).
        for s in range(t_seq + num_lstm - 1):
            new_out = list(last_out)
            for l in range(num_lstm):
                t = s - l
                if 0 <= t < t_seq:
                    if l == 0:
                        pre = gx_ref[pl.ds(t * n_nodes, n_nodes), :]
                    else:
                        pre = (jnp.dot(last_out[l - 1].astype(bf16), wih[l],
                                       preferred_element_type=f32) + lb[l])
                    h_new = cell(pre, l)
                    new_out[l] = h_new
                    if l == num_lstm - 1:
                        seq_ref[pl.ds(t * n_nodes, n_nodes), :] = h_new
            last_out = new_out

        cur = seq_ref[...]
        # conv2..4: time-major in/out; conv5: time-major -> node-major.
        cur = gcn(cur, 1, 1)
        cur = gcn(cur, 2, 1)
        cur = gcn(cur, 3, 1)
        cur = gcn(cur, 4, 2)

        # FC + sigmoid into lane-dense (128-wide padded) output buffer.
        fcw = w128_ref[pl.ds(lay["fc_w"], hidden), :]
        fcb = bias_ref[pl.ds(lay["fc_b"], 1), :]
        out_ref[...] = jax.nn.sigmoid(
            jnp.dot(cur.astype(bf16), fcw, preferred_element_type=f32) + fcb)

    return kernel


# ------------------------------ jitted wrapper -------------------------------

@functools.partial(jax.jit, static_argnames=("n_nodes", "t_seq", "hidden",
                                              "num_lstm", "output_dim"))
def glstm7_forward(x, prepared, *, n_nodes, t_seq, hidden, num_lstm, output_dim):
    nt = n_nodes * t_seq
    input_dim = x.shape[-1]
    lay = _layout(input_dim, hidden, num_lstm, output_dim)
    x2d = x.reshape(nt, input_dim)                   # node-major flat [N*T, Fin]
    kernel = make_glstm7_kernel(n_nodes, t_seq, input_dim, hidden, num_lstm, lay)
    out = pl.pallas_call(
        kernel,
        out_shape=jax.ShapeDtypeStruct((nt, lay["wide_width"]), jnp.float32),
        in_specs=[_VMEM] * 5,
        out_specs=_VMEM,
        scratch_shapes=[pltpu.VMEM((nt, 4 * hidden), jnp.float32),   # gx (layer 0)
                        pltpu.VMEM((nt, hidden), jnp.float32)],      # LSTM seq out
    )(x2d, prepared["adj"], prepared["w32"], prepared["w128"], prepared["bias"])
    return out[:, :output_dim].reshape(n_nodes, t_seq, output_dim)


# ------------------------------ static precompute ----------------------------

def normalized_adjacency(edge_index, num_nodes):
    """A_hat = D^-1/2 (A + I) D^-1/2, matching GCNConv normalization."""
    src, dst = edge_index[0], edge_index[1]
    a = jnp.zeros((num_nodes, num_nodes), jnp.float32)
    a = a.at[dst, src].add(1.0)
    a = a + jnp.eye(num_nodes, dtype=jnp.float32)
    deg = jnp.sum(a, axis=1)
    d_inv_sqrt = jnp.where(deg > 0, 1.0 / jnp.sqrt(deg), 0.0)
    return a * d_inv_sqrt[:, None] * d_inv_sqrt[None, :]


def prepare(params, edge_index, n_nodes, t_seq):
    """Pack everything that only depends on params / edge_index into 4 slabs:
    adjacency slab (bf16), conv-weight slab (bf16), LSTM/FC weight slab (bf16),
    bias slab (f32). Kron-expanded adjacencies fold all layout changes."""
    input_dim = params["conv1_w"].shape[0]
    hidden = params["conv1_w"].shape[1]
    num_lstm = len(params["lstm"])
    output_dim = params["fc_w"].shape[1]
    lay = _layout(input_dim, hidden, num_lstm, output_dim)
    nt = n_nodes * t_seq
    wide = lay["wide_width"]

    a_hat = normalized_adjacency(edge_index, n_nodes)
    eye_t = jnp.eye(t_seq, dtype=jnp.float32)
    # conv1: rows time-major (t,n), cols node-major (m,s):  A[n,m] * delta(t,s)
    a1 = (eye_t[:, None, None, :] * a_hat[None, :, :, None]).reshape(nt, nt)
    # conv2..4: rows & cols time-major
    a_mid = jnp.kron(eye_t, a_hat)
    # conv5: rows node-major (n,t), cols time-major (s,m)
    a_last = (a_hat[:, None, None, :] * eye_t[None, :, :, None]).reshape(nt, nt)
    adj = jnp.concatenate([a1, a_mid, a_last], axis=0).astype(jnp.bfloat16)

    # conv weight slab [conv_rows, hidden]
    w32 = jnp.zeros((lay["conv_rows"], hidden), jnp.float32)
    for i in range(5):
        w = params[f"conv{i + 1}_w"]
        off = lay["conv_w"][i]
        w32 = w32.at[off:off + w.shape[0], :].set(w)
    w32 = w32.astype(jnp.bfloat16)

    # 128-wide slab: LSTM weights (gate-reordered) + padded fc_w
    w128 = jnp.zeros((lay["wide_rows"], wide), jnp.float32)
    for l, (wih, whh, _) in enumerate(params["lstm"]):
        w128 = w128.at[lay["wih"][l]:lay["wih"][l] + wih.shape[0],
                       :4 * hidden].set(_reorder_gates(wih, hidden, axis=1))
        w128 = w128.at[lay["whh"][l]:lay["whh"][l] + hidden,
                       :4 * hidden].set(_reorder_gates(whh, hidden, axis=1))
    w128 = w128.at[lay["fc_w"]:lay["fc_w"] + hidden,
                   :output_dim].set(params["fc_w"])
    w128 = w128.astype(jnp.bfloat16)

    # bias slab (f32)
    bias = jnp.zeros((lay["bias_rows"], wide), jnp.float32)
    for i in range(5):
        bias = bias.at[lay["conv_b"][i], :hidden].set(params[f"conv{i + 1}_b"])
    for l, (_, _, b) in enumerate(params["lstm"]):
        bias = bias.at[lay["lstm_b"][l],
                       :4 * hidden].set(_reorder_gates(b, hidden, axis=0))
    bias = bias.at[lay["fc_b"], :output_dim].set(params["fc_b"].reshape(-1))

    return {"adj": adj, "w32": w32, "w128": w128, "bias": bias}


# ------------------------------ param init -----------------------------------

def init_params(key, input_dim, hidden, lstm_hidden, num_lstm_layers, output_dim):
    params = {}
    dims = [(input_dim, hidden), (hidden, hidden), (hidden, hidden),
            (hidden, hidden), (hidden, hidden)]
    for idx, (fin, fout) in enumerate(dims, start=1):
        key, kw, kb = jax.random.split(key, 3)
        k = 1.0 / jnp.sqrt(fin)
        params[f"conv{idx}_w"] = jax.random.uniform(kw, (fin, fout), jnp.float32, -k, k)
        params[f"conv{idx}_b"] = jax.random.uniform(kb, (fout,), jnp.float32, -k, k)

    lstm_params = []
    for i in range(num_lstm_layers):
        hin = hidden if i == 0 else lstm_hidden
        key, k1, k2, k3, k4 = jax.random.split(key, 5)
        k = 1.0 / jnp.sqrt(lstm_hidden)
        wih = jax.random.uniform(k1, (hin, 4 * lstm_hidden), jnp.float32, -k, k)
        whh = jax.random.uniform(k2, (lstm_hidden, 4 * lstm_hidden), jnp.float32, -k, k)
        b_ih = jax.random.uniform(k3, (4 * lstm_hidden,), jnp.float32, -k, k)
        b_hh = jax.random.uniform(k4, (4 * lstm_hidden,), jnp.float32, -k, k)
        lstm_params.append((wih, whh, b_ih + b_hh))      # bias kept 1-D, (i,f,g,o)
    params["lstm"] = lstm_params

    key, kw, kb = jax.random.split(key, 3)
    k = 1.0 / jnp.sqrt(hidden)
    params["fc_w"] = jax.random.uniform(kw, (hidden, output_dim), jnp.float32, -k, k)
    params["fc_b"] = jax.random.uniform(kb, (1, output_dim), jnp.float32, -k, k)
    return params


# ------------------------------ pure-JAX reference ---------------------------

def reference_forward(x, edge_index, params):
    n_nodes, _, _ = x.shape
    a_hat = normalized_adjacency(edge_index, n_nodes)

    def gcn(h, w, b):
        hw = jnp.einsum("ntf,fg->ntg", h, w)
        return jax.nn.relu(jnp.einsum("nm,mtg->ntg", a_hat, hw) + b)

    def lstm(h, wih, whh, b):
        hdim = whh.shape[0]

        def step(carry, x_t):
            hh, cc = carry
            gates = x_t @ wih + hh @ whh + b
            i_g = jax.nn.sigmoid(gates[:, 0 * hdim:1 * hdim])
            f_g = jax.nn.sigmoid(gates[:, 1 * hdim:2 * hdim])
            g_g = jnp.tanh(gates[:, 2 * hdim:3 * hdim])
            o_g = jax.nn.sigmoid(gates[:, 3 * hdim:4 * hdim])
            cc = f_g * cc + i_g * g_g
            hh = o_g * jnp.tanh(cc)
            return (hh, cc), hh

        x_tm = jnp.transpose(h, (1, 0, 2))
        init = (jnp.zeros((n_nodes, hdim), jnp.float32),
                jnp.zeros((n_nodes, hdim), jnp.float32))
        _, ys = lax.scan(step, init, x_tm)
        return jnp.transpose(ys, (1, 0, 2))

    h = gcn(x, params["conv1_w"], params["conv1_b"])
    for (wih, whh, b) in params["lstm"]:
        h = lstm(h, wih, whh, b)
    h = gcn(h, params["conv2_w"], params["conv2_b"])
    h = gcn(h, params["conv3_w"], params["conv3_b"])
    h = gcn(h, params["conv4_w"], params["conv4_b"])
    h = gcn(h, params["conv5_w"], params["conv5_b"])
    return jax.nn.sigmoid(jnp.einsum("ntf,fg->ntg", h, params["fc_w"])
                          + params["fc_b"])


# --------------------------------- main ---------------------------------------

if __name__ == "__main__":
    N_NODES = 16        # graph nodes (LSTM batch dim)
    T_SEQ = 8           # time steps (LSTM seq dim)
    INPUT_DIM = 8
    HIDDEN = 32         # hidden_dim1..5 == lstm_hidden_dim (required for consistency)
    OUTPUT_DIM = 8
    NUM_LSTM = 2

    key = jax.random.PRNGKey(0)
    key, kx = jax.random.split(key)
    x = jax.random.normal(kx, (N_NODES, T_SEQ, INPUT_DIM), jnp.float32)

    # bidirectional ring graph
    idx = jnp.arange(N_NODES, dtype=jnp.int32)
    src = jnp.concatenate([idx, (idx + 1) % N_NODES])
    dst = jnp.concatenate([(idx + 1) % N_NODES, idx])
    edge_index = jnp.stack([src, dst])               # [2, 2N]

    params = init_params(key, INPUT_DIM, HIDDEN, HIDDEN, NUM_LSTM, OUTPUT_DIM)
    prepared = prepare(params, edge_index, N_NODES, T_SEQ)

    out = glstm7_forward(x, prepared, n_nodes=N_NODES, t_seq=T_SEQ,
                         hidden=HIDDEN, num_lstm=NUM_LSTM, output_dim=OUTPUT_DIM)
    out = jax.block_until_ready(out)
    assert out.shape == (N_NODES, T_SEQ, OUTPUT_DIM)

    ref = jax.block_until_ready(reference_forward(x, edge_index, params))
    max_err = float(jnp.max(jnp.abs(out - ref)))
    # tolerance relaxed vs f32-only version: matmul operands are bf16 (f32 accum)
    assert max_err < 3e-2, f"mismatch vs reference: {max_err}"
    print("KERNEL_OK")
</pallas_src>

<mosaic_0001>
module attributes {stable_mosaic.version = 11 : i64} {
  func.func @kernel(%arg0: memref<128x8xf32, #tpu.memory_space<vmem>>, %arg1: memref<384x128xbf16, #tpu.memory_space<vmem>>, %arg2: memref<136x32xbf16, #tpu.memory_space<vmem>>, %arg3: memref<160x128xbf16, #tpu.memory_space<vmem>>, %arg4: memref<8x128xf32, #tpu.memory_space<vmem>>, %arg5: memref<128x128xf32, #tpu.memory_space<vmem>>, %arg6: memref<128x128xf32, #tpu.memory_space<vmem>>, %arg7: memref<128x32xf32, #tpu.memory_space<vmem>>) attributes {dimension_semantics = [], scalar_prefetch = 0 : i64, scratch_operands = 2 : i64, tpu.core_type = #tpu.core_type<tc>} {
    %c0 = arith.constant 0 : index
    %c0_0 = arith.constant 0 : index
    %0 = vector.load %arg0[%c0, %c0_0] : memref<128x8xf32, #tpu.memory_space<vmem>>, vector<128x8xf32>
    %c0_1 = arith.constant 0 : index
    %c0_2 = arith.constant 0 : index
    %1 = vector.load %arg2[%c0_1, %c0_2] : memref<136x32xbf16, #tpu.memory_space<vmem>>, vector<8x32xbf16>
    %2 = arith.truncf %0 : vector<128x8xf32> to vector<128x8xbf16>
    %cst = arith.constant dense<0.000000e+00> : vector<128x32xf32>
    %3 = tpu.matmul %2, %1, %cst {dimension_numbers = #tpu.dot_dimension_numbers<[1], [0], [0], [1], [0, 0, 1, 1], [], []>} : vector<128x8xbf16>, vector<8x32xbf16>, vector<128x32xf32> -> vector<128x32xf32>
    %c0_3 = arith.constant 0 : index
    %c0_4 = arith.constant 0 : index
    %4 = vector.load %arg1[%c0_3, %c0_4] : memref<384x128xbf16, #tpu.memory_space<vmem>>, vector<128x128xbf16>
    %5 = arith.truncf %3 : vector<128x32xf32> to vector<128x32xbf16>
    %cst_5 = arith.constant dense<0.000000e+00> : vector<128x32xf32>
    %6 = tpu.matmul %4, %5, %cst_5 {dimension_numbers = #tpu.dot_dimension_numbers<[1], [0], [0], [1], [0, 0, 1, 1], [], []>} : vector<128x128xbf16>, vector<128x32xbf16>, vector<128x32xf32> -> vector<128x32xf32>
    %c0_6 = arith.constant 0 : index
    %c0_7 = arith.constant 0 : index
    %7 = vector.load %arg4[%c0_6, %c0_7] : memref<8x128xf32, #tpu.memory_space<vmem>>, vector<1x32xf32>
    %8 = vector.broadcast %7 : vector<1x32xf32> to vector<128x32xf32>
    %9 = arith.addf %6, %8 : vector<128x32xf32>
    %cst_8 = arith.constant 0.000000e+00 : f32
    %10 = vector.broadcast %cst_8 : f32 to vector<128x32xf32>
    %11 = arith.maximumf %9, %10 : vector<128x32xf32>
    %c0_9 = arith.constant 0 : index
    %c0_10 = arith.constant 0 : index
    %12 = vector.load %arg3[%c0_9, %c0_10] : memref<160x128xbf16, #tpu.memory_space<vmem>>, vector<32x128xbf16>
    %c64 = arith.constant 64 : index
    %c0_11 = arith.constant 0 : index
    %13 = vector.load %arg3[%c64, %c0_11] : memref<160x128xbf16, #tpu.memory_space<vmem>>, vector<32x128xbf16>
    %c32 = arith.constant 32 : index
    %c0_12 = arith.constant 0 : index
    %14 = vector.load %arg3[%c32, %c0_12] : memref<160x128xbf16, #tpu.memory_space<vmem>>, vector<32x128xbf16>
    %c96 = arith.constant 96 : index
    %c0_13 = arith.constant 0 : index
    %15 = vector.load %arg3[%c96, %c0_13] : memref<160x128xbf16, #tpu.memory_space<vmem>>, vector<32x128xbf16>
    %c5 = arith.constant 5 : index
    %c0_14 = arith.constant 0 : index
    %16 = vector.load %arg4[%c5, %c0_14] : memref<8x128xf32, #tpu.memory_space<vmem>>, vector<1x128xf32>
    %c6 = arith.constant 6 : index
    %c0_15 = arith.constant 0 : index
    %17 = vector.load %arg4[%c6, %c0_15] : memref<8x128xf32, #tpu.memory_space<vmem>>, vector<1x128xf32>
    %18 = arith.truncf %11 : vector<128x32xf32> to vector<128x32xbf16>
    %cst_16 = arith.constant dense<0.000000e+00> : vector<128x128xf32>
    %19 = tpu.matmul %18, %12, %cst_16 {dimension_numbers = #tpu.dot_dimension_numbers<[1], [0], [0], [1], [0, 0, 1, 1], [], []>} : vector<128x32xbf16>, vector<32x128xbf16>, vector<128x128xf32> -> vector<128x128xf32>
    %20 = vector.broadcast %16 : vector<1x128xf32> to vector<128x128xf32>
    %21 = arith.addf %19, %20 : vector<128x128xf32>
    %c0_17 = arith.constant 0 : index
    %c0_18 = arith.constant 0 : index
    %22 = vector.load %arg6[%c0_17, %c0_18] : memref<128x128xf32, #tpu.memory_space<vmem>>, vector<128x128xf32>
    tpu.vector_store %arg6[%c0_17, %c0_18], %21 {strides = array<i32>} : memref<128x128xf32, #tpu.memory_space<vmem>>, vector<128x128xf32>,
    %cst_19 = arith.constant 0.000000e+00 : f32
    %23 = vector.broadcast %cst_19 : f32 to vector<16x32xf32>
    %cst_20 = arith.constant 0.000000e+00 : f32
    %24 = vector.broadcast %cst_20 : f32 to vector<16x32xf32>
    %cst_21 = arith.constant 0.000000e+00 : f32
    %25 = vector.broadcast %cst_21 : f32 to vector<16x32xf32>
    %cst_22 = arith.constant 0.000000e+00 : f32
    %26 = vector.broadcast %cst_22 : f32 to vector<16x32xf32>
    %c0_23 = arith.constant 0 : index
    %c0_24 = arith.constant 0 : index
    %27 = vector.load %arg6[%c0_23, %c0_24] : memref<128x128xf32, #tpu.memory_space<vmem>>, vector<16x128xf32>
    %28 = arith.truncf %23 : vector<16x32xf32> to vector<16x32xbf16>
    %cst_25 = arith.constant dense<0.000000e+00> : vector<16x128xf32>
    %29 = tpu.matmul %28, %14, %cst_25 {dimension_numbers = #tpu.dot_dimension_numbers<[1], [0], [0], [1], [0, 0, 1, 1], [], []>} : vector<16x32xbf16>, vector<32x128xbf16>, vector<16x128xf32> -> vector<16x128xf32>
    %30 = arith.addf %27, %29 : vector<16x128xf32>
    %31 = vector.extract_strided_slice %30 {offsets = [0, 0], sizes = [16, 96], strides = [1, 1]} : vector<16x128xf32> to vector<16x96xf32>
    %32 = arith.negf %31 : vector<16x96xf32>
    %33 = math.exp %32 : vector<16x96xf32>
    %cst_26 = arith.constant 1.000000e+00 : f32
    %34 = vector.broadcast %cst_26 : f32 to vector<16x96xf32>
    %35 = arith.addf %34, %33 : vector<16x96xf32>
    %36 = arith.divf %34, %35 : vector<16x96xf32>
    %37 = vector.extract_strided_slice %30 {offsets = [0, 96], sizes = [16, 32], strides = [1, 1]} : vector<16x128xf32> to vector<16x32xf32>
    %38 = math.tanh %37 : vector<16x32xf32>
    %39 = vector.extract_strided_slice %36 {offsets = [0, 0], sizes = [16, 32], strides = [1, 1]} : vector<16x96xf32> to vector<16x32xf32>
    %40 = vector.extract_strided_slice %36 {offsets = [0, 32], sizes = [16, 32], strides = [1, 1]} : vector<16x96xf32> to vector<16x32xf32>
    %41 = vector.extract_strided_slice %36 {offsets = [0, 64], sizes = [16, 32], strides = [1, 1]} : vector<16x96xf32> to vector<16x32xf32>
    %42 = arith.mulf %40, %25 : vector<16x32xf32>
    %43 = arith.mulf %39, %38 : vector<16x32xf32>
    %44 = arith.addf %42, %43 : vector<16x32xf32>
    %45 = math.tanh %44 : vector<16x32xf32>
    %46 = arith.mulf %41, %45 : vector<16x32xf32>
    %c16 = arith.constant 16 : index
    %c0_27 = arith.constant 0 : index
    %47 = vector.load %arg6[%c16, %c0_27] : memref<128x128xf32, #tpu.memory_space<vmem>>, vector<16x128xf32>
    %48 = arith.truncf %46 : vector<16x32xf32> to vector<16x32xbf16>
    %cst_28 = arith.constant dense<0.000000e+00> : vector<16x128xf32>
    %49 = tpu.matmul %48, %14, %cst_28 {dimension_numbers = #tpu.dot_dimension_numbers<[1], [0], [0], [1], [0, 0, 1, 1], [], []>} : vector<16x32xbf16>, vector<32x128xbf16>, vector<16x128xf32> -> vector<16x128xf32>
    %50 = arith.addf %47, %49 : vector<16x128xf32>
    %51 = vector.extract_strided_slice %50 {offsets = [0, 0], sizes = [16, 96], strides = [1, 1]} : vector<16x128xf32> to vector<16x96xf32>
    %52 = arith.negf %51 : vector<16x96xf32>
    %53 = math.exp %52 : vector<16x96xf32>
    %cst_29 = arith.constant 1.000000e+00 : f32
    %54 = vector.broadcast %cst_29 : f32 to vector<16x96xf32>
    %55 = arith.addf %54, %53 : vector<16x96xf32>
    %56 = arith.divf %54, %55 : vector<16x96xf32>
    %57 = vector.extract_strided_slice %50 {offsets = [0, 96], sizes = [16, 32], strides = [1, 1]} : vector<16x128xf32> to vector<16x32xf32>
    %58 = math.tanh %57 : vector<16x32xf32>
    %59 = vector.extract_strided_slice %56 {offsets = [0, 0], sizes = [16, 32], strides = [1, 1]} : vector<16x96xf32> to vector<16x32xf32>
    %60 = vector.extract_strided_slice %56 {offsets = [0, 32], sizes = [16, 32], strides = [1, 1]} : vector<16x96xf32> to vector<16x32xf32>
    %61 = vector.extract_strided_slice %56 {offsets = [0, 64], sizes = [16, 32], strides = [1, 1]} : vector<16x96xf32> to vector<16x32xf32>
    %62 = arith.mulf %60, %44 : vector<16x32xf32>
    %63 = arith.mulf %59, %58 : vector<16x32xf32>
    %64 = arith.addf %62, %63 : vector<16x32xf32>
    %65 = math.tanh %64 : vector<16x32xf32>
    %66 = arith.mulf %61, %65 : vector<16x32xf32>
    %67 = arith.truncf %46 : vector<16x32xf32> to vector<16x32xbf16>
    %cst_30 = arith.constant dense<0.000000e+00> : vector<16x128xf32>
    %68 = tpu.matmul %67, %13, %cst_30 {dimension_numbers = #tpu.dot_dimension_numbers<[1], [0], [0], [1], [0, 0, 1, 1], [], []>} : vector<16x32xbf16>, vector<32x128xbf16>, vector<16x128xf32> -> vector<16x128xf32>
    %69 = vector.broadcast %17 : vector<1x128xf32> to vector<16x128xf32>
    %70 = arith.addf %68, %69 : vector<16x128xf32>
    %71 = arith.truncf %24 : vector<16x32xf32> to vector<16x32xbf16>
    %cst_31 = arith.constant dense<0.000000e+00> : vector<16x128xf32>
    %72 = tpu.matmul %71, %15, %cst_31 {dimension_numbers = #tpu.dot_dimension_numbers<[1], [0], [0], [1], [0, 0, 1, 1], [], []>} : vector<16x32xbf16>, vector<32x128xbf16>, vector<16x128xf32> -> vector<16x128xf32>
    %73 = arith.addf %70, %72 : vector<16x128xf32>
    %74 = vector.extract_strided_slice %73 {offsets = [0, 0], sizes = [16, 96], strides = [1, 1]} : vector<16x128xf32> to vector<16x96xf32>
    %75 = arith.negf %74 : vector<16x96xf32>
    %76 = math.exp %75 : vector<16x96xf32>
    %cst_32 = arith.constant 1.000000e+00 : f32
    %77 = vector.broadcast %cst_32 : f32 to vector<16x96xf32>
    %78 = arith.addf %77, %76 : vector<16x96xf32>
    %79 = arith.divf %77, %78 : vector<16x96xf32>
    %80 = vector.extract_strided_slice %73 {offsets = [0, 96], sizes = [16, 32], strides = [1, 1]} : vector<16x128xf32> to vector<16x32xf32>
    %81 = math.tanh %80 : vector<16x32xf32>
    %82 = vector.extract_strided_slice %79 {offsets = [0, 0], sizes = [16, 32], strides = [1, 1]} : vector<16x96xf32> to vector<16x32xf32>
    %83 = vector.extract_strided_slice %79 {offsets = [0, 32], sizes = [16, 32], strides = [1, 1]} : vector<16x96xf32> to vector<16x32xf32>
    %84 = vector.extract_strided_slice %79 {offsets = [0, 64], sizes = [16, 32], strides = [1, 1]} : vector<16x96xf32> to vector<16x32xf32>
    %85 = arith.mulf %83, %26 : vector<16x32xf32>
    %86 = arith.mulf %82, %81 : vector<16x32xf32>
    %87 = arith.addf %85, %86 : vector<16x32xf32>
    %88 = math.tanh %87 : vector<16x32xf32>
    %89 = arith.mulf %84, %88 : vector<16x32xf32>
    %c0_33 = arith.constant 0 : index
    %c0_34 = arith.constant 0 : index
    %90 = vector.load %arg7[%c0_33, %c0_34] : memref<128x32xf32, #tpu.memory_space<vmem>>, vector<16x32xf32>
    tpu.vector_store %arg7[%c0_33, %c0_34], %89 {strides = array<i32>} : memref<128x32xf32, #tpu.memory_space<vmem>>, vector<16x32xf32>,
    %c32_35 = arith.constant 32 : index
    %c0_36 = arith.constant 0 : index
    %91 = vector.load %arg6[%c32_35, %c0_36] : memref<128x128xf32, #tpu.memory_space<vmem>>, vector<16x128xf32>
    %92 = arith.truncf %66 : vector<16x32xf32> to vector<16x32xbf16>
    %cst_37 = arith.constant dense<0.000000e+00> : vector<16x128xf32>
    %93 = tpu.matmul %92, %14, %cst_37 {dimension_numbers = #tpu.dot_dimension_numbers<[1], [0], [0], [1], [0, 0, 1, 1], [], []>} : vector<16x32xbf16>, vector<32x128xbf16>, vector<16x128xf32> -> vector<16x128xf32>
    %94 = arith.addf %91, %93 : vector<16x128xf32>
    %95 = vector.extract_strided_slice %94 {offsets = [0, 0], sizes = [16, 96], strides = [1, 1]} : vector<16x128xf32> to vector<16x96xf32>
    %96 = arith.negf %95 : vector<16x96xf32>
    %97 = math.exp %96 : vector<16x96xf32>
    %cst_38 = arith.constant 1.000000e+00 : f32
    %98 = vector.broadcast %cst_38 : f32 to vector<16x96xf32>
    %99 = arith.addf %98, %97 : vector<16x96xf32>
    %100 = arith.divf %98, %99 : vector<16x96xf32>
    %101 = vector.extract_strided_slice %94 {offsets = [0, 96], sizes = [16, 32], strides = [1, 1]} : vector<16x128xf32> to vector<16x32xf32>
    %102 = math.tanh %101 : vector<16x32xf32>
    %103 = vector.extract_strided_slice %100 {offsets = [0, 0], sizes = [16, 32], strides = [1, 1]} : vector<16x96xf32> to vector<16x32xf32>
    %104 = vector.extract_strided_slice %100 {offsets = [0, 32], sizes = [16, 32], strides = [1, 1]} : vector<16x96xf32> to vector<16x32xf32>
    %105 = vector.extract_strided_slice %100 {offsets = [0, 64], sizes = [16, 32], strides = [1, 1]} : vector<16x96xf32> to vector<16x32xf32>
    %106 = arith.mulf %104, %64 : vector<16x32xf32>
    %107 = arith.mulf %103, %102 : vector<16x32xf32>
    %108 = arith.addf %106, %107 : vector<16x32xf32>
    %109 = math.tanh %108 : vector<16x32xf32>
    %110 = arith.mulf %105, %109 : vector<16x32xf32>
    %111 = arith.truncf %66 : vector<16x32xf32> to vector<16x32xbf16>
    %cst_39 = arith.constant dense<0.000000e+00> : vector<16x128xf32>
    %112 = tpu.matmul %111, %13, %cst_39 {dimension_numbers = #tpu.dot_dimension_numbers<[1], [0], [0], [1], [0, 0, 1, 1], [], []>} : vector<16x32xbf16>, vector<32x128xbf16>, vector<16x128xf32> -> vector<16x128xf32>
    %113 = vector.broadcast %17 : vector<1x128xf32> to vector<16x128xf32>
    %114 = arith.addf %112, %113 : vector<16x128xf32>
    %115 = arith.truncf %89 : vector<16x32xf32> to vector<16x32xbf16>
    %cst_40 = arith.constant dense<0.000000e+00> : vector<16x128xf32>
    %116 = tpu.matmul %115, %15, %cst_40 {dimension_numbers = #tpu.dot_dimension_numbers<[1], [0], [0], [1], [0, 0, 1, 1], [], []>} : vector<16x32xbf16>, vector<32x128xbf16>, vector<16x128xf32> -> vector<16x128xf32>
    %117 = arith.addf %114, %116 : vector<16x128xf32>
    %118 = vector.extract_strided_slice %117 {offsets = [0, 0], sizes = [16, 96], strides = [1, 1]} : vector<16x128xf32> to vector<16x96xf32>
    %119 = arith.negf %118 : vector<16x96xf32>
    %120 = math.exp %119 : vector<16x96xf32>
    %cst_41 = arith.constant 1.000000e+00 : f32
    %121 = vector.broadcast %cst_41 : f32 to vector<16x96xf32>
    %122 = arith.addf %121, %120 : vector<16x96xf32>
    %123 = arith.divf %121, %122 : vector<16x96xf32>
    %124 = vector.extract_strided_slice %117 {offsets = [0, 96], sizes = [16, 32], strides = [1, 1]} : vector<16x128xf32> to vector<16x32xf32>
    %125 = math.tanh %124 : vector<16x32xf32>
    %126 = vector.extract_strided_slice %123 {offsets = [0, 0], sizes = [16, 32], strides = [1, 1]} : vector<16x96xf32> to vector<16x32xf32>
    %127 = vector.extract_strided_slice %123 {offsets = [0, 32], sizes = [16, 32], strides = [1, 1]} : vector<16x96xf32> to vector<16x32xf32>
    %128 = vector.extract_strided_slice %123 {offsets = [0, 64], sizes = [16, 32], strides = [1, 1]} : vector<16x96xf32> to vector<16x32xf32>
    %129 = arith.mulf %127, %87 : vector<16x32xf32>
    %130 = arith.mulf %126, %125 : vector<16x32xf32>
    %131 = arith.addf %129, %130 : vector<16x32xf32>
    %132 = math.tanh %131 : vector<16x32xf32>
    %133 = arith.mulf %128, %132 : vector<16x32xf32>
    %c16_42 = arith.constant 16 : index
    %c0_43 = arith.constant 0 : index
    %134 = vector.load %arg7[%c16_42, %c0_43] : memref<128x32xf32, #tpu.memory_space<vmem>>, vector<16x32xf32>
    tpu.vector_store %arg7[%c16_42, %c0_43], %133 {strides = array<i32>} : memref<128x32xf32, #tpu.memory_space<vmem>>, vector<16x32xf32>,
    %c48 = arith.constant 48 : index
    %c0_44 = arith.constant 0 : index
    %135 = vector.load %arg6[%c48, %c0_44] : memref<128x128xf32, #tpu.memory_space<vmem>>, vector<16x128xf32>
    %136 = arith.truncf %110 : vector<16x32xf32> to vector<16x32xbf16>
    %cst_45 = arith.constant dense<0.000000e+00> : vector<16x128xf32>
    %137 = tpu.matmul %136, %14, %cst_45 {dimension_numbers = #tpu.dot_dimension_numbers<[1], [0], [0], [1], [0, 0, 1, 1], [], []>} : vector<16x32xbf16>, vector<32x128xbf16>, vector<16x128xf32> -> vector<16x128xf32>
    %138 = arith.addf %135, %137 : vector<16x128xf32>
    %139 = vector.extract_strided_slice %138 {offsets = [0, 0], sizes = [16, 96], strides = [1, 1]} : vector<16x128xf32> to vector<16x96xf32>
    %140 = arith.negf %139 : vector<16x96xf32>
    %141 = math.exp %140 : vector<16x96xf32>
    %cst_46 = arith.constant 1.000000e+00 : f32
    %142 = vector.broadcast %cst_46 : f32 to vector<16x96xf32>
    %143 = arith.addf %142, %141 : vector<16x96xf32>
    %144 = arith.divf %142, %143 : vector<16x96xf32>
    %145 = vector.extract_strided_slice %138 {offsets = [0, 96], sizes = [16, 32], strides = [1, 1]} : vector<16x128xf32> to vector<16x32xf32>
    %146 = math.tanh %145 : vector<16x32xf32>
    %147 = vector.extract_strided_slice %144 {offsets = [0, 0], sizes = [16, 32], strides = [1, 1]} : vector<16x96xf32> to vector<16x32xf32>
    %148 = vector.extract_strided_slice %144 {offsets = [0, 32], sizes = [16, 32], strides = [1, 1]} : vector<16x96xf32> to vector<16x32xf32>
    %149 = vector.extract_strided_slice %144 {offsets = [0, 64], sizes = [16, 32], strides = [1, 1]} : vector<16x96xf32> to vector<16x32xf32>
    %150 = arith.mulf %148, %108 : vector<16x32xf32>
    %151 = arith.mulf %147, %146 : vector<16x32xf32>
    %152 = arith.addf %150, %151 : vector<16x32xf32>
    %153 = math.tanh %152 : vector<16x32xf32>
    %154 = arith.mulf %149, %153 : vector<16x32xf32>
    %155 = arith.truncf %110 : vector<16x32xf32> to vector<16x32xbf16>
    %cst_47 = arith.constant dense<0.000000e+00> : vector<16x128xf32>
    %156 = tpu.matmul %155, %13, %cst_47 {dimension_numbers = #tpu.dot_dimension_numbers<[1], [0], [0], [1], [0, 0, 1, 1], [], []>} : vector<16x32xbf16>, vector<32x128xbf16>, vector<16x128xf32> -> vector<16x128xf32>
    %157 = vector.broadcast %17 : vector<1x128xf32> to vector<16x128xf32>
    %158 = arith.addf %156, %157 : vector<16x128xf32>
    %159 = arith.truncf %133 : vector<16x32xf32> to vector<16x32xbf16>
    %cst_48 = arith.constant dense<0.000000e+00> : vector<16x128xf32>
    %160 = tpu.matmul %159, %15, %cst_48 {dimension_numbers = #tpu.dot_dimension_numbers<[1], [0], [0], [1], [0, 0, 1, 1], [], []>} : vector<16x32xbf16>, vector<32x128xbf16>, vector<16x128xf32> -> vector<16x128xf32>
    %161 = arith.addf %158, %160 : vector<16x128xf32>
    %162 = vector.extract_strided_slice %161 {offsets = [0, 0], sizes = [16, 96], strides = [1, 1]} : vector<16x128xf32> to vector<16x96xf32>
    %163 = arith.negf %162 : vector<16x96xf32>
    %164 = math.exp %163 : vector<16x96xf32>
    %cst_49 = arith.constant 1.000000e+00 : f32
    %165 = vector.broadcast %cst_49 : f32 to vector<16x96xf32>
    %166 = arith.addf %165, %164 : vector<16x96xf32>
    %167 = arith.divf %165, %166 : vector<16x96xf32>
    %168 = vector.extract_strided_slice %161 {offsets = [0, 96], sizes = [16, 32], strides = [1, 1]} : vector<16x128xf32> to vector<16x32xf32>
    %169 = math.tanh %168 : vector<16x32xf32>
    %170 = vector.extract_strided_slice %167 {offsets = [0, 0], sizes = [16, 32], strides = [1, 1]} : vector<16x96xf32> to vector<16x32xf32>
    %171 = vector.extract_strided_slice %167 {offsets = [0, 32], sizes = [16, 32], strides = [1, 1]} : vector<16x96xf32> to vector<16x32xf32>
    %172 = vector.extract_strided_slice %167 {offsets = [0, 64], sizes = [16, 32], strides = [1, 1]} : vector<16x96xf32> to vector<16x32xf32>
    %173 = arith.mulf %171, %131 : vector<16x32xf32>
    %174 = arith.mulf %170, %169 : vector<16x32xf32>
    %175 = arith.addf %173, %174 : vector<16x32xf32>
    %176 = math.tanh %175 : vector<16x32xf32>
    %177 = arith.mulf %172, %176 : vector<16x32xf32>
    %c32_50 = arith.constant 32 : index
    %c0_51 = arith.constant 0 : index
    %178 = vector.load %arg7[%c32_50, %c0_51] : memref<128x32xf32, #tpu.memory_space<vmem>>, vector<16x32xf32>
    tpu.vector_store %arg7[%c32_50, %c0_51], %177 {strides = array<i32>} : memref<128x32xf32, #tpu.memory_space<vmem>>, vector<16x32xf32>,
    %c64_52 = arith.constant 64 : index
    %c0_53 = arith.constant 0 : index
    %179 = vector.load %arg6[%c64_52, %c0_53] : memref<128x128xf32, #tpu.memory_space<vmem>>, vector<16x128xf32>
    %180 = arith.truncf %154 : vector<16x32xf32> to vector<16x32xbf16>
    %cst_54 = arith.constant dense<0.000000e+00> : vector<16x128xf32>
    %181 = tpu.matmul %180, %14, %cst_54 {dimension_numbers = #tpu.dot_dimension_numbers<[1], [0], [0], [1], [0, 0, 1, 1], [], []>} : vector<16x32xbf16>, vector<32x128xbf16>, vector<16x128xf32> -> vector<16x128xf32>
    %182 = arith.addf %179, %181 : vector<16x128xf32>
    %183 = vector.extract_strided_slice %182 {offsets = [0, 0], sizes = [16, 96], strides = [1, 1]} : vector<16x128xf32> to vector<16x96xf32>
    %184 = arith.negf %183 : vector<16x96xf32>
    %185 = math.exp %184 : vector<16x96xf32>
    %cst_55 = arith.constant 1.000000e+00 : f32
    %186 = vector.broadcast %cst_55 : f32 to vector<16x96xf32>
    %187 = arith.addf %186, %185 : vector<16x96xf32>
    %188 = arith.divf %186, %187 : vector<16x96xf32>
    %189 = vector.extract_strided_slice %182 {offsets = [0, 96], sizes = [16, 32], strides = [1, 1]} : vector<16x128xf32> to vector<16x32xf32>
    %190 = math.tanh %189 : vector<16x32xf32>
    %191 = vector.extract_strided_slice %188 {offsets = [0, 0], sizes = [16, 32], strides = [1, 1]} : vector<16x96xf32> to vector<16x32xf32>
    %192 = vector.extract_strided_slice %188 {offsets = [0, 32], sizes = [16, 32], strides = [1, 1]} : vector<16x96xf32> to vector<16x32xf32>
    %193 = vector.extract_strided_slice %188 {offsets = [0, 64], sizes = [16, 32], strides = [1, 1]} : vector<16x96xf32> to vector<16x32xf32>
    %194 = arith.mulf %192, %152 : vector<16x32xf32>
    %195 = arith.mulf %191, %190 : vector<16x32xf32>
    %196 = arith.addf %194, %195 : vector<16x32xf32>
    %197 = math.tanh %196 : vector<16x32xf32>
    %198 = arith.mulf %193, %197 : vector<16x32xf32>
    %199 = arith.truncf %154 : vector<16x32xf32> to vector<16x32xbf16>
    %cst_56 = arith.constant dense<0.000000e+00> : vector<16x128xf32>
    %200 = tpu.matmul %199, %13, %cst_56 {dimension_numbers = #tpu.dot_dimension_numbers<[1], [0], [0], [1], [0, 0, 1, 1], [], []>} : vector<16x32xbf16>, vector<32x128xbf16>, vector<16x128xf32> -> vector<16x128xf32>
    %201 = vector.broadcast %17 : vector<1x128xf32> to vector<16x128xf32>
    %202 = arith.addf %200, %201 : vector<16x128xf32>
    %203 = arith.truncf %177 : vector<16x32xf32> to vector<16x32xbf16>
    %cst_57 = arith.constant dense<0.000000e+00> : vector<16x128xf32>
    %204 = tpu.matmul %203, %15, %cst_57 {dimension_numbers = #tpu.dot_dimension_numbers<[1], [0], [0], [1], [0, 0, 1, 1], [], []>} : vector<16x32xbf16>, vector<32x128xbf16>, vector<16x128xf32> -> vector<16x128xf32>
    %205 = arith.addf %202, %204 : vector<16x128xf32>
    %206 = vector.extract_strided_slice %205 {offsets = [0, 0], sizes = [16, 96], strides = [1, 1]} : vector<16x128xf32> to vector<16x96xf32>
    %207 = arith.negf %206 : vector<16x96xf32>
    %208 = math.exp %207 : vector<16x96xf32>
    %cst_58 = arith.constant 1.000000e+00 : f32
    %209 = vector.broadcast %cst_58 : f32 to vector<16x96xf32>
    %210 = arith.addf %209, %208 : vector<16x96xf32>
    %211 = arith.divf %209, %210 : vector<16x96xf32>
    %212 = vector.extract_strided_slice %205 {offsets = [0, 96], sizes = [16, 32], strides = [1, 1]} : vector<16x128xf32> to vector<16x32xf32>
    %213 = math.tanh %212 : vector<16x32xf32>
    %214 = vector.extract_strided_slice %211 {offsets = [0, 0], sizes = [16, 32], strides = [1, 1]} : vector<16x96xf32> to vector<16x32xf32>
    %215 = vector.extract_strided_slice %211 {offsets = [0, 32], sizes = [16, 32], strides = [1, 1]} : vector<16x96xf32> to vector<16x32xf32>
    %216 = vector.extract_strided_slice %211 {offsets = [0, 64], sizes = [16, 32], strides = [1, 1]} : vector<16x96xf32> to vector<16x32xf32>
    %217 = arith.mulf %215, %175 : vector<16x32xf32>
    %218 = arith.mulf %214, %213 : vector<16x32xf32>
    %219 = arith.addf %217, %218 : vector<16x32xf32>
    %220 = math.tanh %219 : vector<16x32xf32>
    %221 = arith.mulf %216, %220 : vector<16x32xf32>
    %c48_59 = arith.constant 48 : index
    %c0_60 = arith.constant 0 : index
    %222 = vector.load %arg7[%c48_59, %c0_60] : memref<128x32xf32, #tpu.memory_space<vmem>>, vector<16x32xf32>
    tpu.vector_store %arg7[%c48_59, %c0_60], %221 {strides = array<i32>} : memref<128x32xf32, #tpu.memory_space<vmem>>, vector<16x32xf32>,
    %c80 = arith.constant 80 : index
    %c0_61 = arith.constant 0 : index
    %223 = vector.load %arg6[%c80, %c0_61] : memref<128x128xf32, #tpu.memory_space<vmem>>, vector<16x128xf32>
    %224 = arith.truncf %198 : vector<16x32xf32> to vector<16x32xbf16>
    %cst_62 = arith.constant dense<0.000000e+00> : vector<16x128xf32>
    %225 = tpu.matmul %224, %14, %cst_62 {dimension_numbers = #tpu.dot_dimension_numbers<[1], [0], [0], [1], [0, 0, 1, 1], [], []>} : vector<16x32xbf16>, vector<32x128xbf16>, vector<16x128xf32> -> vector<16x128xf32>
    %226 = arith.addf %223, %225 : vector<16x128xf32>
    %227 = vector.extract_strided_slice %226 {offsets = [0, 0], sizes = [16, 96], strides = [1, 1]} : vector<16x128xf32> to vector<16x96xf32>
    %228 = arith.negf %227 : vector<16x96xf32>
    %229 = math.exp %228 : vector<16x96xf32>
    %cst_63 = arith.constant 1.000000e+00 : f32
    %230 = vector.broadcast %cst_63 : f32 to vector<16x96xf32>
    %231 = arith.addf %230, %229 : vector<16x96xf32>
    %232 = arith.divf %230, %231 : vector<16x96xf32>
    %233 = vector.extract_strided_slice %226 {offsets = [0, 96], sizes = [16, 32], strides = [1, 1]} : vector<16x128xf32> to vector<16x32xf32>
    %234 = math.tanh %233 : vector<16x32xf32>
    %235 = vector.extract_strided_slice %232 {offsets = [0, 0], sizes = [16, 32], strides = [1, 1]} : vector<16x96xf32> to vector<16x32xf32>
    %236 = vector.extract_strided_slice %232 {offsets = [0, 32], sizes = [16, 32], strides = [1, 1]} : vector<16x96xf32> to vector<16x32xf32>
    %237 = vector.extract_strided_slice %232 {offsets = [0, 64], sizes = [16, 32], strides = [1, 1]} : vector<16x96xf32> to vector<16x32xf32>
    %238 = arith.mulf %236, %196 : vector<16x32xf32>
    %239 = arith.mulf %235, %234 : vector<16x32xf32>
    %240 = arith.addf %238, %239 : vector<16x32xf32>
    %241 = math.tanh %240 : vector<16x32xf32>
    %242 = arith.mulf %237, %241 : vector<16x32xf32>
    %243 = arith.truncf %198 : vector<16x32xf32> to vector<16x32xbf16>
    %cst_64 = arith.constant dense<0.000000e+00> : vector<16x128xf32>
    %244 = tpu.matmul %243, %13, %cst_64 {dimension_numbers = #tpu.dot_dimension_numbers<[1], [0], [0], [1], [0, 0, 1, 1], [], []>} : vector<16x32xbf16>, vector<32x128xbf16>, vector<16x128xf32> -> vector<16x128xf32>
    %245 = vector.broadcast %17 : vector<1x128xf32> to vector<16x128xf32>
    %246 = arith.addf %244, %245 : vector<16x128xf32>
    %247 = arith.truncf %221 : vector<16x32xf32> to vector<16x32xbf16>
    %cst_65 = arith.constant dense<0.000000e+00> : vector<16x128xf32>
    %248 = tpu.matmul %247, %15, %cst_65 {dimension_numbers = #tpu.dot_dimension_numbers<[1], [0], [0], [1], [0, 0, 1, 1], [], []>} : vector<16x32xbf16>, vector<32x128xbf16>, vector<16x128xf32> -> vector<16x128xf32>
    %249 = arith.addf %246, %248 : vector<16x128xf32>
    %250 = vector.extract_strided_slice %249 {offsets = [0, 0], sizes = [16, 96], strides = [1, 1]} : vector<16x128xf32> to vector<16x96xf32>
    %251 = arith.negf %250 : vector<16x96xf32>
    %252 = math.exp %251 : vector<16x96xf32>
    %cst_66 = arith.constant 1.000000e+00 : f32
    %253 = vector.broadcast %cst_66 : f32 to vector<16x96xf32>
    %254 = arith.addf %253, %252 : vector<16x96xf32>
    %255 = arith.divf %253, %254 : vector<16x96xf32>
    %256 = vector.extract_strided_slice %249 {offsets = [0, 96], sizes = [16, 32], strides = [1, 1]} : vector<16x128xf32> to vector<16x32xf32>
    %257 = math.tanh %256 : vector<16x32xf32>
    %258 = vector.extract_strided_slice %255 {offsets = [0, 0], sizes = [16, 32], strides = [1, 1]} : vector<16x96xf32> to vector<16x32xf32>
    %259 = vector.extract_strided_slice %255 {offsets = [0, 32], sizes = [16, 32], strides = [1, 1]} : vector<16x96xf32> to vector<16x32xf32>
    %260 = vector.extract_strided_slice %255 {offsets = [0, 64], sizes = [16, 32], strides = [1, 1]} : vector<16x96xf32> to vector<16x32xf32>
    %261 = arith.mulf %259, %219 : vector<16x32xf32>
    %262 = arith.mulf %258, %257 : vector<16x32xf32>
    %263 = arith.addf %261, %262 : vector<16x32xf32>
    %264 = math.tanh %263 : vector<16x32xf32>
    %265 = arith.mulf %260, %264 : vector<16x32xf32>
    %c64_67 = arith.constant 64 : index
    %c0_68 = arith.constant 0 : index
    %266 = vector.load %arg7[%c64_67, %c0_68] : memref<128x32xf32, #tpu.memory_space<vmem>>, vector<16x32xf32>
    tpu.vector_store %arg7[%c64_67, %c0_68], %265 {strides = array<i32>} : memref<128x32xf32, #tpu.memory_space<vmem>>, vector<16x32xf32>,
    %c96_69 = arith.constant 96 : index
    %c0_70 = arith.constant 0 : index
    %267 = vector.load %arg6[%c96_69, %c0_70] : memref<128x128xf32, #tpu.memory_space<vmem>>, vector<16x128xf32>
    %268 = arith.truncf %242 : vector<16x32xf32> to vector<16x32xbf16>
    %cst_71 = arith.constant dense<0.000000e+00> : vector<16x128xf32>
    %269 = tpu.matmul %268, %14, %cst_71 {dimension_numbers = #tpu.dot_dimension_numbers<[1], [0], [0], [1], [0, 0, 1, 1], [], []>} : vector<16x32xbf16>, vector<32x128xbf16>, vector<16x128xf32> -> vector<16x128xf32>
    %270 = arith.addf %267, %269 : vector<16x128xf32>
    %271 = vector.extract_strided_slice %270 {offsets = [0, 0], sizes = [16, 96], strides = [1, 1]} : vector<16x128xf32> to vector<16x96xf32>
    %272 = arith.negf %271 : vector<16x96xf32>
    %273 = math.exp %272 : vector<16x96xf32>
    %cst_72 = arith.constant 1.000000e+00 : f32
    %274 = vector.broadcast %cst_72 : f32 to vector<16x96xf32>
    %275 = arith.addf %274, %273 : vector<16x96xf32>
    %276 = arith.divf %274, %275 : vector<16x96xf32>
    %277 = vector.extract_strided_slice %270 {offsets = [0, 96], sizes = [16, 32], strides = [1, 1]} : vector<16x128xf32> to vector<16x32xf32>
    %278 = math.tanh %277 : vector<16x32xf32>
    %279 = vector.extract_strided_slice %276 {offsets = [0, 0], sizes = [16, 32], strides = [1, 1]} : vector<16x96xf32> to vector<16x32xf32>
    %280 = vector.extract_strided_slice %276 {offsets = [0, 32], sizes = [16, 32], strides = [1, 1]} : vector<16x96xf32> to vector<16x32xf32>
    %281 = vector.extract_strided_slice %276 {offsets = [0, 64], sizes = [16, 32], strides = [1, 1]} : vector<16x96xf32> to vector<16x32xf32>
    %282 = arith.mulf %280, %240 : vector<16x32xf32>
    %283 = arith.mulf %279, %278 : vector<16x32xf32>
    %284 = arith.addf %282, %283 : vector<16x32xf32>
    %285 = math.tanh %284 : vector<16x32xf32>
    %286 = arith.mulf %281, %285 : vector<16x32xf32>
    %287 = arith.truncf %242 : vector<16x32xf32> to vector<16x32xbf16>
    %cst_73 = arith.constant dense<0.000000e+00> : vector<16x128xf32>
    %288 = tpu.matmul %287, %13, %cst_73 {dimension_numbers = #tpu.dot_dimension_numbers<[1], [0], [0], [1], [0, 0, 1, 1], [], []>} : vector<16x32xbf16>, vector<32x128xbf16>, vector<16x128xf32> -> vector<16x128xf32>
    %289 = vector.broadcast %17 : vector<1x128xf32> to vector<16x128xf32>
    %290 = arith.addf %288, %289 : vector<16x128xf32>
    %291 = arith.truncf %265 : vector<16x32xf32> to vector<16x32xbf16>
    %cst_74 = arith.constant dense<0.000000e+00> : vector<16x128xf32>
    %292 = tpu.matmul %291, %15, %cst_74 {dimension_numbers = #tpu.dot_dimension_numbers<[1], [0], [0], [1], [0, 0, 1, 1], [], []>} : vector<16x32xbf16>, vector<32x128xbf16>, vector<16x128xf32> -> vector<16x128xf32>
    %293 = arith.addf %290, %292 : vector<16x128xf32>
    %294 = vector.extract_strided_slice %293 {offsets = [0, 0], sizes = [16, 96], strides = [1, 1]} : vector<16x128xf32> to vector<16x96xf32>
    %295 = arith.negf %294 : vector<16x96xf32>
    %296 = math.exp %295 : vector<16x96xf32>
    %cst_75 = arith.constant 1.000000e+00 : f32
    %297 = vector.broadcast %cst_75 : f32 to vector<16x96xf32>
    %298 = arith.addf %297, %296 : vector<16x96xf32>
    %299 = arith.divf %297, %298 : vector<16x96xf32>
    %300 = vector.extract_strided_slice %293 {offsets = [0, 96], sizes = [16, 32], strides = [1, 1]} : vector<16x128xf32> to vector<16x32xf32>
    %301 = math.tanh %300 : vector<16x32xf32>
    %302 = vector.extract_strided_slice %299 {offsets = [0, 0], sizes = [16, 32], strides = [1, 1]} : vector<16x96xf32> to vector<16x32xf32>
    %303 = vector.extract_strided_slice %299 {offsets = [0, 32], sizes = [16, 32], strides = [1, 1]} : vector<16x96xf32> to vector<16x32xf32>
    %304 = vector.extract_strided_slice %299 {offsets = [0, 64], sizes = [16, 32], strides = [1, 1]} : vector<16x96xf32> to vector<16x32xf32>
    %305 = arith.mulf %303, %263 : vector<16x32xf32>
    %306 = arith.mulf %302, %301 : vector<16x32xf32>
    %307 = arith.addf %305, %306 : vector<16x32xf32>
    %308 = math.tanh %307 : vector<16x32xf32>
    %309 = arith.mulf %304, %308 : vector<16x32xf32>
    %c80_76 = arith.constant 80 : index
    %c0_77 = arith.constant 0 : index
    %310 = vector.load %arg7[%c80_76, %c0_77] : memref<128x32xf32, #tpu.memory_space<vmem>>, vector<16x32xf32>
    tpu.vector_store %arg7[%c80_76, %c0_77], %309 {strides = array<i32>} : memref<128x32xf32, #tpu.memory_space<vmem>>, vector<16x32xf32>,
    %c112 = arith.constant 112 : index
    %c0_78 = arith.constant 0 : index
    %311 = vector.load %arg6[%c112, %c0_78] : memref<128x128xf32, #tpu.memory_space<vmem>>, vector<16x128xf32>
    %312 = arith.truncf %286 : vector<16x32xf32> to vector<16x32xbf16>
    %cst_79 = arith.constant dense<0.000000e+00> : vector<16x128xf32>
    %313 = tpu.matmul %312, %14, %cst_79 {dimension_numbers = #tpu.dot_dimension_numbers<[1], [0], [0], [1], [0, 0, 1, 1], [], []>} : vector<16x32xbf16>, vector<32x128xbf16>, vector<16x128xf32> -> vector<16x128xf32>
    %314 = arith.addf %311, %313 : vector<16x128xf32>
    %315 = vector.extract_strided_slice %314 {offsets = [0, 0], sizes = [16, 96], strides = [1, 1]} : vector<16x128xf32> to vector<16x96xf32>
    %316 = arith.negf %315 : vector<16x96xf32>
    %317 = math.exp %316 : vector<16x96xf32>
    %cst_80 = arith.constant 1.000000e+00 : f32
    %318 = vector.broadcast %cst_80 : f32 to vector<16x96xf32>
    %319 = arith.addf %318, %317 : vector<16x96xf32>
    %320 = arith.divf %318, %319 : vector<16x96xf32>
    %321 = vector.extract_strided_slice %314 {offsets = [0, 96], sizes = [16, 32], strides = [1, 1]} : vector<16x128xf32> to vector<16x32xf32>
    %322 = math.tanh %321 : vector<16x32xf32>
    %323 = vector.extract_strided_slice %320 {offsets = [0, 0], sizes = [16, 32], strides = [1, 1]} : vector<16x96xf32> to vector<16x32xf32>
    %324 = vector.extract_strided_slice %320 {offsets = [0, 32], sizes = [16, 32], strides = [1, 1]} : vector<16x96xf32> to vector<16x32xf32>
    %325 = vector.extract_strided_slice %320 {offsets = [0, 64], sizes = [16, 32], strides = [1, 1]} : vector<16x96xf32> to vector<16x32xf32>
    %326 = arith.mulf %324, %284 : vector<16x32xf32>
    %327 = arith.mulf %323, %322 : vector<16x32xf32>
    %328 = arith.addf %326, %327 : vector<16x32xf32>
    %329 = math.tanh %328 : vector<16x32xf32>
    %330 = arith.mulf %325, %329 : vector<16x32xf32>
    %331 = arith.truncf %286 : vector<16x32xf32> to vector<16x32xbf16>
    %cst_81 = arith.constant dense<0.000000e+00> : vector<16x128xf32>
    %332 = tpu.matmul %331, %13, %cst_81 {dimension_numbers = #tpu.dot_dimension_numbers<[1], [0], [0], [1], [0, 0, 1, 1], [], []>} : vector<16x32xbf16>, vector<32x128xbf16>, vector<16x128xf32> -> vector<16x128xf32>
    %333 = vector.broadcast %17 : vector<1x128xf32> to vector<16x128xf32>
    %334 = arith.addf %332, %333 : vector<16x128xf32>
    %335 = arith.truncf %309 : vector<16x32xf32> to vector<16x32xbf16>
    %cst_82 = arith.constant dense<0.000000e+00> : vector<16x128xf32>
    %336 = tpu.matmul %335, %15, %cst_82 {dimension_numbers = #tpu.dot_dimension_numbers<[1], [0], [0], [1], [0, 0, 1, 1], [], []>} : vector<16x32xbf16>, vector<32x128xbf16>, vector<16x128xf32> -> vector<16x128xf32>
    %337 = arith.addf %334, %336 : vector<16x128xf32>
    %338 = vector.extract_strided_slice %337 {offsets = [0, 0], sizes = [16, 96], strides = [1, 1]} : vector<16x128xf32> to vector<16x96xf32>
    %339 = arith.negf %338 : vector<16x96xf32>
    %340 = math.exp %339 : vector<16x96xf32>
    %cst_83 = arith.constant 1.000000e+00 : f32
    %341 = vector.broadcast %cst_83 : f32 to vector<16x96xf32>
    %342 = arith.addf %341, %340 : vector<16x96xf32>
    %343 = arith.divf %341, %342 : vector<16x96xf32>
    %344 = vector.extract_strided_slice %337 {offsets = [0, 96], sizes = [16, 32], strides = [1, 1]} : vector<16x128xf32> to vector<16x32xf32>
    %345 = math.tanh %344 : vector<16x32xf32>
    %346 = vector.extract_strided_slice %343 {offsets = [0, 0], sizes = [16, 32], strides = [1, 1]} : vector<16x96xf32> to vector<16x32xf32>
    %347 = vector.extract_strided_slice %343 {offsets = [0, 32], sizes = [16, 32], strides = [1, 1]} : vector<16x96xf32> to vector<16x32xf32>
    %348 = vector.extract_strided_slice %343 {offsets = [0, 64], sizes = [16, 32], strides = [1, 1]} : vector<16x96xf32> to vector<16x32xf32>
    %349 = arith.mulf %347, %307 : vector<16x32xf32>
    %350 = arith.mulf %346, %345 : vector<16x32xf32>
    %351 = arith.addf %349, %350 : vector<16x32xf32>
    %352 = math.tanh %351 : vector<16x32xf32>
    %353 = arith.mulf %348, %352 : vector<16x32xf32>
    %c96_84 = arith.constant 96 : index
    %c0_85 = arith.constant 0 : index
    %354 = vector.load %arg7[%c96_84, %c0_85] : memref<128x32xf32, #tpu.memory_space<vmem>>, vector<16x32xf32>
    tpu.vector_store %arg7[%c96_84, %c0_85], %353 {strides = array<i32>} : memref<128x32xf32, #tpu.memory_space<vmem>>, vector<16x32xf32>,
    %355 = arith.truncf %330 : vector<16x32xf32> to vector<16x32xbf16>
    %cst_86 = arith.constant dense<0.000000e+00> : vector<16x128xf32>
    %356 = tpu.matmul %355, %13, %cst_86 {dimension_numbers = #tpu.dot_dimension_numbers<[1], [0], [0], [1], [0, 0, 1, 1], [], []>} : vector<16x32xbf16>, vector<32x128xbf16>, vector<16x128xf32> -> vector<16x128xf32>
    %357 = vector.broadcast %17 : vector<1x128xf32> to vector<16x128xf32>
    %358 = arith.addf %356, %357 : vector<16x128xf32>
    %359 = arith.truncf %353 : vector<16x32xf32> to vector<16x32xbf16>
    %cst_87 = arith.constant dense<0.000000e+00> : vector<16x128xf32>
    %360 = tpu.matmul %359, %15, %cst_87 {dimension_numbers = #tpu.dot_dimension_numbers<[1], [0], [0], [1], [0, 0, 1, 1], [], []>} : vector<16x32xbf16>, vector<32x128xbf16>, vector<16x128xf32> -> vector<16x128xf32>
    %361 = arith.addf %358, %360 : vector<16x128xf32>
    %362 = vector.extract_strided_slice %361 {offsets = [0, 0], sizes = [16, 96], strides = [1, 1]} : vector<16x128xf32> to vector<16x96xf32>
    %363 = arith.negf %362 : vector<16x96xf32>
    %364 = math.exp %363 : vector<16x96xf32>
    %cst_88 = arith.constant 1.000000e+00 : f32
    %365 = vector.broadcast %cst_88 : f32 to vector<16x96xf32>
    %366 = arith.addf %365, %364 : vector<16x96xf32>
    %367 = arith.divf %365, %366 : vector<16x96xf32>
    %368 = vector.extract_strided_slice %361 {offsets = [0, 96], sizes = [16, 32], strides = [1, 1]} : vector<16x128xf32> to vector<16x32xf32>
    %369 = math.tanh %368 : vector<16x32xf32>
    %370 = vector.extract_strided_slice %367 {offsets = [0, 0], sizes = [16, 32], strides = [1, 1]} : vector<16x96xf32> to vector<16x32xf32>
    %371 = vector.extract_strided_slice %367 {offsets = [0, 32], sizes = [16, 32], strides = [1, 1]} : vector<16x96xf32> to vector<16x32xf32>
    %372 = vector.extract_strided_slice %367 {offsets = [0, 64], sizes = [16, 32], strides = [1, 1]} : vector<16x96xf32> to vector<16x32xf32>
    %373 = arith.mulf %371, %351 : vector<16x32xf32>
    %374 = arith.mulf %370, %369 : vector<16x32xf32>
    %375 = arith.addf %373, %374 : vector<16x32xf32>
    %376 = math.tanh %375 : vector<16x32xf32>
    %377 = arith.mulf %372, %376 : vector<16x32xf32>
    %c112_89 = arith.constant 112 : index
    %c0_90 = arith.constant 0 : index
    %378 = vector.load %arg7[%c112_89, %c0_90] : memref<128x32xf32, #tpu.memory_space<vmem>>, vector<16x32xf32>
    tpu.vector_store %arg7[%c112_89, %c0_90], %377 {strides = array<i32>} : memref<128x32xf32, #tpu.memory_space<vmem>>, vector<16x32xf32>,
    %c0_91 = arith.constant 0 : index
    %c0_92 = arith.constant 0 : index
    %379 = vector.load %arg7[%c0_91, %c0_92] : memref<128x32xf32, #tpu.memory_space<vmem>>, vector<128x32xf32>
    %c8 = arith.constant 8 : index
    %c0_93 = arith.constant 0 : index
    %380 = vector.load %arg2[%c8, %c0_93] : memref<136x32xbf16, #tpu.memory_space<vmem>>, vector<32x32xbf16>
    %381 = arith.truncf %379 : vector<128x32xf32> to vector<128x32xbf16>
    %cst_94 = arith.constant dense<0.000000e+00> : vector<128x32xf32>
    %382 = tpu.matmul %381, %380, %cst_94 {dimension_numbers = #tpu.dot_dimension_numbers<[1], [0], [0], [1], [0, 0, 1, 1], [], []>} : vector<128x32xbf16>, vector<32x32xbf16>, vector<128x32xf32> -> vector<128x32xf32>
    %c128 = arith.constant 128 : index
    %c0_95 = arith.constant 0 : index
    %383 = vector.load %arg1[%c128, %c0_95] : memref<384x128xbf16, #tpu.memory_space<vmem>>, vector<128x128xbf16>
    %384 = arith.truncf %382 : vector<128x32xf32> to vector<128x32xbf16>
    %cst_96 = arith.constant dense<0.000000e+00> : vector<128x32xf32>
    %385 = tpu.matmul %383, %384, %cst_96 {dimension_numbers = #tpu.dot_dimension_numbers<[1], [0], [0], [1], [0, 0, 1, 1], [], []>} : vector<128x128xbf16>, vector<128x32xbf16>, vector<128x32xf32> -> vector<128x32xf32>
    %c1 = arith.constant 1 : index
    %c0_97 = arith.constant 0 : index
    %386 = vector.load %arg4[%c1, %c0_97] : memref<8x128xf32, #tpu.memory_space<vmem>>, vector<1x32xf32>
    %387 = vector.broadcast %386 : vector<1x32xf32> to vector<128x32xf32>
    %388 = arith.addf %385, %387 : vector<128x32xf32>
    %cst_98 = arith.constant 0.000000e+00 : f32
    %389 = vector.broadcast %cst_98 : f32 to vector<128x32xf32>
    %390 = arith.maximumf %388, %389 : vector<128x32xf32>
    %c40 = arith.constant 40 : index
    %c0_99 = arith.constant 0 : index
    %391 = vector.load %arg2[%c40, %c0_99] : memref<136x32xbf16, #tpu.memory_space<vmem>>, vector<32x32xbf16>
    %392 = arith.truncf %390 : vector<128x32xf32> to vector<128x32xbf16>
    %cst_100 = arith.constant dense<0.000000e+00> : vector<128x32xf32>
    %393 = tpu.matmul %392, %391, %cst_100 {dimension_numbers = #tpu.dot_dimension_numbers<[1], [0], [0], [1], [0, 0, 1, 1], [], []>} : vector<128x32xbf16>, vector<32x32xbf16>, vector<128x32xf32> -> vector<128x32xf32>
    %c128_101 = arith.constant 128 : index
    %c0_102 = arith.constant 0 : index
    %394 = vector.load %arg1[%c128_101, %c0_102] : memref<384x128xbf16, #tpu.memory_space<vmem>>, vector<128x128xbf16>
    %395 = arith.truncf %393 : vector<128x32xf32> to vector<128x32xbf16>
    %cst_103 = arith.constant dense<0.000000e+00> : vector<128x32xf32>
    %396 = tpu.matmul %394, %395, %cst_103 {dimension_numbers = #tpu.dot_dimension_numbers<[1], [0], [0], [1], [0, 0, 1, 1], [], []>} : vector<128x128xbf16>, vector<128x32xbf16>, vector<128x32xf32> -> vector<128x32xf32>
    %c2 = arith.constant 2 : index
    %c0_104 = arith.constant 0 : index
    %397 = vector.load %arg4[%c2, %c0_104] : memref<8x128xf32, #tpu.memory_space<vmem>>, vector<1x32xf32>
    %398 = vector.broadcast %397 : vector<1x32xf32> to vector<128x32xf32>
    %399 = arith.addf %396, %398 : vector<128x32xf32>
    %cst_105 = arith.constant 0.000000e+00 : f32
    %400 = vector.broadcast %cst_105 : f32 to vector<128x32xf32>
    %401 = arith.maximumf %399, %400 : vector<128x32xf32>
    %c72 = arith.constant 72 : index
    %c0_106 = arith.constant 0 : index
    %402 = vector.load %arg2[%c72, %c0_106] : memref<136x32xbf16, #tpu.memory_space<vmem>>, vector<32x32xbf16>
    %403 = arith.truncf %401 : vector<128x32xf32> to vector<128x32xbf16>
    %cst_107 = arith.constant dense<0.000000e+00> : vector<128x32xf32>
    %404 = tpu.matmul %403, %402, %cst_107 {dimension_numbers = #tpu.dot_dimension_numbers<[1], [0], [0], [1], [0, 0, 1, 1], [], []>} : vector<128x32xbf16>, vector<32x32xbf16>, vector<128x32xf32> -> vector<128x32xf32>
    %c128_108 = arith.constant 128 : index
    %c0_109 = arith.constant 0 : index
    %405 = vector.load %arg1[%c128_108, %c0_109] : memref<384x128xbf16, #tpu.memory_space<vmem>>, vector<128x128xbf16>
    %406 = arith.truncf %404 : vector<128x32xf32> to vector<128x32xbf16>
    %cst_110 = arith.constant dense<0.000000e+00> : vector<128x32xf32>
    %407 = tpu.matmul %405, %406, %cst_110 {dimension_numbers = #tpu.dot_dimension_numbers<[1], [0], [0], [1], [0, 0, 1, 1], [], []>} : vector<128x128xbf16>, vector<128x32xbf16>, vector<128x32xf32> -> vector<128x32xf32>
    %c3 = arith.constant 3 : index
    %c0_111 = arith.constant 0 : index
    %408 = vector.load %arg4[%c3, %c0_111] : memref<8x128xf32, #tpu.memory_space<vmem>>, vector<1x32xf32>
    %409 = vector.broadcast %408 : vector<1x32xf32> to vector<128x32xf32>
    %410 = arith.addf %407, %409 : vector<128x32xf32>
    %cst_112 = arith.constant 0.000000e+00 : f32
    %411 = vector.broadcast %cst_112 : f32 to vector<128x32xf32>
    %412 = arith.maximumf %410, %411 : vector<128x32xf32>
    %c104 = arith.constant 104 : index
    %c0_113 = arith.constant 0 : index
    %413 = vector.load %arg2[%c104, %c0_113] : memref<136x32xbf16, #tpu.memory_space<vmem>>, vector<32x32xbf16>
    %414 = arith.truncf %412 : vector<128x32xf32> to vector<128x32xbf16>
    %cst_114 = arith.constant dense<0.000000e+00> : vector<128x32xf32>
    %415 = tpu.matmul %414, %413, %cst_114 {dimension_numbers = #tpu.dot_dimension_numbers<[1], [0], [0], [1], [0, 0, 1, 1], [], []>} : vector<128x32xbf16>, vector<32x32xbf16>, vector<128x32xf32> -> vector<128x32xf32>
    %c256 = arith.constant 256 : index
    %c0_115 = arith.constant 0 : index
    %416 = vector.load %arg1[%c256, %c0_115] : memref<384x128xbf16, #tpu.memory_space<vmem>>, vector<128x128xbf16>
    %417 = arith.truncf %415 : vector<128x32xf32> to vector<128x32xbf16>
    %cst_116 = arith.constant dense<0.000000e+00> : vector<128x32xf32>
    %418 = tpu.matmul %416, %417, %cst_116 {dimension_numbers = #tpu.dot_dimension_numbers<[1], [0], [0], [1], [0, 0, 1, 1], [], []>} : vector<128x128xbf16>, vector<128x32xbf16>, vector<128x32xf32> -> vector<128x32xf32>
    %c4 = arith.constant 4 : index
    %c0_117 = arith.constant 0 : index
    %419 = vector.load %arg4[%c4, %c0_117] : memref<8x128xf32, #tpu.memory_space<vmem>>, vector<1x32xf32>
    %420 = vector.broadcast %419 : vector<1x32xf32> to vector<128x32xf32>
    %421 = arith.addf %418, %420 : vector<128x32xf32>
    %cst_118 = arith.constant 0.000000e+00 : f32
    %422 = vector.broadcast %cst_118 : f32 to vector<128x32xf32>
    %423 = arith.maximumf %421, %422 : vector<128x32xf32>
    %c128_119 = arith.constant 128 : index
    %c0_120 = arith.constant 0 : index
    %424 = vector.load %arg3[%c128_119, %c0_120] : memref<160x128xbf16, #tpu.memory_space<vmem>>, vector<32x128xbf16>
    %c7 = arith.constant 7 : index
    %c0_121 = arith.constant 0 : index
    %425 = vector.load %arg4[%c7, %c0_121] : memref<8x128xf32, #tpu.memory_space<vmem>>, vector<1x128xf32>
    %426 = arith.truncf %423 : vector<128x32xf32> to vector<128x32xbf16>
    %cst_122 = arith.constant dense<0.000000e+00> : vector<128x128xf32>
    %427 = tpu.matmul %426, %424, %cst_122 {dimension_numbers = #tpu.dot_dimension_numbers<[1], [0], [0], [1], [0, 0, 1, 1], [], []>} : vector<128x32xbf16>, vector<32x128xbf16>, vector<128x128xf32> -> vector<128x128xf32>
    %428 = vector.broadcast %425 : vector<1x128xf32> to vector<128x128xf32>
    %429 = arith.addf %427, %428 : vector<128x128xf32>
    %430 = arith.negf %429 : vector<128x128xf32>
    %431 = math.exp %430 : vector<128x128xf32>
    %cst_123 = arith.constant 1.000000e+00 : f32
    %432 = vector.broadcast %cst_123 : f32 to vector<128x128xf32>
    %433 = arith.addf %432, %431 : vector<128x128xf32>
    %434 = arith.divf %432, %433 : vector<128x128xf32>
    %c0_124 = arith.constant 0 : index
    %c0_125 = arith.constant 0 : index
    %435 = vector.load %arg5[%c0_124, %c0_125] : memref<128x128xf32, #tpu.memory_space<vmem>>, vector<128x128xf32>
    tpu.vector_store %arg5[%c0_124, %c0_125], %434 {strides = array<i32>} : memref<128x128xf32, #tpu.memory_space<vmem>>, vector<128x128xf32>,
    return
  }
}

</mosaic_0001>

<llo_original>
// kernel: glstm7_forward.1
$region0: #{glstm7_forward.1}
  #allocation0 [shape = 'u32[]', space=smem, size = 0x4, offset = 0x4, fixed_abs, tag = 'smem constant byte address 0x4 - core index']
  #allocation1 [shape = 'u32[144,128]{1,0:T(1,128)}', space=vmem, size = 0x12000, scoped, tag = 'internal scratch']
  #allocation2 [shape = 'f32[128,128]{1,0:T(8,128)}', space=vmem, size = 0x10000, scoped, tag = 'scratch operand']
  #allocation3 [shape = 'f32[128,32]{1,0:T(8,128)}', space=vmem, size = 0x10000, scoped, tag = 'scratch operand']
  %s0 = inlined_call_operand.vmem [shape: f32[128,8], index: 0, kind: input, shape index: {}]
  %s1 = inlined_call_operand.vmem [shape: bf16[384,128], index: 1, kind: input, shape index: {}]
  %s2 = inlined_call_operand.vmem [shape: bf16[136,32], index: 2, kind: input, shape index: {}]
  %s3 = inlined_call_operand.vmem [shape: bf16[160,128], index: 3, kind: input, shape index: {}]
  %s4 = inlined_call_operand.vmem [shape: f32[8,128], index: 4, kind: input, shape index: {}]
  %s5 = inlined_call_operand.vmem [shape: f32[128,128], index: 5, kind: output, shape index: {}]
  %s6 = sld [smem:[#allocation0]]
  $region30: #{glstm7_forward.1} parent=0
    _
  %s8 = ssub.s32 1, %s6
  %s9 = scalar_select 0, %s8, %s6
  // Predicated region
  $region2: #{glstm7_forward.1} parent=0 // pred_check
    _
  $region3: #{glstm7_forward.1} parent=0 // pred_check_branch
    %11 = sbr.rel (0) target = $region5
  $region4: #{glstm7_forward.1} parent=0 // pred_region
    _
  $region5: #{glstm7_forward.1} parent=0 // pred_fallthru
    _
  // Predicated region
  $region6: #{glstm7_forward.1} parent=0 // pred_check
    _
  $region7: #{glstm7_forward.1} parent=0 // pred_check_branch
    %13 = sbr.rel (0) target = $region9
  $region8: #{glstm7_forward.1} parent=0 // pred_region
    _
  $region9: #{glstm7_forward.1} parent=0 // pred_fallthru
    _
  // Predicated region
  $region10: #{glstm7_forward.1} parent=0 // pred_check
    _
  $region11: #{glstm7_forward.1} parent=0 // pred_check_branch
    %15 = sbr.rel (0) target = $region13
  $region12: #{glstm7_forward.1} parent=0 // pred_region
    _
  $region13: #{glstm7_forward.1} parent=0 // pred_fallthru
    _
  // Predicated region
  $region14: #{glstm7_forward.1} parent=0 // pred_check
    _
  $region15: #{glstm7_forward.1} parent=0 // pred_check_branch
    %17 = sbr.rel (0) target = $region17
  $region16: #{glstm7_forward.1} parent=0 // pred_region
    _
  $region17: #{glstm7_forward.1} parent=0 // pred_fallthru
    _
  // Predicated region
  $region18: #{glstm7_forward.1} parent=0 // pred_check
    _
  $region19: #{glstm7_forward.1} parent=0 // pred_check_branch
    %19 = sbr.rel (0) target = $region21
  $region20: #{glstm7_forward.1} parent=0 // pred_region
    _
  $region21: #{glstm7_forward.1} parent=0 // pred_fallthru
    _
  %v21 = vld [vmem:[%s0] sm:$0xff]
  %v22 = vld [vmem:[%s0 + $0x8] sm:$0xff]
  %v23 = vld [vmem:[%s0 + $0x10] sm:$0xff]
  %v24 = vld [vmem:[%s0 + $0x18] sm:$0xff]
  %v25 = vld [vmem:[%s0 + $0x20] sm:$0xff]
  %v26 = vld [vmem:[%s0 + $0x28] sm:$0xff]
  %v27 = vld [vmem:[%s0 + $0x30] sm:$0xff]
  %v28 = vld [vmem:[%s0 + $0x38] sm:$0xff]
  %v29 = vld [vmem:[%s0 + $0x40] sm:$0xff]
  %v30 = vld [vmem:[%s0 + $0x48] sm:$0xff]
  %v31 = vld [vmem:[%s0 + $0x50] sm:$0xff]
  %v32 = vld [vmem:[%s0 + $0x58] sm:$0xff]
  %v33 = vld [vmem:[%s0 + $0x60] sm:$0xff]
  %v34 = vld [vmem:[%s0 + $0x68] sm:$0xff]
  %v35 = vld [vmem:[%s0 + $0x70] sm:$0xff]
  %v36 = vld [vmem:[%s0 + $0x78] sm:$0xff]
  %v37 = vld [vmem:[%s2] sm:$0xf]
  %v38 = vpack.c.bf16 %v22, %v21
  %v39 = vpack.c.bf16 %v24, %v23
  %v40 = vpack.c.bf16 %v26, %v25
  %v41 = vpack.c.bf16 %v28, %v27
  %v42 = vpack.c.bf16 %v30, %v29
  %v43 = vpack.c.bf16 %v32, %v31
  %v44 = vpack.c.bf16 %v34, %v33
  %v45 = vpack.c.bf16 %v36, %v35
  %vm46 = vcmask 64512
  %v48 = vsel %vm46, %v38, 0
  %v51 = vsel %vm46, %v39, 0
  %v54 = vsel %vm46, %v40, 0
  %v57 = vsel %vm46, %v41, 0
  %v60 = vsel %vm46, %v42, 0
  %v63 = vsel %vm46, %v43, 0
  %v66 = vsel %vm46, %v44, 0
  %v69 = vsel %vm46, %v45, 0
  %vm71 = vcmask 1043456
  %v73 = vsel %vm71, %v37, 0
  %75 = vmatprep.subr.bf16.mxu0 0
  %76 = vmatpush1.bf16.msra.mxu0 %v73
  %77 = vmatprep.subr.bf16.mxu0 0
  %78 = vmatpush1.bf16.msra.mxu0 0
  %79 = vmatprep.subr.bf16.mxu0 0
  %80 = vmatpush1.bf16.msra.mxu0 0
  %81 = vmatprep.subr.bf16.mxu0 0
  %82 = vmatpush1.bf16.msra.mxu0 0
  %83 = vmatprep.subr.bf16.mxu0 0
  %84 = vmatpush1.bf16.msra.mxu0 0
  %85 = vmatprep.subr.bf16.mxu0 0
  %86 = vmatpush1.bf16.msra.mxu0 0
  %87 = vmatprep.subr.bf16.mxu0 0
  %88 = vmatpush1.bf16.msra.mxu0 0
  %89 = vmatprep.subr.bf16.mxu0 0
  %90 = vmatpush1.bf16.msra.mxu0 0
  %91 = vmatprep.subr.bf16.mxu0 0
  %92 = vmatpush1.bf16.msra.mxu0 0
  %93 = vmatprep.subr.bf16.mxu0 0
  %94 = vmatpush1.bf16.msra.mxu0 0
  %95 = vmatprep.subr.bf16.mxu0 0
  %96 = vmatpush1.bf16.msra.mxu0 0
  %97 = vmatprep.subr.bf16.mxu0 0
  %98 = vmatpush1.bf16.msra.mxu0 0
  %99 = vmatprep.subr.bf16.mxu0 0
  %100 = vmatpush1.bf16.msra.mxu0 0
  %101 = vmatprep.subr.bf16.mxu0 0
  %102 = vmatpush1.bf16.msra.mxu0 0
  %103 = vmatprep.subr.bf16.mxu0 0
  %104 = vmatpush1.bf16.msra.mxu0 0
  %105 = vmatprep.subr.bf16.mxu0 0
  %106 = vmatpush1.bf16.msra.mxu0 0
  %107 = vmatprep.mubr.bf16.mxu0 0
  %108 = vmatmul.mubr.bf16.gmra.mrb[0].mxu0 %v48
  %v109 = vpop.f32.mrb[0].mxu0
  %v110 = vadd.f32 0.0, %v109
  %v111 = vpop.f32.mrb[0].mxu0
  %v112 = vpop.f32.mrb[0].mxu0
  %v113 = vadd.f32 0.0, %v112
  %v114 = vpop.f32.mrb[0].mxu0
  %115 = vmatprep.mubr.bf16.mxu0 0
  %116 = vmatmul.mubr.bf16.gmra.mrb[0].mxu0 %v51
  %v117 = vpop.f32.mrb[0].mxu0
  %v118 = vadd.f32 0.0, %v117
  %v119 = vpop.f32.mrb[0].mxu0
  %v120 = vpop.f32.mrb[0].mxu0
  %v121 = vadd.f32 0.0, %v120
  %v122 = vpop.f32.mrb[0].mxu0
  %123 = vmatprep.mubr.bf16.mxu0 0
  %124 = vmatmul.mubr.bf16.gmra.mrb[0].mxu0 %v54
  %v125 = vpop.f32.mrb[0].mxu0
  %v126 = vadd.f32 0.0, %v125
  %v127 = vpop.f32.mrb[0].mxu0
  %v128 = vpop.f32.mrb[0].mxu0
  %v129 = vadd.f32 0.0, %v128
  %v130 = vpop.f32.mrb[0].mxu0
  %131 = vmatprep.mubr.bf16.mxu0 0
  %132 = vmatmul.mubr.bf16.gmra.mrb[0].mxu0 %v57
  %v133 = vpop.f32.mrb[0].mxu0
  %v134 = vadd.f32 0.0, %v133
  %v135 = vpop.f32.mrb[0].mxu0
  %v136 = vpop.f32.mrb[0].mxu0
  %v137 = vadd.f32 0.0, %v136
  %v138 = vpop.f32.mrb[0].mxu0
  %139 = vmatprep.mubr.bf16.mxu0 0
  %140 = vmatmul.mubr.bf16.gmra.mrb[0].mxu0 %v60
  %v141 = vpop.f32.mrb[0].mxu0
  %v142 = vadd.f32 0.0, %v141
  %v143 = vpop.f32.mrb[0].mxu0
  %v144 = vpop.f32.mrb[0].mxu0
  %v145 = vadd.f32 0.0, %v144
  %v146 = vpop.f32.mrb[0].mxu0
  %147 = vmatprep.mubr.bf16.mxu0 0
  %148 = vmatmul.mubr.bf16.gmra.mrb[0].mxu0 %v63
  %v149 = vpop.f32.mrb[0].mxu0
  %v150 = vadd.f32 0.0, %v149
  %v151 = vpop.f32.mrb[0].mxu0
  %v152 = vpop.f32.mrb[0].mxu0
  %v153 = vadd.f32 0.0, %v152
  %v154 = vpop.f32.mrb[0].mxu0
  %155 = vmatprep.mubr.bf16.mxu0 0
  %156 = vmatmul.mubr.bf16.gmra.mrb[0].mxu0 %v66
  %v157 = vpop.f32.mrb[0].mxu0
  %v158 = vadd.f32 0.0, %v157
  %v159 = vpop.f32.mrb[0].mxu0
  %v160 = vpop.f32.mrb[0].mxu0
  %v161 = vadd.f32 0.0, %v160
  %v162 = vpop.f32.mrb[0].mxu0
  %163 = vmatprep.mubr.bf16.mxu0 0
  %164 = vmatmul.mubr.bf16.gmra.mrb[0].mxu0 %v69
  %v165 = vpop.f32.mrb[0].mxu0
  %v166 = vadd.f32 0.0, %v165
  %v167 = vpop.f32.mrb[0].mxu0
  %v168 = vpop.f32.mrb[0].mxu0
  %v169 = vadd.f32 0.0, %v168
  %v170 = vpop.f32.mrb[0].mxu0
  %171 = vdwg.mxu0
  %v172 = vld [vmem:[%s1] sm:$0xf]
  %v173 = vld [vmem:[%s1 + $0x4] sm:$0xf]
  %v174 = vld [vmem:[%s1 + $0x8] sm:$0xf]
  %v175 = vld [vmem:[%s1 + $0xc] sm:$0xf]
  %v176 = vld [vmem:[%s1 + $0x10] sm:$0xf]
  %v177 = vld [vmem:[%s1 + $0x14] sm:$0xf]
  %v178 = vld [vmem:[%s1 + $0x18] sm:$0xf]
  %v179 = vld [vmem:[%s1 + $0x1c] sm:$0xf]
  %v180 = vld [vmem:[%s1 + $0x20] sm:$0xf]
  %v181 = vld [vmem:[%s1 + $0x24] sm:$0xf]
  %v182 = vld [vmem:[%s1 + $0x28] sm:$0xf]
  %v183 = vld [vmem:[%s1 + $0x2c] sm:$0xf]
  %v184 = vld [vmem:[%s1 + $0x30] sm:$0xf]
  %v185 = vld [vmem:[%s1 + $0x34] sm:$0xf]
  %v186 = vld [vmem:[%s1 + $0x38] sm:$0xf]
  %v187 = vld [vmem:[%s1 + $0x3c] sm:$0xf]
  %v188 = vpack.c.bf16 %v113, %v110
  %v189 = vpack.c.bf16 %v121, %v118
  %v190 = vpack.c.bf16 %v129, %v126
  %v191 = vpack.c.bf16 %v137, %v134
  %v192 = vpack.c.bf16 %v145, %v142
  %v193 = vpack.c.bf16 %v153, %v150
  %v194 = vpack.c.bf16 %v161, %v158
  %v195 = vpack.c.bf16 %v169, %v166
  %v196 = vld [vmem:[%s4] sm:$0x1]
  %v197 = vlaneseq
  %v198 = vshrl.u32 %v197, 7
  %v199 = vsub.s32 0, %v198
  %v200 = vrot.slane %v196, %v199
  %v217 = vunpack.c.l.b16 %v172
  %v218 = vunpack.c.l.b16 %v173
  %v219 = vunpack.c.l.b16 %v174
  %v220 = vunpack.c.l.b16 %v175
  %v221 = vunpack.c.l.b16 %v176
  %v222 = vunpack.c.l.b16 %v177
  %v223 = vunpack.c.l.b16 %v178
  %v224 = vunpack.c.l.b16 %v179
  %v225 = vunpack.c.l.b16 %v180
  %v226 = vunpack.c.l.b16 %v181
  %v227 = vunpack.c.l.b16 %v182
  %v228 = vunpack.c.l.b16 %v183
  %v229 = vunpack.c.l.b16 %v184
  %v230 = vunpack.c.l.b16 %v185
  %v231 = vunpack.c.l.b16 %v186
  %v232 = vunpack.c.l.b16 %v187
  %v233 = vpack.c.b16 %v218, %v217
  %v234 = vpack.c.b16 %v220, %v219
  %v235 = vpack.c.b16 %v222, %v221
  %v236 = vpack.c.b16 %v224, %v223
  %v237 = vpack.c.b16 %v226, %v225
  %v238 = vpack.c.b16 %v228, %v227
  %v239 = vpack.c.b16 %v230, %v229
  %v240 = vpack.c.b16 %v232, %v231
  %249 = vmatprep.subr.bf16.mxu0 0
  %250 = vmatpush1.bf16.msra.mxu0 %v188
  %251 = vmatprep.subr.bf16.mxu0 0
  %252 = vmatpush1.bf16.msra.mxu0 %v189
  %253 = vmatprep.subr.bf16.mxu0 0
  %254 = vmatpush1.bf16.msra.mxu0 %v190
  %255 = vmatprep.subr.bf16.mxu0 0
  %256 = vmatpush1.bf16.msra.mxu0 %v191
  %257 = vmatprep.subr.bf16.mxu0 0
  %258 = vmatpush1.bf16.msra.mxu0 %v192
  %259 = vmatprep.subr.bf16.mxu0 0
  %260 = vmatpush1.bf16.msra.mxu0 %v193
  %261 = vmatprep.subr.bf16.mxu0 0
  %262 = vmatpush1.bf16.msra.mxu0 %v194
  %263 = vmatprep.subr.bf16.mxu0 0
  %264 = vmatpush1.bf16.msra.mxu0 %v195
  %265 = vmatprep.subr.bf16.mxu0 0
  %266 = vmatpush1.bf16.msra.mxu0 0
  %267 = vmatprep.subr.bf16.mxu0 0
  %268 = vmatpush1.bf16.msra.mxu0 0
  %269 = vmatprep.subr.bf16.mxu0 0
  %270 = vmatpush1.bf16.msra.mxu0 0
  %271 = vmatprep.subr.bf16.mxu0 0
  %272 = vmatpush1.bf16.msra.mxu0 0
  %273 = vmatprep.subr.bf16.mxu0 0
  %274 = vmatpush1.bf16.msra.mxu0 0
  %275 = vmatprep.subr.bf16.mxu0 0
  %276 = vmatpush1.bf16.msra.mxu0 0
  %277 = vmatprep.subr.bf16.mxu0 0
  %278 = vmatpush1.bf16.msra.mxu0 0
  %279 = vmatprep.subr.bf16.mxu0 0
  %280 = vmatpush1.bf16.msra.mxu0 0
  %281 = vmatprep.mubr.bf16.mxu0 0
  %282 = vmatmul.mubr.bf16.gmra.mrb[0].mxu0 %v233
  %v283 = vpop.f32.mrb[0].mxu0
  %v284 = vadd.f32 %v200, %v283
  %v285 = vpop.f32.mrb[0].mxu0
  %v286 = vpop.f32.mrb[0].mxu0
  %v287 = vadd.f32 %v200, %v286
  %v288 = vpop.f32.mrb[0].mxu0
  %289 = vmatprep.mubr.bf16.mxu0 0
  %290 = vmatmul.mubr.bf16.gmra.mrb[0].mxu0 %v234
  %v291 = vpop.f32.mrb[0].mxu0
  %v292 = vadd.f32 %v200, %v291
  %v293 = vpop.f32.mrb[0].mxu0
  %v294 = vpop.f32.mrb[0].mxu0
  %v295 = vadd.f32 %v200, %v294
  %v296 = vpop.f32.mrb[0].mxu0
  %297 = vmatprep.mubr.bf16.mxu0 0
  %298 = vmatmul.mubr.bf16.gmra.mrb[0].mxu0 %v235
  %v299 = vpop.f32.mrb[0].mxu0
  %v300 = vadd.f32 %v200, %v299
  %v301 = vpop.f32.mrb[0].mxu0
  %v302 = vpop.f32.mrb[0].mxu0
  %v303 = vadd.f32 %v200, %v302
  %v304 = vpop.f32.mrb[0].mxu0
  %305 = vmatprep.mubr.bf16.mxu0 0
  %306 = vmatmul.mubr.bf16.gmra.mrb[0].mxu0 %v236
  %v307 = vpop.f32.mrb[0].mxu0
  %v308 = vadd.f32 %v200, %v307
  %v309 = vpop.f32.mrb[0].mxu0
  %v310 = vpop.f32.mrb[0].mxu0
  %v311 = vadd.f32 %v200, %v310
  %v312 = vpop.f32.mrb[0].mxu0
  %313 = vmatprep.mubr.bf16.mxu0 0
  %314 = vmatmul.mubr.bf16.gmra.mrb[0].mxu0 %v237
  %v315 = vpop.f32.mrb[0].mxu0
  %v316 = vadd.f32 %v200, %v315
  %v317 = vpop.f32.mrb[0].mxu0
  %v318 = vpop.f32.mrb[0].mxu0
  %v319 = vadd.f32 %v200, %v318
  %v320 = vpop.f32.mrb[0].mxu0
  %321 = vmatprep.mubr.bf16.mxu0 0
  %322 = vmatmul.mubr.bf16.gmra.mrb[0].mxu0 %v238
  %v323 = vpop.f32.mrb[0].mxu0
  %v324 = vadd.f32 %v200, %v323
  %v325 = vpop.f32.mrb[0].mxu0
  %v326 = vpop.f32.mrb[0].mxu0
  %v327 = vadd.f32 %v200, %v326
  %v328 = vpop.f32.mrb[0].mxu0
  %329 = vmatprep.mubr.bf16.mxu0 0
  %330 = vmatmul.mubr.bf16.gmra.mrb[0].mxu0 %v239
  %v331 = vpop.f32.mrb[0].mxu0
  %v332 = vadd.f32 %v200, %v331
  %v333 = vpop.f32.mrb[0].mxu0
  %v334 = vpop.f32.mrb[0].mxu0
  %v335 = vadd.f32 %v200, %v334
  %v336 = vpop.f32.mrb[0].mxu0
  %337 = vmatprep.mubr.bf16.mxu0 0
  %338 = vmatmul.mubr.bf16.gmra.mrb[0].mxu0 %v240
  %v339 = vpop.f32.mrb[0].mxu0
  %v340 = vadd.f32 %v200, %v339
  %v341 = vpop.f32.mrb[0].mxu0
  %v342 = vpop.f32.mrb[0].mxu0
  %v343 = vadd.f32 %v200, %v342
  %v344 = vpop.f32.mrb[0].mxu0
  %345 = vdwg.mxu0
  %v346 = vmax.f32 %v284, 0.0
  %v347 = vmax.f32 %v287, 0.0
  %v348 = vmax.f32 %v292, 0.0
  %v349 = vmax.f32 %v295, 0.0
  %v350 = vmax.f32 %v300, 0.0
  %v351 = vmax.f32 %v303, 0.0
  %v352 = vmax.f32 %v308, 0.0
  %v353 = vmax.f32 %v311, 0.0
  %v354 = vmax.f32 %v316, 0.0
  %v355 = vmax.f32 %v319, 0.0
  %v356 = vmax.f32 %v324, 0.0
  %v357 = vmax.f32 %v327, 0.0
  %v358 = vmax.f32 %v332, 0.0
  %v359 = vmax.f32 %v335, 0.0
  %v360 = vmax.f32 %v340, 0.0
  %v361 = vmax.f32 %v343, 0.0
  %v362 = vld [vmem:[%s3] sm:$0xf]
  %v363 = vld [vmem:[%s3 + $0x4] sm:$0xf]
  %v364 = vld [vmem:[%s3 + $0x8] sm:$0xf]
  %v365 = vld [vmem:[%s3 + $0xc] sm:$0xf]
  %v366 = vld [vmem:[%s3 + $0x20] sm:$0xf]
  %v367 = vld [vmem:[%s3 + $0x24] sm:$0xf]
  %v368 = vld [vmem:[%s3 + $0x28] sm:$0xf]
  %v369 = vld [vmem:[%s3 + $0x2c] sm:$0xf]
  %v370 = vld [vmem:[%s3 + $0x10] sm:$0xf]
  %v371 = vld [vmem:[%s3 + $0x14] sm:$0xf]
  %v372 = vld [vmem:[%s3 + $0x18] sm:$0xf]
  %v373 = vld [vmem:[%s3 + $0x1c] sm:$0xf]
  %v374 = vld [vmem:[%s3 + $0x30] sm:$0xf]
  %v375 = vld [vmem:[%s3 + $0x34] sm:$0xf]
  %v376 = vld [vmem:[%s3 + $0x38] sm:$0xf]
  %v377 = vld [vmem:[%s3 + $0x3c] sm:$0xf]
  %v378 = vld [vmem:[%s4 + $0x5] sm:$0x1]
  %v379 = vld [vmem:[%s4 + $0x6] sm:$0x1]
  %v380 = vpack.c.bf16 %v347, %v346
  %v381 = vpack.c.bf16 %v349, %v348
  %v382 = vpack.c.bf16 %v351, %v350
  %v383 = vpack.c.bf16 %v353, %v352
  %v384 = vpack.c.bf16 %v355, %v354
  %v385 = vpack.c.bf16 %v357, %v356
  %v386 = vpack.c.bf16 %v359, %v358
  %v387 = vpack.c.bf16 %v361, %v360
  %v388 = vlaneseq
  %v389 = vshrl.u32 %v388, 7
  %v390 = vsub.s32 0, %v389
  %v391 = vrot.slane %v378, %v390
  %v396 = vunpack.c.l.b16 %v362
  %v397 = vunpack.c.l.b16 %v363
  %v398 = vunpack.c.l.b16 %v364
  %v399 = vunpack.c.l.b16 %v365
  %v400 = vpack.c.b16 %v397, %v396
  %v401 = vpack.c.b16 %v399, %v398
  %vm404 = vcmask 261120
  %v406 = vsel %vm404, %v380, 0
  %v409 = vsel %vm404, %v381, 0
  %v412 = vsel %vm404, %v382, 0
  %v415 = vsel %vm404, %v383, 0
  %v418 = vsel %vm404, %v384, 0
  %v421 = vsel %vm404, %v385, 0
  %v424 = vsel %vm404, %v386, 0
  %v427 = vsel %vm404, %v387, 0
  %429 = vmatprep.subr.bf16.mxu0 0
  %430 = vmatpush1.bf16.msra.mxu0 %v400
  %431 = vmatprep.subr.bf16.mxu0 0
  %432 = vmatpush1.bf16.msra.mxu0 %v401
  %433 = vmatprep.subr.bf16.mxu0 0
  %434 = vmatpush1.bf16.msra.mxu0 0
  %435 = vmatprep.subr.bf16.mxu0 0
  %436 = vmatpush1.bf16.msra.mxu0 0
  %437 = vmatprep.subr.bf16.mxu0 0
  %438 = vmatpush1.bf16.msra.mxu0 0
  %439 = vmatprep.subr.bf16.mxu0 0
  %440 = vmatpush1.bf16.msra.mxu0 0
  %441 = vmatprep.subr.bf16.mxu0 0
  %442 = vmatpush1.bf16.msra.mxu0 0
  %443 = vmatprep.subr.bf16.mxu0 0
  %444 = vmatpush1.bf16.msra.mxu0 0
  %445 = vmatprep.subr.bf16.mxu0 0
  %446 = vmatpush1.bf16.msra.mxu0 0
  %447 = vmatprep.subr.bf16.mxu0 0
  %448 = vmatpush1.bf16.msra.mxu0 0
  %449 = vmatprep.subr.bf16.mxu0 0
  %450 = vmatpush1.bf16.msra.mxu0 0
  %451 = vmatprep.subr.bf16.mxu0 0
  %452 = vmatpush1.bf16.msra.mxu0 0
  %453 = vmatprep.subr.bf16.mxu0 0
  %454 = vmatpush1.bf16.msra.mxu0 0
  %455 = vmatprep.subr.bf16.mxu0 0
  %456 = vmatpush1.bf16.msra.mxu0 0
  %457 = vmatprep.subr.bf16.mxu0 0
  %458 = vmatpush1.bf16.msra.mxu0 0
  %459 = vmatprep.subr.bf16.mxu0 0
  %460 = vmatpush1.bf16.msra.mxu0 0
  %461 = vmatprep.mubr.bf16.mxu0 0
  %462 = vmatmul.mubr.bf16.gmra.mrb[0].mxu0 %v406
  %v463 = vpop.f32.mrb[0].mxu0
  %v464 = vadd.f32 %v391, %v463
  %v465 = vpop.f32.mrb[0].mxu0
  %v466 = vpop.f32.mrb[0].mxu0
  %v467 = vadd.f32 %v391, %v466
  %v468 = vpop.f32.mrb[0].mxu0
  %469 = vmatprep.mubr.bf16.mxu0 0
  %470 = vmatmul.mubr.bf16.gmra.mrb[0].mxu0 %v409
  %v471 = vpop.f32.mrb[0].mxu0
  %v472 = vadd.f32 %v391, %v471
  %v473 = vpop.f32.mrb[0].mxu0
  %v474 = vpop.f32.mrb[0].mxu0
  %v475 = vadd.f32 %v391, %v474
  %v476 = vpop.f32.mrb[0].mxu0
  %477 = vmatprep.mubr.bf16.mxu0 0
  %478 = vmatmul.mubr.bf16.gmra.mrb[0].mxu0 %v412
  %v479 = vpop.f32.mrb[0].mxu0
  %v480 = vadd.f32 %v391, %v479
  %v481 = vpop.f32.mrb[0].mxu0
  %v482 = vpop.f32.mrb[0].mxu0
  %v483 = vadd.f32 %v391, %v482
  %v484 = vpop.f32.mrb[0].mxu0
  %485 = vmatprep.mubr.bf16.mxu0 0
  %486 = vmatmul.mubr.bf16.gmra.mrb[0].mxu0 %v415
  %v487 = vpop.f32.mrb[0].mxu0
  %v488 = vadd.f32 %v391, %v487
  %v489 = vpop.f32.mrb[0].mxu0
  %v490 = vpop.f32.mrb[0].mxu0
  %v491 = vadd.f32 %v391, %v490
  %v492 = vpop.f32.mrb[0].mxu0
  %493 = vmatprep.mubr.bf16.mxu0 0
  %494 = vmatmul.mubr.bf16.gmra.mrb[0].mxu0 %v418
  %v495 = vpop.f32.mrb[0].mxu0
  %v496 = vadd.f32 %v391, %v495
  %v497 = vpop.f32.mrb[0].mxu0
  %v498 = vpop.f32.mrb[0].mxu0
  %v499 = vadd.f32 %v391, %v498
  %v500 = vpop.f32.mrb[0].mxu0
  %501 = vmatprep.mubr.bf16.mxu0 0
  %502 = vmatmul.mubr.bf16.gmra.mrb[0].mxu0 %v421
  %v503 = vpop.f32.mrb[0].mxu0
  %v504 = vadd.f32 %v391, %v503
  %v505 = vpop.f32.mrb[0].mxu0
  %v506 = vpop.f32.mrb[0].mxu0
  %v507 = vadd.f32 %v391, %v506
  %v508 = vpop.f32.mrb[0].mxu0
  %509 = vmatprep.mubr.bf16.mxu0 0
  %510 = vmatmul.mubr.bf16.gmra.mrb[0].mxu0 %v424
  %v511 = vpop.f32.mrb[0].mxu0
  %v512 = vadd.f32 %v391, %v511
  %v513 = vpop.f32.mrb[0].mxu0
  %v514 = vpop.f32.mrb[0].mxu0
  %v515 = vadd.f32 %v391, %v514
  %v516 = vpop.f32.mrb[0].mxu0
  %517 = vmatprep.mubr.bf16.mxu0 0
  %518 = vmatmul.mubr.bf16.gmra.mrb[0].mxu0 %v427
  %v519 = vpop.f32.mrb[0].mxu0
  %v520 = vadd.f32 %v391, %v519
  %v521 = vpop.f32.mrb[0].mxu0
  %v522 = vpop.f32.mrb[0].mxu0
  %v523 = vadd.f32 %v391, %v522
  %v524 = vpop.f32.mrb[0].mxu0
  %525 = vdwg.mxu0
  %526 = vst [vmem:[#allocation2] sm:$0xff] %v464
  %527 = vst [vmem:[#allocation2 + $0x8] sm:$0xff] %v467
  %528 = vst [vmem:[#allocation2 + $0x10] sm:$0xff] %v472
  %529 = vst [vmem:[#allocation2 + $0x18] sm:$0xff] %v475
  %530 = vst [vmem:[#allocation2 + $0x20] sm:$0xff] %v480
  %531 = vst [vmem:[#allocation2 + $0x28] sm:$0xff] %v483
  %532 = vst [vmem:[#allocation2 + $0x30] sm:$0xff] %v488
  %533 = vst [vmem:[#allocation2 + $0x38] sm:$0xff] %v491
  %534 = vst [vmem:[#allocation2 + $0x40] sm:$0xff] %v496
  %535 = vst [vmem:[#allocation2 + $0x48] sm:$0xff] %v499
  %536 = vst [vmem:[#allocation2 + $0x50] sm:$0xff] %v504
  %537 = vst [vmem:[#allocation2 + $0x58] sm:$0xff] %v507
  %538 = vst [vmem:[#allocation2 + $0x60] sm:$0xff] %v512
  %539 = vst [vmem:[#allocation2 + $0x68] sm:$0xff] %v515
  %540 = vst [vmem:[#allocation2 + $0x70] sm:$0xff] %v520
  %541 = vst [vmem:[#allocation2 + $0x78] sm:$0xff] %v523
  %v542 = vld [vmem:[#allocation2] sm:$0xff]
  %v543 = vld [vmem:[#allocation2 + $0x8] sm:$0xff]
  %v548 = vunpack.c.l.b16 %v370
  %v549 = vunpack.c.l.b16 %v371
  %v550 = vunpack.c.l.b16 %v372
  %v551 = vunpack.c.l.b16 %v373
  %v552 = vpack.c.b16 %v549, %v548
  %v553 = vpack.c.b16 %v551, %v550
  %v557 = vsel %vm404, 0, 0
  %559 = vmatprep.subr.bf16.mxu0 0
  %560 = vmatpush1.bf16.msra.mxu0 %v552
  %561 = vmatprep.subr.bf16.mxu0 0
  %562 = vmatpush1.bf16.msra.mxu0 %v553
  %563 = vmatprep.subr.bf16.mxu0 0
  %564 = vmatpush1.bf16.msra.mxu0 0
  %565 = vmatprep.subr.bf16.mxu0 0
  %566 = vmatpush1.bf16.msra.mxu0 0
  %567 = vmatprep.subr.bf16.mxu0 0
  %568 = vmatpush1.bf16.msra.mxu0 0
  %569 = vmatprep.subr.bf16.mxu0 0
  %570 = vmatpush1.bf16.msra.mxu0 0
  %571 = vmatprep.subr.bf16.mxu0 0
  %572 = vmatpush1.bf16.msra.mxu0 0
  %573 = vmatprep.subr.bf16.mxu0 0
  %574 = vmatpush1.bf16.msra.mxu0 0
  %575 = vmatprep.subr.bf16.mxu0 0
  %576 = vmatpush1.bf16.msra.mxu0 0
  %577 = vmatprep.subr.bf16.mxu0 0
  %578 = vmatpush1.bf16.msra.mxu0 0
  %579 = vmatprep.subr.bf16.mxu0 0
  %580 = vmatpush1.bf16.msra.mxu0 0
  %581 = vmatprep.subr.bf16.mxu0 0
  %582 = vmatpush1.bf16.msra.mxu0 0
  %583 = vmatprep.subr.bf16.mxu0 0
  %584 = vmatpush1.bf16.msra.mxu0 0
  %585 = vmatprep.subr.bf16.mxu0 0
  %586 = vmatpush1.bf16.msra.mxu0 0
  %587 = vmatprep.subr.bf16.mxu0 0
  %588 = vmatpush1.bf16.msra.mxu0 0
  %589 = vmatprep.subr.bf16.mxu0 0
  %590 = vmatpush1.bf16.msra.mxu0 0
  %591 = vmatprep.mubr.bf16.mxu0 0
  %592 = vmatmul.mubr.bf16.gmra.mrb[0].mxu0 %v557
  %v593 = vpop.f32.mrb[0].mxu0
  %v594 = vadd.f32 0.0, %v593
  %v595 = vpop.f32.mrb[0].mxu0
  %v596 = vpop.f32.mrb[0].mxu0
  %v597 = vadd.f32 0.0, %v596
  %v598 = vpop.f32.mrb[0].mxu0
  %599 = vdwg.mxu0
  %v600 = vadd.f32 %v542, %v594
  %v601 = vadd.f32 %v543, %v597
  %v602 = vxor.u32 %v600, 2147483648
  %v603 = vxor.u32 %v601, 2147483648
  %v604 = vmul.f32 %v602, 1.442695
  %v605 = vpow.pop %v604
  %v606 = vmul.f32 %v603, 1.442695
  %v607 = vpow.pop %v606
  %v608 = vadd.f32 %v605, 1.0
  %v609 = vadd.f32 %v607, 1.0
  %v610 = vrcp.pop %v608
  %v611 = vmul.f32 1.0, %v610
  %v612 = vrcp.pop %v609
  %v613 = vmul.f32 1.0, %v612
  %v614 = vtanh.pop %v600
  %v615 = vtanh.pop %v601
  %v616 = vmul.f32 %v611, 0.0
  %v617 = vmul.f32 %v613, 0.0
  %620 = vrot.lane.b32.xlu0 %v614, 32
  %v621 = vpop.permute.xlu0 %620
  %622 = vrot.lane.b32.xlu0 %v615, 32
  %v623 = vpop.permute.xlu0 %622
  %v626 = vmul.f32 %v611, %v621
  %v627 = vmul.f32 %v613, %v623
  %630 = vrot.lane.b32.xlu0 %v626, 32
  %v631 = vpop.permute.xlu0 %630
  %632 = vrot.lane.b32.xlu0 %v627, 32
  %v633 = vpop.permute.xlu0 %632
  %v636 = vadd.f32 %v616, %v631
  %v637 = vadd.f32 %v617, %v633
  %v638 = vtanh.pop %v636
  %v639 = vtanh.pop %v637
  %642 = vrot.lane.b32.xlu0 %v638, 32
  %v643 = vpop.permute.xlu0 %642
  %644 = vrot.lane.b32.xlu0 %v639, 32
  %v645 = vpop.permute.xlu0 %644
  %v648 = vmul.f32 %v611, %v643
  %v649 = vmul.f32 %v613, %v645
  %v650 = vld [vmem:[#allocation2 + $0x10] sm:$0xff]
  %v651 = vld [vmem:[#allocation2 + $0x18] sm:$0xff]
  %v652 = vpack.c.bf16 %v649, %v648
  %654 = vrot.lane.b32.xlu0 %v652, 64
  %v655 = vpop.permute.xlu0 %654
  %v657 = vsel %vm404, %v655, 0
  %659 = vmatprep.subr.bf16.mxu0 0
  %660 = vmatpush1.bf16.msra.mxu0 %v552
  %661 = vmatprep.subr.bf16.mxu0 0
  %662 = vmatpush1.bf16.msra.mxu0 %v553
  %663 = vmatprep.subr.bf16.mxu0 0
  %664 = vmatpush1.bf16.msra.mxu0 0
  %665 = vmatprep.subr.bf16.mxu0 0
  %666 = vmatpush1.bf16.msra.mxu0 0
  %667 = vmatprep.subr.bf16.mxu0 0
  %668 = vmatpush1.bf16.msra.mxu0 0
  %669 = vmatprep.subr.bf16.mxu0 0
  %670 = vmatpush1.bf16.msra.mxu0 0
  %671 = vmatprep.subr.bf16.mxu0 0
  %672 = vmatpush1.bf16.msra.mxu0 0
  %673 = vmatprep.subr.bf16.mxu0 0
  %674 = vmatpush1.bf16.msra.mxu0 0
  %675 = vmatprep.subr.bf16.mxu0 0
  %676 = vmatpush1.bf16.msra.mxu0 0
  %677 = vmatprep.subr.bf16.mxu0 0
  %678 = vmatpush1.bf16.msra.mxu0 0
  %679 = vmatprep.subr.bf16.mxu0 0
  %680 = vmatpush1.bf16.msra.mxu0 0
  %681 = vmatprep.subr.bf16.mxu0 0
  %682 = vmatpush1.bf16.msra.mxu0 0
  %683 = vmatprep.subr.bf16.mxu0 0
  %684 = vmatpush1.bf16.msra.mxu0 0
  %685 = vmatprep.subr.bf16.mxu0 0
  %686 = vmatpush1.bf16.msra.mxu0 0
  %687 = vmatprep.subr.bf16.mxu0 0
  %688 = vmatpush1.bf16.msra.mxu0 0
  %689 = vmatprep.subr.bf16.mxu0 0
  %690 = vmatpush1.bf16.msra.mxu0 0
  %691 = vmatprep.mubr.bf16.mxu0 0
  %692 = vmatmul.mubr.bf16.gmra.mrb[0].mxu0 %v657
  %v693 = vpop.f32.mrb[0].mxu0
  %v694 = vadd.f32 0.0, %v693
  %v695 = vpop.f32.mrb[0].mxu0
  %v696 = vpop.f32.mrb[0].mxu0
  %v697 = vadd.f32 0.0, %v696
  %v698 = vpop.f32.mrb[0].mxu0
  %699 = vdwg.mxu0
  %v700 = vadd.f32 %v650, %v694
  %v701 = vadd.f32 %v651, %v697
  %v702 = vxor.u32 %v700, 2147483648
  %v703 = vxor.u32 %v701, 2147483648
  %v704 = vmul.f32 %v702, 1.442695
  %v705 = vpow.pop %v704
  %v706 = vmul.f32 %v703, 1.442695
  %v707 = vpow.pop %v706
  %v708 = vadd.f32 %v705, 1.0
  %v709 = vadd.f32 %v707, 1.0
  %v710 = vrcp.pop %v708
  %v711 = vmul.f32 1.0, %v710
  %v712 = vrcp.pop %v709
  %v713 = vmul.f32 1.0, %v712
  %v714 = vtanh.pop %v700
  %v715 = vtanh.pop %v701
  %v716 = vmul.f32 %v711, %v636
  %v717 = vmul.f32 %v713, %v637
  %720 = vrot.lane.b32.xlu0 %v714, 32
  %v721 = vpop.permute.xlu0 %720
  %722 = vrot.lane.b32.xlu0 %v715, 32
  %v723 = vpop.permute.xlu0 %722
  %v726 = vmul.f32 %v711, %v721
  %v727 = vmul.f32 %v713, %v723
  %730 = vrot.lane.b32.xlu0 %v726, 32
  %v731 = vpop.permute.xlu0 %730
  %732 = vrot.lane.b32.xlu0 %v727, 32
  %v733 = vpop.permute.xlu0 %732
  %v736 = vadd.f32 %v716, %v731
  %v737 = vadd.f32 %v717, %v733
  %v738 = vtanh.pop %v736
  %v739 = vtanh.pop %v737
  %742 = vrot.lane.b32.xlu0 %v738, 32
  %v743 = vpop.permute.xlu0 %742
  %744 = vrot.lane.b32.xlu0 %v739, 32
  %v745 = vpop.permute.xlu0 %744
  %v748 = vmul.f32 %v711, %v743
  %v749 = vmul.f32 %v713, %v745
  %v750 = vlaneseq
  %v751 = vshrl.u32 %v750, 7
  %v752 = vsub.s32 0, %v751
  %v753 = vrot.slane %v379, %v752
  %v758 = vunpack.c.l.b16 %v366
  %v759 = vunpack.c.l.b16 %v367
  %v760 = vunpack.c.l.b16 %v368
  %v761 = vunpack.c.l.b16 %v369
  %v762 = vpack.c.b16 %v759, %v758
  %v763 = vpack.c.b16 %v761, %v760
  %766 = vmatprep.subr.bf16.mxu0 0
  %767 = vmatpush1.bf16.msra.mxu0 %v762
  %768 = vmatprep.subr.bf16.mxu0 0
  %769 = vmatpush1.bf16.msra.mxu0 %v763
  %770 = vmatprep.subr.bf16.mxu0 0
  %771 = vmatpush1.bf16.msra.mxu0 0
  %772 = vmatprep.subr.bf16.mxu0 0
  %773 = vmatpush1.bf16.msra.mxu0 0
  %774 = vmatprep.subr.bf16.mxu0 0
  %775 = vmatpush1.bf16.msra.mxu0 0
  %776 = vmatprep.subr.bf16.mxu0 0
  %777 = vmatpush1.bf16.msra.mxu0 0
  %778 = vmatprep.subr.bf16.mxu0 0
  %779 = vmatpush1.bf16.msra.mxu0 0
  %780 = vmatprep.subr.bf16.mxu0 0
  %781 = vmatpush1.bf16.msra.mxu0 0
  %782 = vmatprep.subr.bf16.mxu0 0
  %783 = vmatpush1.bf16.msra.mxu0 0
  %784 = vmatprep.subr.bf16.mxu0 0
  %785 = vmatpush1.bf16.msra.mxu0 0
  %786 = vmatprep.subr.bf16.mxu0 0
  %787 = vmatpush1.bf16.msra.mxu0 0
  %788 = vmatprep.subr.bf16.mxu0 0
  %789 = vmatpush1.bf16.msra.mxu0 0
  %790 = vmatprep.subr.bf16.mxu0 0
  %791 = vmatpush1.bf16.msra.mxu0 0
  %792 = vmatprep.subr.bf16.mxu0 0
  %793 = vmatpush1.bf16.msra.mxu0 0
  %794 = vmatprep.subr.bf16.mxu0 0
  %795 = vmatpush1.bf16.msra.mxu0 0
  %796 = vmatprep.subr.bf16.mxu0 0
  %797 = vmatpush1.bf16.msra.mxu0 0
  %798 = vmatprep.mubr.bf16.mxu0 0
  %799 = vmatmul.mubr.bf16.gmra.mrb[0].mxu0 %v657
  %v800 = vpop.f32.mrb[0].mxu0
  %v801 = vadd.f32 %v753, %v800
  %v802 = vpop.f32.mrb[0].mxu0
  %v803 = vpop.f32.mrb[0].mxu0
  %v804 = vadd.f32 %v753, %v803
  %v805 = vpop.f32.mrb[0].mxu0
  %806 = vdwg.mxu0
  %v811 = vunpack.c.l.b16 %v374
  %v812 = vunpack.c.l.b16 %v375
  %v813 = vunpack.c.l.b16 %v376
  %v814 = vunpack.c.l.b16 %v377
  %v815 = vpack.c.b16 %v812, %v811
  %v816 = vpack.c.b16 %v814, %v813
  %819 = vmatprep.subr.bf16.mxu0 0
  %820 = vmatpush1.bf16.msra.mxu0 %v815
  %821 = vmatprep.subr.bf16.mxu0 0
  %822 = vmatpush1.bf16.msra.mxu0 %v816
  %823 = vmatprep.subr.bf16.mxu0 0
  %824 = vmatpush1.bf16.msra.mxu0 0
  %825 = vmatprep.subr.bf16.mxu0 0
  %826 = vmatpush1.bf16.msra.mxu0 0
  %827 = vmatprep.subr.bf16.mxu0 0
  %828 = vmatpush1.bf16.msra.mxu0 0
  %829 = vmatprep.subr.bf16.mxu0 0
  %830 = vmatpush1.bf16.msra.mxu0 0
  %831 = vmatprep.subr.bf16.mxu0 0
  %832 = vmatpush1.bf16.msra.mxu0 0
  %833 = vmatprep.subr.bf16.mxu0 0
  %834 = vmatpush1.bf16.msra.mxu0 0
  %835 = vmatprep.subr.bf16.mxu0 0
  %836 = vmatpush1.bf16.msra.mxu0 0
  %837 = vmatprep.subr.bf16.mxu0 0
  %838 = vmatpush1.bf16.msra.mxu0 0
  %839 = vmatprep.subr.bf16.mxu0 0
  %840 = vmatpush1.bf16.msra.mxu0 0
  %841 = vmatprep.subr.bf16.mxu0 0
  %842 = vmatpush1.bf16.msra.mxu0 0
  %843 = vmatprep.subr.bf16.mxu0 0
  %844 = vmatpush1.bf16.msra.mxu0 0
  %845 = vmatprep.subr.bf16.mxu0 0
  %846 = vmatpush1.bf16.msra.mxu0 0
  %847 = vmatprep.subr.bf16.mxu0 0
  %848 = vmatpush1.bf16.msra.mxu0 0
  %849 = vmatprep.subr.bf16.mxu0 0
  %850 = vmatpush1.bf16.msra.mxu0 0
  %851 = vmatprep.mubr.bf16.mxu0 0
  %852 = vmatmul.mubr.bf16.gmra.mrb[0].mxu0 %v557
  %v853 = vpop.f32.mrb[0].mxu0
  %v854 = vadd.f32 0.0, %v853
  %v855 = vpop.f32.mrb[0].mxu0
  %v856 = vpop.f32.mrb[0].mxu0
  %v857 = vadd.f32 0.0, %v856
  %v858 = vpop.f32.mrb[0].mxu0
  %859 = vdwg.mxu0
  %v860 = vadd.f32 %v801, %v854
  %v861 = vadd.f32 %v804, %v857
  %v862 = vxor.u32 %v860, 2147483648
  %v863 = vxor.u32 %v861, 2147483648
  %v864 = vmul.f32 %v862, 1.442695
  %v865 = vpow.pop %v864
  %v866 = vmul.f32 %v863, 1.442695
  %v867 = vpow.pop %v866
  %v868 = vadd.f32 %v865, 1.0
  %v869 = vadd.f32 %v867, 1.0
  %v870 = vrcp.pop %v868
  %v871 = vmul.f32 1.0, %v870
  %v872 = vrcp.pop %v869
  %v873 = vmul.f32 1.0, %v872
  %v874 = vtanh.pop %v860
  %v875 = vtanh.pop %v861
  %v876 = vmul.f32 %v871, 0.0
  %v877 = vmul.f32 %v873, 0.0
  %880 = vrot.lane.b32.xlu0 %v874, 32
  %v881 = vpop.permute.xlu0 %880
  %882 = vrot.lane.b32.xlu0 %v875, 32
  %v883 = vpop.permute.xlu0 %882
  %v886 = vmul.f32 %v871, %v881
  %v887 = vmul.f32 %v873, %v883
  %890 = vrot.lane.b32.xlu0 %v886, 32
  %v891 = vpop.permute.xlu0 %890
  %892 = vrot.lane.b32.xlu0 %v887, 32
  %v893 = vpop.permute.xlu0 %892
  %v896 = vadd.f32 %v876, %v891
  %v897 = vadd.f32 %v877, %v893
  %v898 = vtanh.pop %v896
  %v899 = vtanh.pop %v897
  %902 = vrot.lane.b32.xlu0 %v898, 32
  %v903 = vpop.permute.xlu0 %902
  %904 = vrot.lane.b32.xlu0 %v899, 32
  %v905 = vpop.permute.xlu0 %904
  %v908 = vmul.f32 %v871, %v903
  %v909 = vmul.f32 %v873, %v905
  %912 = vrot.lane.b32.xlu0 %v908, 64
  %v913 = vpop.permute.xlu0 %912
  %914 = vrot.lane.b32.xlu0 %v909, 64
  %v915 = vpop.permute.xlu0 %914
  %918 = vst.msk [vmem:[#allocation3] sm:$0xff] %vm404, %v913
  %919 = vst.msk [vmem:[#allocation3 + $0x8] sm:$0xff] %vm404, %v915
  %v920 = vld [vmem:[#allocation2 + $0x20] sm:$0xff]
  %v921 = vld [vmem:[#allocation2 + $0x28] sm:$0xff]
  %v922 = vpack.c.bf16 %v749, %v748
  %924 = vrot.lane.b32.xlu0 %v922, 64
  %v925 = vpop.permute.xlu0 %924
  %v927 = vsel %vm404, %v925, 0
  %929 = vmatprep.subr.bf16.mxu0 0
  %930 = vmatpush1.bf16.msra.mxu0 %v552
  %931 = vmatprep.subr.bf16.mxu0 0
  %932 = vmatpush1.bf16.msra.mxu0 %v553
  %933 = vmatprep.subr.bf16.mxu0 0
  %934 = vmatpush1.bf16.msra.mxu0 0
  %935 = vmatprep.subr.bf16.mxu0 0
  %936 = vmatpush1.bf16.msra.mxu0 0
  %937 = vmatprep.subr.bf16.mxu0 0
  %938 = vmatpush1.bf16.msra.mxu0 0
  %939 = vmatprep.subr.bf16.mxu0 0
  %940 = vmatpush1.bf16.msra.mxu0 0
  %941 = vmatprep.subr.bf16.mxu0 0
  %942 = vmatpush1.bf16.msra.mxu0 0
  %943 = vmatprep.subr.bf16.mxu0 0
  %944 = vmatpush1.bf16.msra.mxu0 0
  %945 = vmatprep.subr.bf16.mxu0 0
  %946 = vmatpush1.bf16.msra.mxu0 0
  %947 = vmatprep.subr.bf16.mxu0 0
  %948 = vmatpush1.bf16.msra.mxu0 0
  %949 = vmatprep.subr.bf16.mxu0 0
  %950 = vmatpush1.bf16.msra.mxu0 0
  %951 = vmatprep.subr.bf16.mxu0 0
  %952 = vmatpush1.bf16.msra.mxu0 0
  %953 = vmatprep.subr.bf16.mxu0 0
  %954 = vmatpush1.bf16.msra.mxu0 0
  %955 = vmatprep.subr.bf16.mxu0 0
  %956 = vmatpush1.bf16.msra.mxu0 0
  %957 = vmatprep.subr.bf16.mxu0 0
  %958 = vmatpush1.bf16.msra.mxu0 0
  %959 = vmatprep.subr.bf16.mxu0 0
  %960 = vmatpush1.bf16.msra.mxu0 0
  %961 = vmatprep.mubr.bf16.mxu0 0
  %962 = vmatmul.mubr.bf16.gmra.mrb[0].mxu0 %v927
  %v963 = vpop.f32.mrb[0].mxu0
  %v964 = vadd.f32 0.0, %v963
  %v965 = vpop.f32.mrb[0].mxu0
  %v966 = vpop.f32.mrb[0].mxu0
  %v967 = vadd.f32 0.0, %v966
  %v968 = vpop.f32.mrb[0].mxu0
  %969 = vdwg.mxu0
  %v970 = vadd.f32 %v920, %v964
  %v971 = vadd.f32 %v921, %v967
  %v972 = vxor.u32 %v970, 2147483648
  %v973 = vxor.u32 %v971, 2147483648
  %v974 = vmul.f32 %v972, 1.442695
  %v975 = vpow.pop %v974
  %v976 = vmul.f32 %v973, 1.442695
  %v977 = vpow.pop %v976
  %v978 = vadd.f32 %v975, 1.0
  %v979 = vadd.f32 %v977, 1.0
  %v980 = vrcp.pop %v978
  %v981 = vmul.f32 1.0, %v980
  %v982 = vrcp.pop %v979
  %v983 = vmul.f32 1.0, %v982
  %v984 = vtanh.pop %v970
  %v985 = vtanh.pop %v971
  %v986 = vmul.f32 %v981, %v736
  %v987 = vmul.f32 %v983, %v737
  %990 = vrot.lane.b32.xlu0 %v984, 32
  %v991 = vpop.permute.xlu0 %990
  %992 = vrot.lane.b32.xlu0 %v985, 32
  %v993 = vpop.permute.xlu0 %992
  %v996 = vmul.f32 %v981, %v991
  %v997 = vmul.f32 %v983, %v993
  %1000 = vrot.lane.b32.xlu0 %v996, 32
  %v1001 = vpop.permute.xlu0 %1000
  %1002 = vrot.lane.b32.xlu0 %v997, 32
  %v1003 = vpop.permute.xlu0 %1002
  %v1006 = vadd.f32 %v986, %v1001
  %v1007 = vadd.f32 %v987, %v1003
  %v1008 = vtanh.pop %v1006
  %v1009 = vtanh.pop %v1007
  %1012 = vrot.lane.b32.xlu0 %v1008, 32
  %v1013 = vpop.permute.xlu0 %1012
  %1014 = vrot.lane.b32.xlu0 %v1009, 32
  %v1015 = vpop.permute.xlu0 %1014
  %v1018 = vmul.f32 %v981, %v1013
  %v1019 = vmul.f32 %v983, %v1015
  %1020 = vmatprep.subr.bf16.mxu0 0
  %1021 = vmatpush1.bf16.msra.mxu0 %v762
  %1022 = vmatprep.subr.bf16.mxu0 0
  %1023 = vmatpush1.bf16.msra.mxu0 %v763
  %1024 = vmatprep.subr.bf16.mxu0 0
  %1025 = vmatpush1.bf16.msra.mxu0 0
  %1026 = vmatprep.subr.bf16.mxu0 0
  %1027 = vmatpush1.bf16.msra.mxu0 0
  %1028 = vmatprep.subr.bf16.mxu0 0
  %1029 = vmatpush1.bf16.msra.mxu0 0
  %1030 = vmatprep.subr.bf16.mxu0 0
  %1031 = vmatpush1.bf16.msra.mxu0 0
  %1032 = vmatprep.subr.bf16.mxu0 0
  %1033 = vmatpush1.bf16.msra.mxu0 0
  %1034 = vmatprep.subr.bf16.mxu0 0
  %1035 = vmatpush1.bf16.msra.mxu0 0
  %1036 = vmatprep.subr.bf16.mxu0 0
  %1037 = vmatpush1.bf16.msra.mxu0 0
  %1038 = vmatprep.subr.bf16.mxu0 0
  %1039 = vmatpush1.bf16.msra.mxu0 0
  %1040 = vmatprep.subr.bf16.mxu0 0
  %1041 = vmatpush1.bf16.msra.mxu0 0
  %1042 = vmatprep.subr.bf16.mxu0 0
  %1043 = vmatpush1.bf16.msra.mxu0 0
  %1044 = vmatprep.subr.bf16.mxu0 0
  %1045 = vmatpush1.bf16.msra.mxu0 0
  %1046 = vmatprep.subr.bf16.mxu0 0
  %1047 = vmatpush1.bf16.msra.mxu0 0
  %1048 = vmatprep.subr.bf16.mxu0 0
  %1049 = vmatpush1.bf16.msra.mxu0 0
  %1050 = vmatprep.subr.bf16.mxu0 0
  %1051 = vmatpush1.bf16.msra.mxu0 0
  %1052 = vmatprep.mubr.bf16.mxu0 0
  %1053 = vmatmul.mubr.bf16.gmra.mrb[0].mxu0 %v927
  %v1054 = vpop.f32.mrb[0].mxu0
  %v1055 = vadd.f32 %v753, %v1054
  %v1056 = vpop.f32.mrb[0].mxu0
  %v1057 = vpop.f32.mrb[0].mxu0
  %v1058 = vadd.f32 %v753, %v1057
  %v1059 = vpop.f32.mrb[0].mxu0
  %1060 = vdwg.mxu0
  %v1061 = vpack.c.bf16 %v909, %v908
  %1063 = vrot.lane.b32.xlu0 %v1061, 64
  %v1064 = vpop.permute.xlu0 %1063
  %v1066 = vsel %vm404, %v1064, 0
  %1068 = vmatprep.subr.bf16.mxu0 0
  %1069 = vmatpush1.bf16.msra.mxu0 %v815
  %1070 = vmatprep.subr.bf16.mxu0 0
  %1071 = vmatpush1.bf16.msra.mxu0 %v816
  %1072 = vmatprep.subr.bf16.mxu0 0
  %1073 = vmatpush1.bf16.msra.mxu0 0
  %1074 = vmatprep.subr.bf16.mxu0 0
  %1075 = vmatpush1.bf16.msra.mxu0 0
  %1076 = vmatprep.subr.bf16.mxu0 0
  %1077 = vmatpush1.bf16.msra.mxu0 0
  %1078 = vmatprep.subr.bf16.mxu0 0
  %1079 = vmatpush1.bf16.msra.mxu0 0
  %1080 = vmatprep.subr.bf16.mxu0 0
  %1081 = vmatpush1.bf16.msra.mxu0 0
  %1082 = vmatprep.subr.bf16.mxu0 0
  %1083 = vmatpush1.bf16.msra.mxu0 0
  %1084 = vmatprep.subr.bf16.mxu0 0
  %1085 = vmatpush1.bf16.msra.mxu0 0
  %1086 = vmatprep.subr.bf16.mxu0 0
  %1087 = vmatpush1.bf16.msra.mxu0 0
  %1088 = vmatprep.subr.bf16.mxu0 0
  %1089 = vmatpush1.bf16.msra.mxu0 0
  %1090 = vmatprep.subr.bf16.mxu0 0
  %1091 = vmatpush1.bf16.msra.mxu0 0
  %1092 = vmatprep.subr.bf16.mxu0 0
  %1093 = vmatpush1.bf16.msra.mxu0 0
  %1094 = vmatprep.subr.bf16.mxu0 0
  %1095 = vmatpush1.bf16.msra.mxu0 0
  %1096 = vmatprep.subr.bf16.mxu0 0
  %1097 = vmatpush1.bf16.msra.mxu0 0
  %1098 = vmatprep.subr.bf16.mxu0 0
  %1099 = vmatpush1.bf16.msra.mxu0 0
  %1100 = vmatprep.mubr.bf16.mxu0 0
  %1101 = vmatmul.mubr.bf16.gmra.mrb[0].mxu0 %v1066
  %v1102 = vpop.f32.mrb[0].mxu0
  %v1103 = vadd.f32 0.0, %v1102
  %v1104 = vpop.f32.mrb[0].mxu0
  %v1105 = vpop.f32.mrb[0].mxu0
  %v1106 = vadd.f32 0.0, %v1105
  %v1107 = vpop.f32.mrb[0].mxu0
  %1108 = vdwg.mxu0
  %v1109 = vadd.f32 %v1055, %v1103
  %v1110 = vadd.f32 %v1058, %v1106
  %v1111 = vxor.u32 %v1109, 2147483648
  %v1112 = vxor.u32 %v1110, 2147483648
  %v1113 = vmul.f32 %v1111, 1.442695
  %v1114 = vpow.pop %v1113
  %v1115 = vmul.f32 %v1112, 1.442695
  %v1116 = vpow.pop %v1115
  %v1117 = vadd.f32 %v1114, 1.0
  %v1118 = vadd.f32 %v1116, 1.0
  %v1119 = vrcp.pop %v1117
  %v1120 = vmul.f32 1.0, %v1119
  %v1121 = vrcp.pop %v1118
  %v1122 = vmul.f32 1.0, %v1121
  %v1123 = vtanh.pop %v1109
  %v1124 = vtanh.pop %v1110
  %v1125 = vmul.f32 %v1120, %v896
  %v1126 = vmul.f32 %v1122, %v897
  %1129 = vrot.lane.b32.xlu0 %v1123, 32
  %v1130 = vpop.permute.xlu0 %1129
  %1131 = vrot.lane.b32.xlu0 %v1124, 32
  %v1132 = vpop.permute.xlu0 %1131
  %v1135 = vmul.f32 %v1120, %v1130
  %v1136 = vmul.f32 %v1122, %v1132
  %1139 = vrot.lane.b32.xlu0 %v1135, 32
  %v1140 = vpop.permute.xlu0 %1139
  %1141 = vrot.lane.b32.xlu0 %v1136, 32
  %v1142 = vpop.permute.xlu0 %1141
  %v1145 = vadd.f32 %v1125, %v1140
  %v1146 = vadd.f32 %v1126, %v1142
  %v1147 = vtanh.pop %v1145
  %v1148 = vtanh.pop %v1146
  %1151 = vrot.lane.b32.xlu0 %v1147, 32
  %v1152 = vpop.permute.xlu0 %1151
  %1153 = vrot.lane.b32.xlu0 %v1148, 32
  %v1154 = vpop.permute.xlu0 %1153
  %v1157 = vmul.f32 %v1120, %v1152
  %v1158 = vmul.f32 %v1122, %v1154
  %1161 = vrot.lane.b32.xlu0 %v1157, 64
  %v1162 = vpop.permute.xlu0 %1161
  %1163 = vrot.lane.b32.xlu0 %v1158, 64
  %v1164 = vpop.permute.xlu0 %1163
  %1167 = vst.msk [vmem:[#allocation3 + $0x10] sm:$0xff] %vm404, %v1162
  %1168 = vst.msk [vmem:[#allocation3 + $0x18] sm:$0xff] %vm404, %v1164
  %v1169 = vld [vmem:[#allocation2 + $0x30] sm:$0xff]
  %v1170 = vld [vmem:[#allocation2 + $0x38] sm:$0xff]
  %v1171 = vpack.c.bf16 %v1019, %v1018
  %1173 = vrot.lane.b32.xlu0 %v1171, 64
  %v1174 = vpop.permute.xlu0 %1173
  %v1176 = vsel %vm404, %v1174, 0
  %1178 = vmatprep.subr.bf16.mxu0 0
  %1179 = vmatpush1.bf16.msra.mxu0 %v552
  %1180 = vmatprep.subr.bf16.mxu0 0
  %1181 = vmatpush1.bf16.msra.mxu0 %v553
  %1182 = vmatprep.subr.bf16.mxu0 0
  %1183 = vmatpush1.bf16.msra.mxu0 0
  %1184 = vmatprep.subr.bf16.mxu0 0
  %1185 = vmatpush1.bf16.msra.mxu0 0
  %1186 = vmatprep.subr.bf16.mxu0 0
  %1187 = vmatpush1.bf16.msra.mxu0 0
  %1188 = vmatprep.subr.bf16.mxu0 0
  %1189 = vmatpush1.bf16.msra.mxu0 0
  %1190 = vmatprep.subr.bf16.mxu0 0
  %1191 = vmatpush1.bf16.msra.mxu0 0
  %1192 = vmatprep.subr.bf16.mxu0 0
  %1193 = vmatpush1.bf16.msra.mxu0 0
  %1194 = vmatprep.subr.bf16.mxu0 0
  %1195 = vmatpush1.bf16.msra.mxu0 0
  %1196 = vmatprep.subr.bf16.mxu0 0
  %1197 = vmatpush1.bf16.msra.mxu0 0
  %1198 = vmatprep.subr.bf16.mxu0 0
  %1199 = vmatpush1.bf16.msra.mxu0 0
  %1200 = vmatprep.subr.bf16.mxu0 0
  %1201 = vmatpush1.bf16.msra.mxu0 0
  %1202 = vmatprep.subr.bf16.mxu0 0
  %1203 = vmatpush1.bf16.msra.mxu0 0
  %1204 = vmatprep.subr.bf16.mxu0 0
  %1205 = vmatpush1.bf16.msra.mxu0 0
  %1206 = vmatprep.subr.bf16.mxu0 0
  %1207 = vmatpush1.bf16.msra.mxu0 0
  %1208 = vmatprep.subr.bf16.mxu0 0
  %1209 = vmatpush1.bf16.msra.mxu0 0
  %1210 = vmatprep.mubr.bf16.mxu0 0
  %1211 = vmatmul.mubr.bf16.gmra.mrb[0].mxu0 %v1176
  %v1212 = vpop.f32.mrb[0].mxu0
  %v1213 = vadd.f32 0.0, %v1212
  %v1214 = vpop.f32.mrb[0].mxu0
  %v1215 = vpop.f32.mrb[0].mxu0
  %v1216 = vadd.f32 0.0, %v1215
  %v1217 = vpop.f32.mrb[0].mxu0
  %1218 = vdwg.mxu0
  %v1219 = vadd.f32 %v1169, %v1213
  %v1220 = vadd.f32 %v1170, %v1216
  %v1221 = vxor.u32 %v1219, 2147483648
  %v1222 = vxor.u32 %v1220, 2147483648
  %v1223 = vmul.f32 %v1221, 1.442695
  %v1224 = vpow.pop %v1223
  %v1225 = vmul.f32 %v1222, 1.442695
  %v1226 = vpow.pop %v1225
  %v1227 = vadd.f32 %v1224, 1.0
  %v1228 = vadd.f32 %v1226, 1.0
  %v1229 = vrcp.pop %v1227
  %v1230 = vmul.f32 1.0, %v1229
  %v1231 = vrcp.pop %v1228
  %v1232 = vmul.f32 1.0, %v1231
  %v1233 = vtanh.pop %v1219
  %v1234 = vtanh.pop %v1220
  %v1235 = vmul.f32 %v1230, %v1006
  %v1236 = vmul.f32 %v1232, %v1007
  %1239 = vrot.lane.b32.xlu0 %v1233, 32
  %v1240 = vpop.permute.xlu0 %1239
  %1241 = vrot.lane.b32.xlu0 %v1234, 32
  %v1242 = vpop.permute.xlu0 %1241
  %v1245 = vmul.f32 %v1230, %v1240
  %v1246 = vmul.f32 %v1232, %v1242
  %1249 = vrot.lane.b32.xlu0 %v1245, 32
  %v1250 = vpop.permute.xlu0 %1249
  %1251 = vrot.lane.b32.xlu0 %v1246, 32
  %v1252 = vpop.permute.xlu0 %1251
  %v1255 = vadd.f32 %v1235, %v1250
  %v1256 = vadd.f32 %v1236, %v1252
  %v1257 = vtanh.pop %v1255
  %v1258 = vtanh.pop %v1256
  %1261 = vrot.lane.b32.xlu0 %v1257, 32
  %v1262 = vpop.permute.xlu0 %1261
  %1263 = vrot.lane.b32.xlu0 %v1258, 32
  %v1264 = vpop.permute.xlu0 %1263
  %v1267 = vmul.f32 %v1230, %v1262
  %v1268 = vmul.f32 %v1232, %v1264
  %1269 = vmatprep.subr.bf16.mxu0 0
  %1270 = vmatpush1.bf16.msra.mxu0 %v762
  %1271 = vmatprep.subr.bf16.mxu0 0
  %1272 = vmatpush1.bf16.msra.mxu0 %v763
  %1273 = vmatprep.subr.bf16.mxu0 0
  %1274 = vmatpush1.bf16.msra.mxu0 0
  %1275 = vmatprep.subr.bf16.mxu0 0
  %1276 = vmatpush1.bf16.msra.mxu0 0
  %1277 = vmatprep.subr.bf16.mxu0 0
  %1278 = vmatpush1.bf16.msra.mxu0 0
  %1279 = vmatprep.subr.bf16.mxu0 0
  %1280 = vmatpush1.bf16.msra.mxu0 0
  %1281 = vmatprep.subr.bf16.mxu0 0
  %1282 = vmatpush1.bf16.msra.mxu0 0
  %1283 = vmatprep.subr.bf16.mxu0 0
  %1284 = vmatpush1.bf16.msra.mxu0 0
  %1285 = vmatprep.subr.bf16.mxu0 0
  %1286 = vmatpush1.bf16.msra.mxu0 0
  %1287 = vmatprep.subr.bf16.mxu0 0
  %1288 = vmatpush1.bf16.msra.mxu0 0
  %1289 = vmatprep.subr.bf16.mxu0 0
  %1290 = vmatpush1.bf16.msra.mxu0 0
  %1291 = vmatprep.subr.bf16.mxu0 0
  %1292 = vmatpush1.bf16.msra.mxu0 0
  %1293 = vmatprep.subr.bf16.mxu0 0
  %1294 = vmatpush1.bf16.msra.mxu0 0
  %1295 = vmatprep.subr.bf16.mxu0 0
  %1296 = vmatpush1.bf16.msra.mxu0 0
  %1297 = vmatprep.subr.bf16.mxu0 0
  %1298 = vmatpush1.bf16.msra.mxu0 0
  %1299 = vmatprep.subr.bf16.mxu0 0
  %1300 = vmatpush1.bf16.msra.mxu0 0
  %1301 = vmatprep.mubr.bf16.mxu0 0
  %1302 = vmatmul.mubr.bf16.gmra.mrb[0].mxu0 %v1176
  %v1303 = vpop.f32.mrb[0].mxu0
  %v1304 = vadd.f32 %v753, %v1303
  %v1305 = vpop.f32.mrb[0].mxu0
  %v1306 = vpop.f32.mrb[0].mxu0
  %v1307 = vadd.f32 %v753, %v1306
  %v1308 = vpop.f32.mrb[0].mxu0
  %1309 = vdwg.mxu0
  %v1310 = vpack.c.bf16 %v1158, %v1157
  %1312 = vrot.lane.b32.xlu0 %v1310, 64
  %v1313 = vpop.permute.xlu0 %1312
  %v1315 = vsel %vm404, %v1313, 0
  %1317 = vmatprep.subr.bf16.mxu0 0
  %1318 = vmatpush1.bf16.msra.mxu0 %v815
  %1319 = vmatprep.subr.bf16.mxu0 0
  %1320 = vmatpush1.bf16.msra.mxu0 %v816
  %1321 = vmatprep.subr.bf16.mxu0 0
  %1322 = vmatpush1.bf16.msra.mxu0 0
  %1323 = vmatprep.subr.bf16.mxu0 0
  %1324 = vmatpush1.bf16.msra.mxu0 0
  %1325 = vmatprep.subr.bf16.mxu0 0
  %1326 = vmatpush1.bf16.msra.mxu0 0
  %1327 = vmatprep.subr.bf16.mxu0 0
  %1328 = vmatpush1.bf16.msra.mxu0 0
  %1329 = vmatprep.subr.bf16.mxu0 0
  %1330 = vmatpush1.bf16.msra.mxu0 0
  %1331 = vmatprep.subr.bf16.mxu0 0
  %1332 = vmatpush1.bf16.msra.mxu0 0
  %1333 = vmatprep.subr.bf16.mxu0 0
  %1334 = vmatpush1.bf16.msra.mxu0 0
  %1335 = vmatprep.subr.bf16.mxu0 0
  %1336 = vmatpush1.bf16.msra.mxu0 0
  %1337 = vmatprep.subr.bf16.mxu0 0
  %1338 = vmatpush1.bf16.msra.mxu0 0
  %1339 = vmatprep.subr.bf16.mxu0 0
  %1340 = vmatpush1.bf16.msra.mxu0 0
  %1341 = vmatprep.subr.bf16.mxu0 0
  %1342 = vmatpush1.bf16.msra.mxu0 0
  %1343 = vmatprep.subr.bf16.mxu0 0
  %1344 = vmatpush1.bf16.msra.mxu0 0
  %1345 = vmatprep.subr.bf16.mxu0 0
  %1346 = vmatpush1.bf16.msra.mxu0 0
  %1347 = vmatprep.subr.bf16.mxu0 0
  %1348 = vmatpush1.bf16.msra.mxu0 0
  %1349 = vmatprep.mubr.bf16.mxu0 0
  %1350 = vmatmul.mubr.bf16.gmra.mrb[0].mxu0 %v1315
  %v1351 = vpop.f32.mrb[0].mxu0
  %v1352 = vadd.f32 0.0, %v1351
  %v1353 = vpop.f32.mrb[0].mxu0
  %v1354 = vpop.f32.mrb[0].mxu0
  %v1355 = vadd.f32 0.0, %v1354
  %v1356 = vpop.f32.mrb[0].mxu0
  %1357 = vdwg.mxu0
  %v1358 = vadd.f32 %v1304, %v1352
  %v1359 = vadd.f32 %v1307, %v1355
  %v1360 = vxor.u32 %v1358, 2147483648
  %v1361 = vxor.u32 %v1359, 2147483648
  %v1362 = vmul.f32 %v1360, 1.442695
  %v1363 = vpow.pop %v1362
  %v1364 = vmul.f32 %v1361, 1.442695
  %v1365 = vpow.pop %v1364
  %v1366 = vadd.f32 %v1363, 1.0
  %v1367 = vadd.f32 %v1365, 1.0
  %v1368 = vrcp.pop %v1366
  %v1369 = vmul.f32 1.0, %v1368
  %v1370 = vrcp.pop %v1367
  %v1371 = vmul.f32 1.0, %v1370
  %v1372 = vtanh.pop %v1358
  %v1373 = vtanh.pop %v1359
  %v1374 = vmul.f32 %v1369, %v1145
  %v1375 = vmul.f32 %v1371, %v1146
  %1378 = vrot.lane.b32.xlu0 %v1372, 32
  %v1379 = vpop.permute.xlu0 %1378
  %1380 = vrot.lane.b32.xlu0 %v1373, 32
  %v1381 = vpop.permute.xlu0 %1380
  %v1384 = vmul.f32 %v1369, %v1379
  %v1385 = vmul.f32 %v1371, %v1381
  %1388 = vrot.lane.b32.xlu0 %v1384, 32
  %v1389 = vpop.permute.xlu0 %1388
  %1390 = vrot.lane.b32.xlu0 %v1385, 32
  %v1391 = vpop.permute.xlu0 %1390
  %v1394 = vadd.f32 %v1374, %v1389
  %v1395 = vadd.f32 %v1375, %v1391
  %v1396 = vtanh.pop %v1394
  %v1397 = vtanh.pop %v1395
  %1400 = vrot.lane.b32.xlu0 %v1396, 32
  %v1401 = vpop.permute.xlu0 %1400
  %1402 = vrot.lane.b32.xlu0 %v1397, 32
  %v1403 = vpop.permute.xlu0 %1402
  %v1406 = vmul.f32 %v1369, %v1401
  %v1407 = vmul.f32 %v1371, %v1403
  %1410 = vrot.lane.b32.xlu0 %v1406, 64
  %v1411 = vpop.permute.xlu0 %1410
  %1412 = vrot.lane.b32.xlu0 %v1407, 64
  %v1413 = vpop.permute.xlu0 %1412
  %1416 = vst.msk [vmem:[#allocation3 + $0x20] sm:$0xff] %vm404, %v1411
  %1417 = vst.msk [vmem:[#allocation3 + $0x28] sm:$0xff] %vm404, %v1413
  %v1418 = vld [vmem:[#allocation2 + $0x40] sm:$0xff]
  %v1419 = vld [vmem:[#allocation2 + $0x48] sm:$0xff]
  %v1420 = vpack.c.bf16 %v1268, %v1267
  %1422 = vrot.lane.b32.xlu0 %v1420, 64
  %v1423 = vpop.permute.xlu0 %1422
  %v1425 = vsel %vm404, %v1423, 0
  %1427 = vmatprep.subr.bf16.mxu0 0
  %1428 = vmatpush1.bf16.msra.mxu0 %v552
  %1429 = vmatprep.subr.bf16.mxu0 0
  %1430 = vmatpush1.bf16.msra.mxu0 %v553
  %1431 = vmatprep.subr.bf16.mxu0 0
  %1432 = vmatpush1.bf16.msra.mxu0 0
  %1433 = vmatprep.subr.bf16.mxu0 0
  %1434 = vmatpush1.bf16.msra.mxu0 0
  %1435 = vmatprep.subr.bf16.mxu0 0
  %1436 = vmatpush1.bf16.msra.mxu0 0
  %1437 = vmatprep.subr.bf16.mxu0 0
  %1438 = vmatpush1.bf16.msra.mxu0 0
  %1439 = vmatprep.subr.bf16.mxu0 0
  %1440 = vmatpush1.bf16.msra.mxu0 0
  %1441 = vmatprep.subr.bf16.mxu0 0
  %1442 = vmatpush1.bf16.msra.mxu0 0
  %1443 = vmatprep.subr.bf16.mxu0 0
  %1444 = vmatpush1.bf16.msra.mxu0 0
  %1445 = vmatprep.subr.bf16.mxu0 0
  %1446 = vmatpush1.bf16.msra.mxu0 0
  %1447 = vmatprep.subr.bf16.mxu0 0
  %1448 = vmatpush1.bf16.msra.mxu0 0
  %1449 = vmatprep.subr.bf16.mxu0 0
  %1450 = vmatpush1.bf16.msra.mxu0 0
  %1451 = vmatprep.subr.bf16.mxu0 0
  %1452 = vmatpush1.bf16.msra.mxu0 0
  %1453 = vmatprep.subr.bf16.mxu0 0
  %1454 = vmatpush1.bf16.msra.mxu0 0
  %1455 = vmatprep.subr.bf16.mxu0 0
  %1456 = vmatpush1.bf16.msra.mxu0 0
  %1457 = vmatprep.subr.bf16.mxu0 0
  %1458 = vmatpush1.bf16.msra.mxu0 0
  %1459 = vmatprep.mubr.bf16.mxu0 0
  %1460 = vmatmul.mubr.bf16.gmra.mrb[0].mxu0 %v1425
  %v1461 = vpop.f32.mrb[0].mxu0
  %v1462 = vadd.f32 0.0, %v1461
  %v1463 = vpop.f32.mrb[0].mxu0
  %v1464 = vpop.f32.mrb[0].mxu0
  %v1465 = vadd.f32 0.0, %v1464
  %v1466 = vpop.f32.mrb[0].mxu0
  %1467 = vdwg.mxu0
  %v1468 = vadd.f32 %v1418, %v1462
  %v1469 = vadd.f32 %v1419, %v1465
  %v1470 = vxor.u32 %v1468, 2147483648
  %v1471 = vxor.u32 %v1469, 2147483648
  %v1472 = vmul.f32 %v1470, 1.442695
  %v1473 = vpow.pop %v1472
  %v1474 = vmul.f32 %v1471, 1.442695
  %v1475 = vpow.pop %v1474
  %v1476 = vadd.f32 %v1473, 1.0
  %v1477 = vadd.f32 %v1475, 1.0
  %v1478 = vrcp.pop %v1476
  %v1479 = vmul.f32 1.0, %v1478
  %v1480 = vrcp.pop %v1477
  %v1481 = vmul.f32 1.0, %v1480
  %v1482 = vtanh.pop %v1468
  %v1483 = vtanh.pop %v1469
  %v1484 = vmul.f32 %v1479, %v1255
  %v1485 = vmul.f32 %v1481, %v1256
  %1488 = vrot.lane.b32.xlu0 %v1482, 32
  %v1489 = vpop.permute.xlu0 %1488
  %1490 = vrot.lane.b32.xlu0 %v1483, 32
  %v1491 = vpop.permute.xlu0 %1490
  %v1494 = vmul.f32 %v1479, %v1489
  %v1495 = vmul.f32 %v1481, %v1491
  %1498 = vrot.lane.b32.xlu0 %v1494, 32
  %v1499 = vpop.permute.xlu0 %1498
  %1500 = vrot.lane.b32.xlu0 %v1495, 32
  %v1501 = vpop.permute.xlu0 %1500
  %v1504 = vadd.f32 %v1484, %v1499
  %v1505 = vadd.f32 %v1485, %v1501
  %v1506 = vtanh.pop %v1504
  %v1507 = vtanh.pop %v1505
  %1510 = vrot.lane.b32.xlu0 %v1506, 32
  %v1511 = vpop.permute.xlu0 %1510
  %1512 = vrot.lane.b32.xlu0 %v1507, 32
  %v1513 = vpop.permute.xlu0 %1512
  %v1516 = vmul.f32 %v1479, %v1511
  %v1517 = vmul.f32 %v1481, %v1513
  %1518 = vmatprep.subr.bf16.mxu0 0
  %1519 = vmatpush1.bf16.msra.mxu0 %v762
  %1520 = vmatprep.subr.bf16.mxu0 0
  %1521 = vmatpush1.bf16.msra.mxu0 %v763
  %1522 = vmatprep.subr.bf16.mxu0 0
  %1523 = vmatpush1.bf16.msra.mxu0 0
  %1524 = vmatprep.subr.bf16.mxu0 0
  %1525 = vmatpush1.bf16.msra.mxu0 0
  %1526 = vmatprep.subr.bf16.mxu0 0
  %1527 = vmatpush1.bf16.msra.mxu0 0
  %1528 = vmatprep.subr.bf16.mxu0 0
  %1529 = vmatpush1.bf16.msra.mxu0 0
  %1530 = vmatprep.subr.bf16.mxu0 0
  %1531 = vmatpush1.bf16.msra.mxu0 0
  %1532 = vmatprep.subr.bf16.mxu0 0
  %1533 = vmatpush1.bf16.msra.mxu0 0
  %1534 = vmatprep.subr.bf16.mxu0 0
  %1535 = vmatpush1.bf16.msra.mxu0 0
  %1536 = vmatprep.subr.bf16.mxu0 0
  %1537 = vmatpush1.bf16.msra.mxu0 0
  %1538 = vmatprep.subr.bf16.mxu0 0
  %1539 = vmatpush1.bf16.msra.mxu0 0
  %1540 = vmatprep.subr.bf16.mxu0 0
  %1541 = vmatpush1.bf16.msra.mxu0 0
  %1542 = vmatprep.subr.bf16.mxu0 0
  %1543 = vmatpush1.bf16.msra.mxu0 0
  %1544 = vmatprep.subr.bf16.mxu0 0
  %1545 = vmatpush1.bf16.msra.mxu0 0
  %1546 = vmatprep.subr.bf16.mxu0 0
  %1547 = vmatpush1.bf16.msra.mxu0 0
  %1548 = vmatprep.subr.bf16.mxu0 0
  %1549 = vmatpush1.bf16.msra.mxu0 0
  %1550 = vmatprep.mubr.bf16.mxu0 0
  %1551 = vmatmul.mubr.bf16.gmra.mrb[0].mxu0 %v1425
  %v1552 = vpop.f32.mrb[0].mxu0
  %v1553 = vadd.f32 %v753, %v1552
  %v1554 = vpop.f32.mrb[0].mxu0
  %v1555 = vpop.f32.mrb[0].mxu0
  %v1556 = vadd.f32 %v753, %v1555
  %v1557 = vpop.f32.mrb[0].mxu0
  %1558 = vdwg.mxu0
  %v1559 = vpack.c.bf16 %v1407, %v1406
  %1561 = vrot.lane.b32.xlu0 %v1559, 64
  %v1562 = vpop.permute.xlu0 %1561
  %v1564 = vsel %vm404, %v1562, 0
  %1566 = vmatprep.subr.bf16.mxu0 0
  %1567 = vmatpush1.bf16.msra.mxu0 %v815
  %1568 = vmatprep.subr.bf16.mxu0 0
  %1569 = vmatpush1.bf16.msra.mxu0 %v816
  %1570 = vmatprep.subr.bf16.mxu0 0
  %1571 = vmatpush1.bf16.msra.mxu0 0
  %1572 = vmatprep.subr.bf16.mxu0 0
  %1573 = vmatpush1.bf16.msra.mxu0 0
  %1574 = vmatprep.subr.bf16.mxu0 0
  %1575 = vmatpush1.bf16.msra.mxu0 0
  %1576 = vmatprep.subr.bf16.mxu0 0
  %1577 = vmatpush1.bf16.msra.mxu0 0
  %1578 = vmatprep.subr.bf16.mxu0 0
  %1579 = vmatpush1.bf16.msra.mxu0 0
  %1580 = vmatprep.subr.bf16.mxu0 0
  %1581 = vmatpush1.bf16.msra.mxu0 0
  %1582 = vmatprep.subr.bf16.mxu0 0
  %1583 = vmatpush1.bf16.msra.mxu0 0
  %1584 = vmatprep.subr.bf16.mxu0 0
  %1585 = vmatpush1.bf16.msra.mxu0 0
  %1586 = vmatprep.subr.bf16.mxu0 0
  %1587 = vmatpush1.bf16.msra.mxu0 0
  %1588 = vmatprep.subr.bf16.mxu0 0
  %1589 = vmatpush1.bf16.msra.mxu0 0
  %1590 = vmatprep.subr.bf16.mxu0 0
  %1591 = vmatpush1.bf16.msra.mxu0 0
  %1592 = vmatprep.subr.bf16.mxu0 0
  %1593 = vmatpush1.bf16.msra.mxu0 0
  %1594 = vmatprep.subr.bf16.mxu0 0
  %1595 = vmatpush1.bf16.msra.mxu0 0
  %1596 = vmatprep.subr.bf16.mxu0 0
  %1597 = vmatpush1.bf16.msra.mxu0 0
  %1598 = vmatprep.mubr.bf16.mxu0 0
  %1599 = vmatmul.mubr.bf16.gmra.mrb[0].mxu0 %v1564
  %v1600 = vpop.f32.mrb[0].mxu0
  %v1601 = vadd.f32 0.0, %v1600
  %v1602 = vpop.f32.mrb[0].mxu0
  %v1603 = vpop.f32.mrb[0].mxu0
  %v1604 = vadd.f32 0.0, %v1603
  %v1605 = vpop.f32.mrb[0].mxu0
  %1606 = vdwg.mxu0
  %v1607 = vadd.f32 %v1553, %v1601
  %v1608 = vadd.f32 %v1556, %v1604
  %v1609 = vxor.u32 %v1607, 2147483648
  %v1610 = vxor.u32 %v1608, 2147483648
  %v1611 = vmul.f32 %v1609, 1.442695
  %v1612 = vpow.pop %v1611
  %v1613 = vmul.f32 %v1610, 1.442695
  %v1614 = vpow.pop %v1613
  %v1615 = vadd.f32 %v1612, 1.0
  %v1616 = vadd.f32 %v1614, 1.0
  %v1617 = vrcp.pop %v1615
  %v1618 = vmul.f32 1.0, %v1617
  %v1619 = vrcp.pop %v1616
  %v1620 = vmul.f32 1.0, %v1619
  %v1621 = vtanh.pop %v1607
  %v1622 = vtanh.pop %v1608
  %v1623 = vmul.f32 %v1618, %v1394
  %v1624 = vmul.f32 %v1620, %v1395
  %1627 = vrot.lane.b32.xlu0 %v1621, 32
  %v1628 = vpop.permute.xlu0 %1627
  %1629 = vrot.lane.b32.xlu0 %v1622, 32
  %v1630 = vpop.permute.xlu0 %1629
  %v1633 = vmul.f32 %v1618, %v1628
  %v1634 = vmul.f32 %v1620, %v1630
  %1637 = vrot.lane.b32.xlu0 %v1633, 32
  %v1638 = vpop.permute.xlu0 %1637
  %1639 = vrot.lane.b32.xlu0 %v1634, 32
  %v1640 = vpop.permute.xlu0 %1639
  %v1643 = vadd.f32 %v1623, %v1638
  %v1644 = vadd.f32 %v1624, %v1640
  %v1645 = vtanh.pop %v1643
  %v1646 = vtanh.pop %v1644
  %1649 = vrot.lane.b32.xlu0 %v1645, 32
  %v1650 = vpop.permute.xlu0 %1649
  %1651 = vrot.lane.b32.xlu0 %v1646, 32
  %v1652 = vpop.permute.xlu0 %1651
  %v1655 = vmul.f32 %v1618, %v1650
  %v1656 = vmul.f32 %v1620, %v1652
  %1659 = vrot.lane.b32.xlu0 %v1655, 64
  %v1660 = vpop.permute.xlu0 %1659
  %1661 = vrot.lane.b32.xlu0 %v1656, 64
  %v1662 = vpop.permute.xlu0 %1661
  %1665 = vst.msk [vmem:[#allocation3 + $0x30] sm:$0xff] %vm404, %v1660
  %1666 = vst.msk [vmem:[#allocation3 + $0x38] sm:$0xff] %vm404, %v1662
  %v1667 = vld [vmem:[#allocation2 + $0x50] sm:$0xff]
  %v1668 = vld [vmem:[#allocation2 + $0x58] sm:$0xff]
  %v1669 = vpack.c.bf16 %v1517, %v1516
  %1671 = vrot.lane.b32.xlu0 %v1669, 64
  %v1672 = vpop.permute.xlu0 %1671
  %v1674 = vsel %vm404, %v1672, 0
  %1676 = vmatprep.subr.bf16.mxu0 0
  %1677 = vmatpush1.bf16.msra.mxu0 %v552
  %1678 = vmatprep.subr.bf16.mxu0 0
  %1679 = vmatpush1.bf16.msra.mxu0 %v553
  %1680 = vmatprep.subr.bf16.mxu0 0
  %1681 = vmatpush1.bf16.msra.mxu0 0
  %1682 = vmatprep.subr.bf16.mxu0 0
  %1683 = vmatpush1.bf16.msra.mxu0 0
  %1684 = vmatprep.subr.bf16.mxu0 0
  %1685 = vmatpush1.bf16.msra.mxu0 0
  %1686 = vmatprep.subr.bf16.mxu0 0
  %1687 = vmatpush1.bf16.msra.mxu0 0
  %1688 = vmatprep.subr.bf16.mxu0 0
  %1689 = vmatpush1.bf16.msra.mxu0 0
  %1690 = vmatprep.subr.bf16.mxu0 0
  %1691 = vmatpush1.bf16.msra.mxu0 0
  %1692 = vmatprep.subr.bf16.mxu0 0
  %1693 = vmatpush1.bf16.msra.mxu0 0
  %1694 = vmatprep.subr.bf16.mxu0 0
  %1695 = vmatpush1.bf16.msra.mxu0 0
  %1696 = vmatprep.subr.bf16.mxu0 0
  %1697 = vmatpush1.bf16.msra.mxu0 0
  %1698 = vmatprep.subr.bf16.mxu0 0
  %1699 = vmatpush1.bf16.msra.mxu0 0
  %1700 = vmatprep.subr.bf16.mxu0 0
  %1701 = vmatpush1.bf16.msra.mxu0 0
  %1702 = vmatprep.subr.bf16.mxu0 0
  %1703 = vmatpush1.bf16.msra.mxu0 0
  %1704 = vmatprep.subr.bf16.mxu0 0
  %1705 = vmatpush1.bf16.msra.mxu0 0
  %1706 = vmatprep.subr.bf16.mxu0 0
  %1707 = vmatpush1.bf16.msra.mxu0 0
  %1708 = vmatprep.mubr.bf16.mxu0 0
  %1709 = vmatmul.mubr.bf16.gmra.mrb[0].mxu0 %v1674
  %v1710 = vpop.f32.mrb[0].mxu0
  %v1711 = vadd.f32 0.0, %v1710
  %v1712 = vpop.f32.mrb[0].mxu0
  %v1713 = vpop.f32.mrb[0].mxu0
  %v1714 = vadd.f32 0.0, %v1713
  %v1715 = vpop.f32.mrb[0].mxu0
  %1716 = vdwg.mxu0
  %v1717 = vadd.f32 %v1667, %v1711
  %v1718 = vadd.f32 %v1668, %v1714
  %v1719 = vxor.u32 %v1717, 2147483648
  %v1720 = vxor.u32 %v1718, 2147483648
  %v1721 = vmul.f32 %v1719, 1.442695
  %v1722 = vpow.pop %v1721
  %v1723 = vmul.f32 %v1720, 1.442695
  %v1724 = vpow.pop %v1723
  %v1725 = vadd.f32 %v1722, 1.0
  %v1726 = vadd.f32 %v1724, 1.0
  %v1727 = vrcp.pop %v1725
  %v1728 = vmul.f32 1.0, %v1727
  %v1729 = vrcp.pop %v1726
  %v1730 = vmul.f32 1.0, %v1729
  %v1731 = vtanh.pop %v1717
  %v1732 = vtanh.pop %v1718
  %v1733 = vmul.f32 %v1728, %v1504
  %v1734 = vmul.f32 %v1730, %v1505
  %1737 = vrot.lane.b32.xlu0 %v1731, 32
  %v1738 = vpop.permute.xlu0 %1737
  %1739 = vrot.lane.b32.xlu0 %v1732, 32
  %v1740 = vpop.permute.xlu0 %1739
  %v1743 = vmul.f32 %v1728, %v1738
  %v1744 = vmul.f32 %v1730, %v1740
  %1747 = vrot.lane.b32.xlu0 %v1743, 32
  %v1748 = vpop.permute.xlu0 %1747
  %1749 = vrot.lane.b32.xlu0 %v1744, 32
  %v1750 = vpop.permute.xlu0 %1749
  %v1753 = vadd.f32 %v1733, %v1748
  %v1754 = vadd.f32 %v1734, %v1750
  %v1755 = vtanh.pop %v1753
  %v1756 = vtanh.pop %v1754
  %1759 = vrot.lane.b32.xlu0 %v1755, 32
  %v1760 = vpop.permute.xlu0 %1759
  %1761 = vrot.lane.b32.xlu0 %v1756, 32
  %v1762 = vpop.permute.xlu0 %1761
  %v1765 = vmul.f32 %v1728, %v1760
  %v1766 = vmul.f32 %v1730, %v1762
  %1767 = vmatprep.subr.bf16.mxu0 0
  %1768 = vmatpush1.bf16.msra.mxu0 %v762
  %1769 = vmatprep.subr.bf16.mxu0 0
  %1770 = vmatpush1.bf16.msra.mxu0 %v763
  %1771 = vmatprep.subr.bf16.mxu0 0
  %1772 = vmatpush1.bf16.msra.mxu0 0
  %1773 = vmatprep.subr.bf16.mxu0 0
  %1774 = vmatpush1.bf16.msra.mxu0 0
  %1775 = vmatprep.subr.bf16.mxu0 0
  %1776 = vmatpush1.bf16.msra.mxu0 0
  %1777 = vmatprep.subr.bf16.mxu0 0
  %1778 = vmatpush1.bf16.msra.mxu0 0
  %1779 = vmatprep.subr.bf16.mxu0 0
  %1780 = vmatpush1.bf16.msra.mxu0 0
  %1781 = vmatprep.subr.bf16.mxu0 0
  %1782 = vmatpush1.bf16.msra.mxu0 0
  %1783 = vmatprep.subr.bf16.mxu0 0
  %1784 = vmatpush1.bf16.msra.mxu0 0
  %1785 = vmatprep.subr.bf16.mxu0 0
  %1786 = vmatpush1.bf16.msra.mxu0 0
  %1787 = vmatprep.subr.bf16.mxu0 0
  %1788 = vmatpush1.bf16.msra.mxu0 0
  %1789 = vmatprep.subr.bf16.mxu0 0
  %1790 = vmatpush1.bf16.msra.mxu0 0
  %1791 = vmatprep.subr.bf16.mxu0 0
  %1792 = vmatpush1.bf16.msra.mxu0 0
  %1793 = vmatprep.subr.bf16.mxu0 0
  %1794 = vmatpush1.bf16.msra.mxu0 0
  %1795 = vmatprep.subr.bf16.mxu0 0
  %1796 = vmatpush1.bf16.msra.mxu0 0
  %1797 = vmatprep.subr.bf16.mxu0 0
  %1798 = vmatpush1.bf16.msra.mxu0 0
  %1799 = vmatprep.mubr.bf16.mxu0 0
  %1800 = vmatmul.mubr.bf16.gmra.mrb[0].mxu0 %v1674
  %v1801 = vpop.f32.mrb[0].mxu0
  %v1802 = vadd.f32 %v753, %v1801
  %v1803 = vpop.f32.mrb[0].mxu0
  %v1804 = vpop.f32.mrb[0].mxu0
  %v1805 = vadd.f32 %v753, %v1804
  %v1806 = vpop.f32.mrb[0].mxu0
  %1807 = vdwg.mxu0
  %v1808 = vpack.c.bf16 %v1656, %v1655
  %1810 = vrot.lane.b32.xlu0 %v1808, 64
  %v1811 = vpop.permute.xlu0 %1810
  %v1813 = vsel %vm404, %v1811, 0
  %1815 = vmatprep.subr.bf16.mxu0 0
  %1816 = vmatpush1.bf16.msra.mxu0 %v815
  %1817 = vmatprep.subr.bf16.mxu0 0
  %1818 = vmatpush1.bf16.msra.mxu0 %v816
  %1819 = vmatprep.subr.bf16.mxu0 0
  %1820 = vmatpush1.bf16.msra.mxu0 0
  %1821 = vmatprep.subr.bf16.mxu0 0
  %1822 = vmatpush1.bf16.msra.mxu0 0
  %1823 = vmatprep.subr.bf16.mxu0 0
  %1824 = vmatpush1.bf16.msra.mxu0 0
  %1825 = vmatprep.subr.bf16.mxu0 0
  %1826 = vmatpush1.bf16.msra.mxu0 0
  %1827 = vmatprep.subr.bf16.mxu0 0
  %1828 = vmatpush1.bf16.msra.mxu0 0
  %1829 = vmatprep.subr.bf16.mxu0 0
  %1830 = vmatpush1.bf16.msra.mxu0 0
  %1831 = vmatprep.subr.bf16.mxu0 0
  %1832 = vmatpush1.bf16.msra.mxu0 0
  %1833 = vmatprep.subr.bf16.mxu0 0
  %1834 = vmatpush1.bf16.msra.mxu0 0
  %1835 = vmatprep.subr.bf16.mxu0 0
  %1836 = vmatpush1.bf16.msra.mxu0 0
  %1837 = vmatprep.subr.bf16.mxu0 0
  %1838 = vmatpush1.bf16.msra.mxu0 0
  %1839 = vmatprep.subr.bf16.mxu0 0
  %1840 = vmatpush1.bf16.msra.mxu0 0
  %1841 = vmatprep.subr.bf16.mxu0 0
  %1842 = vmatpush1.bf16.msra.mxu0 0
  %1843 = vmatprep.subr.bf16.mxu0 0
  %1844 = vmatpush1.bf16.msra.mxu0 0
  %1845 = vmatprep.subr.bf16.mxu0 0
  %1846 = vmatpush1.bf16.msra.mxu0 0
  %1847 = vmatprep.mubr.bf16.mxu0 0
  %1848 = vmatmul.mubr.bf16.gmra.mrb[0].mxu0 %v1813
  %v1849 = vpop.f32.mrb[0].mxu0
  %v1850 = vadd.f32 0.0, %v1849
  %v1851 = vpop.f32.mrb[0].mxu0
  %v1852 = vpop.f32.mrb[0].mxu0
  %v1853 = vadd.f32 0.0, %v1852
  %v1854 = vpop.f32.mrb[0].mxu0
  %1855 = vdwg.mxu0
  %v1856 = vadd.f32 %v1802, %v1850
  %v1857 = vadd.f32 %v1805, %v1853
  %v1858 = vxor.u32 %v1856, 2147483648
  %v1859 = vxor.u32 %v1857, 2147483648
  %v1860 = vmul.f32 %v1858, 1.442695
  %v1861 = vpow.pop %v1860
  %v1862 = vmul.f32 %v1859, 1.442695
  %v1863 = vpow.pop %v1862
  %v1864 = vadd.f32 %v1861, 1.0
  %v1865 = vadd.f32 %v1863, 1.0
  %v1866 = vrcp.pop %v1864
  %v1867 = vmul.f32 1.0, %v1866
  %v1868 = vrcp.pop %v1865
  %v1869 = vmul.f32 1.0, %v1868
  %v1870 = vtanh.pop %v1856
  %v1871 = vtanh.pop %v1857
  %v1872 = vmul.f32 %v1867, %v1643
  %v1873 = vmul.f32 %v1869, %v1644
  %1876 = vrot.lane.b32.xlu0 %v1870, 32
  %v1877 = vpop.permute.xlu0 %1876
  %1878 = vrot.lane.b32.xlu0 %v1871, 32
  %v1879 = vpop.permute.xlu0 %1878
  %v1882 = vmul.f32 %v1867, %v1877
  %v1883 = vmul.f32 %v1869, %v1879
  %1886 = vrot.lane.b32.xlu0 %v1882, 32
  %v1887 = vpop.permute.xlu0 %1886
  %1888 = vrot.lane.b32.xlu0 %v1883, 32
  %v1889 = vpop.permute.xlu0 %1888
  %v1892 = vadd.f32 %v1872, %v1887
  %v1893 = vadd.f32 %v1873, %v1889
  %v1894 = vtanh.pop %v1892
  %v1895 = vtanh.pop %v1893
  %1898 = vrot.lane.b32.xlu0 %v1894, 32
  %v1899 = vpop.permute.xlu0 %1898
  %1900 = vrot.lane.b32.xlu0 %v1895, 32
  %v1901 = vpop.permute.xlu0 %1900
  %v1904 = vmul.f32 %v1867, %v1899
  %v1905 = vmul.f32 %v1869, %v1901
  %1908 = vrot.lane.b32.xlu0 %v1904, 64
  %v1909 = vpop.permute.xlu0 %1908
  %1910 = vrot.lane.b32.xlu0 %v1905, 64
  %v1911 = vpop.permute.xlu0 %1910
  %1914 = vst.msk [vmem:[#allocation3 + $0x40] sm:$0xff] %vm404, %v1909
  %1915 = vst.msk [vmem:[#allocation3 + $0x48] sm:$0xff] %vm404, %v1911
  %v1916 = vld [vmem:[#allocation2 + $0x60] sm:$0xff]
  %v1917 = vld [vmem:[#allocation2 + $0x68] sm:$0xff]
  %v1918 = vpack.c.bf16 %v1766, %v1765
  %1920 = vrot.lane.b32.xlu0 %v1918, 64
  %v1921 = vpop.permute.xlu0 %1920
  %v1923 = vsel %vm404, %v1921, 0
  %1925 = vmatprep.subr.bf16.mxu0 0
  %1926 = vmatpush1.bf16.msra.mxu0 %v552
  %1927 = vmatprep.subr.bf16.mxu0 0
  %1928 = vmatpush1.bf16.msra.mxu0 %v553
  %1929 = vmatprep.subr.bf16.mxu0 0
  %1930 = vmatpush1.bf16.msra.mxu0 0
  %1931 = vmatprep.subr.bf16.mxu0 0
  %1932 = vmatpush1.bf16.msra.mxu0 0
  %1933 = vmatprep.subr.bf16.mxu0 0
  %1934 = vmatpush1.bf16.msra.mxu0 0
  %1935 = vmatprep.subr.bf16.mxu0 0
  %1936 = vmatpush1.bf16.msra.mxu0 0
  %1937 = vmatprep.subr.bf16.mxu0 0
  %1938 = vmatpush1.bf16.msra.mxu0 0
  %1939 = vmatprep.subr.bf16.mxu0 0
  %1940 = vmatpush1.bf16.msra.mxu0 0
  %1941 = vmatprep.subr.bf16.mxu0 0
  %1942 = vmatpush1.bf16.msra.mxu0 0
  %1943 = vmatprep.subr.bf16.mxu0 0
  %1944 = vmatpush1.bf16.msra.mxu0 0
  %1945 = vmatprep.subr.bf16.mxu0 0
  %1946 = vmatpush1.bf16.msra.mxu0 0
  %1947 = vmatprep.subr.bf16.mxu0 0
  %1948 = vmatpush1.bf16.msra.mxu0 0
  %1949 = vmatprep.subr.bf16.mxu0 0
  %1950 = vmatpush1.bf16.msra.mxu0 0
  %1951 = vmatprep.subr.bf16.mxu0 0
  %1952 = vmatpush1.bf16.msra.mxu0 0
  %1953 = vmatprep.subr.bf16.mxu0 0
  %1954 = vmatpush1.bf16.msra.mxu0 0
  %1955 = vmatprep.subr.bf16.mxu0 0
  %1956 = vmatpush1.bf16.msra.mxu0 0
  %1957 = vmatprep.mubr.bf16.mxu0 0
  %1958 = vmatmul.mubr.bf16.gmra.mrb[0].mxu0 %v1923
  %v1959 = vpop.f32.mrb[0].mxu0
  %v1960 = vadd.f32 0.0, %v1959
  %v1961 = vpop.f32.mrb[0].mxu0
  %v1962 = vpop.f32.mrb[0].mxu0
  %v1963 = vadd.f32 0.0, %v1962
  %v1964 = vpop.f32.mrb[0].mxu0
  %1965 = vdwg.mxu0
  %v1966 = vadd.f32 %v1916, %v1960
  %v1967 = vadd.f32 %v1917, %v1963
  %v1968 = vxor.u32 %v1966, 2147483648
  %v1969 = vxor.u32 %v1967, 2147483648
  %v1970 = vmul.f32 %v1968, 1.442695
  %v1971 = vpow.pop %v1970
  %v1972 = vmul.f32 %v1969, 1.442695
  %v1973 = vpow.pop %v1972
  %v1974 = vadd.f32 %v1971, 1.0
  %v1975 = vadd.f32 %v1973, 1.0
  %v1976 = vrcp.pop %v1974
  %v1977 = vmul.f32 1.0, %v1976
  %v1978 = vrcp.pop %v1975
  %v1979 = vmul.f32 1.0, %v1978
  %v1980 = vtanh.pop %v1966
  %v1981 = vtanh.pop %v1967
  %v1982 = vmul.f32 %v1977, %v1753
  %v1983 = vmul.f32 %v1979, %v1754
  %1986 = vrot.lane.b32.xlu0 %v1980, 32
  %v1987 = vpop.permute.xlu0 %1986
  %1988 = vrot.lane.b32.xlu0 %v1981, 32
  %v1989 = vpop.permute.xlu0 %1988
  %v1992 = vmul.f32 %v1977, %v1987
  %v1993 = vmul.f32 %v1979, %v1989
  %1996 = vrot.lane.b32.xlu0 %v1992, 32
  %v1997 = vpop.permute.xlu0 %1996
  %1998 = vrot.lane.b32.xlu0 %v1993, 32
  %v1999 = vpop.permute.xlu0 %1998
  %v2002 = vadd.f32 %v1982, %v1997
  %v2003 = vadd.f32 %v1983, %v1999
  %v2004 = vtanh.pop %v2002
  %v2005 = vtanh.pop %v2003
  %2008 = vrot.lane.b32.xlu0 %v2004, 32
  %v2009 = vpop.permute.xlu0 %2008
  %2010 = vrot.lane.b32.xlu0 %v2005, 32
  %v2011 = vpop.permute.xlu0 %2010
  %v2014 = vmul.f32 %v1977, %v2009
  %v2015 = vmul.f32 %v1979, %v2011
  %2016 = vmatprep.subr.bf16.mxu0 0
  %2017 = vmatpush1.bf16.msra.mxu0 %v762
  %2018 = vmatprep.subr.bf16.mxu0 0
  %2019 = vmatpush1.bf16.msra.mxu0 %v763
  %2020 = vmatprep.subr.bf16.mxu0 0
  %2021 = vmatpush1.bf16.msra.mxu0 0
  %2022 = vmatprep.subr.bf16.mxu0 0
  %2023 = vmatpush1.bf16.msra.mxu0 0
  %2024 = vmatprep.subr.bf16.mxu0 0
  %2025 = vmatpush1.bf16.msra.mxu0 0
  %2026 = vmatprep.subr.bf16.mxu0 0
  %2027 = vmatpush1.bf16.msra.mxu0 0
  %2028 = vmatprep.subr.bf16.mxu0 0
  %2029 = vmatpush1.bf16.msra.mxu0 0
  %2030 = vmatprep.subr.bf16.mxu0 0
  %2031 = vmatpush1.bf16.msra.mxu0 0
  %2032 = vmatprep.subr.bf16.mxu0 0
  %2033 = vmatpush1.bf16.msra.mxu0 0
  %2034 = vmatprep.subr.bf16.mxu0 0
  %2035 = vmatpush1.bf16.msra.mxu0 0
  %2036 = vmatprep.subr.bf16.mxu0 0
  %2037 = vmatpush1.bf16.msra.mxu0 0
  %2038 = vmatprep.subr.bf16.mxu0 0
  %2039 = vmatpush1.bf16.msra.mxu0 0
  %2040 = vmatprep.subr.bf16.mxu0 0
  %2041 = vmatpush1.bf16.msra.mxu0 0
  %2042 = vmatprep.subr.bf16.mxu0 0
  %2043 = vmatpush1.bf16.msra.mxu0 0
  %2044 = vmatprep.subr.bf16.mxu0 0
  %2045 = vmatpush1.bf16.msra.mxu0 0
  %2046 = vmatprep.subr.bf16.mxu0 0
  %2047 = vmatpush1.bf16.msra.mxu0 0
  %2048 = vmatprep.mubr.bf16.mxu0 0
  %2049 = vmatmul.mubr.bf16.gmra.mrb[0].mxu0 %v1923
  %v2050 = vpop.f32.mrb[0].mxu0
  %v2051 = vadd.f32 %v753, %v2050
  %v2052 = vpop.f32.mrb[0].mxu0
  %v2053 = vpop.f32.mrb[0].mxu0
  %v2054 = vadd.f32 %v753, %v2053
  %v2055 = vpop.f32.mrb[0].mxu0
  %2056 = vdwg.mxu0
  %v2057 = vpack.c.bf16 %v1905, %v1904
  %2059 = vrot.lane.b32.xlu0 %v2057, 64
  %v2060 = vpop.permute.xlu0 %2059
  %v2062 = vsel %vm404, %v2060, 0
  %2064 = vmatprep.subr.bf16.mxu0 0
  %2065 = vmatpush1.bf16.msra.mxu0 %v815
  %2066 = vmatprep.subr.bf16.mxu0 0
  %2067 = vmatpush1.bf16.msra.mxu0 %v816
  %2068 = vmatprep.subr.bf16.mxu0 0
  %2069 = vmatpush1.bf16.msra.mxu0 0
  %2070 = vmatprep.subr.bf16.mxu0 0
  %2071 = vmatpush1.bf16.msra.mxu0 0
  %2072 = vmatprep.subr.bf16.mxu0 0
  %2073 = vmatpush1.bf16.msra.mxu0 0
  %2074 = vmatprep.subr.bf16.mxu0 0
  %2075 = vmatpush1.bf16.msra.mxu0 0
  %2076 = vmatprep.subr.bf16.mxu0 0
  %2077 = vmatpush1.bf16.msra.mxu0 0
  %2078 = vmatprep.subr.bf16.mxu0 0
  %2079 = vmatpush1.bf16.msra.mxu0 0
  %2080 = vmatprep.subr.bf16.mxu0 0
  %2081 = vmatpush1.bf16.msra.mxu0 0
  %2082 = vmatprep.subr.bf16.mxu0 0
  %2083 = vmatpush1.bf16.msra.mxu0 0
  %2084 = vmatprep.subr.bf16.mxu0 0
  %2085 = vmatpush1.bf16.msra.mxu0 0
  %2086 = vmatprep.subr.bf16.mxu0 0
  %2087 = vmatpush1.bf16.msra.mxu0 0
  %2088 = vmatprep.subr.bf16.mxu0 0
  %2089 = vmatpush1.bf16.msra.mxu0 0
  %2090 = vmatprep.subr.bf16.mxu0 0
  %2091 = vmatpush1.bf16.msra.mxu0 0
  %2092 = vmatprep.subr.bf16.mxu0 0
  %2093 = vmatpush1.bf16.msra.mxu0 0
  %2094 = vmatprep.subr.bf16.mxu0 0
  %2095 = vmatpush1.bf16.msra.mxu0 0
  %2096 = vmatprep.mubr.bf16.mxu0 0
  %2097 = vmatmul.mubr.bf16.gmra.mrb[0].mxu0 %v2062
  %v2098 = vpop.f32.mrb[0].mxu0
  %v2099 = vadd.f32 0.0, %v2098
  %v2100 = vpop.f32.mrb[0].mxu0
  %v2101 = vpop.f32.mrb[0].mxu0
  %v2102 = vadd.f32 0.0, %v2101
  %v2103 = vpop.f32.mrb[0].mxu0
  %2104 = vdwg.mxu0
  %v2105 = vadd.f32 %v2051, %v2099
  %v2106 = vadd.f32 %v2054, %v2102
  %v2107 = vxor.u32 %v2105, 2147483648
  %v2108 = vxor.u32 %v2106, 2147483648
  %v2109 = vmul.f32 %v2107, 1.442695
  %v2110 = vpow.pop %v2109
  %v2111 = vmul.f32 %v2108, 1.442695
  %v2112 = vpow.pop %v2111
  %v2113 = vadd.f32 %v2110, 1.0
  %v2114 = vadd.f32 %v2112, 1.0
  %v2115 = vrcp.pop %v2113
  %v2116 = vmul.f32 1.0, %v2115
  %v2117 = vrcp.pop %v2114
  %v2118 = vmul.f32 1.0, %v2117
  %v2119 = vtanh.pop %v2105
  %v2120 = vtanh.pop %v2106
  %v2121 = vmul.f32 %v2116, %v1892
  %v2122 = vmul.f32 %v2118, %v1893
  %2125 = vrot.lane.b32.xlu0 %v2119, 32
  %v2126 = vpop.permute.xlu0 %2125
  %2127 = vrot.lane.b32.xlu0 %v2120, 32
  %v2128 = vpop.permute.xlu0 %2127
  %v2131 = vmul.f32 %v2116, %v2126
  %v2132 = vmul.f32 %v2118, %v2128
  %2135 = vrot.lane.b32.xlu0 %v2131, 32
  %v2136 = vpop.permute.xlu0 %2135
  %2137 = vrot.lane.b32.xlu0 %v2132, 32
  %v2138 = vpop.permute.xlu0 %2137
  %v2141 = vadd.f32 %v2121, %v2136
  %v2142 = vadd.f32 %v2122, %v2138
  %v2143 = vtanh.pop %v2141
  %v2144 = vtanh.pop %v2142
  %2147 = vrot.lane.b32.xlu0 %v2143, 32
  %v2148 = vpop.permute.xlu0 %2147
  %2149 = vrot.lane.b32.xlu0 %v2144, 32
  %v2150 = vpop.permute.xlu0 %2149
  %v2153 = vmul.f32 %v2116, %v2148
  %v2154 = vmul.f32 %v2118, %v2150
  %2157 = vrot.lane.b32.xlu0 %v2153, 64
  %v2158 = vpop.permute.xlu0 %2157
  %2159 = vrot.lane.b32.xlu0 %v2154, 64
  %v2160 = vpop.permute.xlu0 %2159
  %2163 = vst.msk [vmem:[#allocation3 + $0x50] sm:$0xff] %vm404, %v2158
  %2164 = vst.msk [vmem:[#allocation3 + $0x58] sm:$0xff] %vm404, %v2160
  %v2165 = vld [vmem:[#allocation2 + $0x70] sm:$0xff]
  %v2166 = vld [vmem:[#allocation2 + $0x78] sm:$0xff]
  %v2167 = vpack.c.bf16 %v2015, %v2014
  %2169 = vrot.lane.b32.xlu0 %v2167, 64
  %v2170 = vpop.permute.xlu0 %2169
  %v2172 = vsel %vm404, %v2170, 0
  %2174 = vmatprep.subr.bf16.mxu0 0
  %2175 = vmatpush1.bf16.msra.mxu0 %v552
  %2176 = vmatprep.subr.bf16.mxu0 0
  %2177 = vmatpush1.bf16.msra.mxu0 %v553
  %2178 = vmatprep.subr.bf16.mxu0 0
  %2179 = vmatpush1.bf16.msra.mxu0 0
  %2180 = vmatprep.subr.bf16.mxu0 0
  %2181 = vmatpush1.bf16.msra.mxu0 0
  %2182 = vmatprep.subr.bf16.mxu0 0
  %2183 = vmatpush1.bf16.msra.mxu0 0
  %2184 = vmatprep.subr.bf16.mxu0 0
  %2185 = vmatpush1.bf16.msra.mxu0 0
  %2186 = vmatprep.subr.bf16.mxu0 0
  %2187 = vmatpush1.bf16.msra.mxu0 0
  %2188 = vmatprep.subr.bf16.mxu0 0
  %2189 = vmatpush1.bf16.msra.mxu0 0
  %2190 = vmatprep.subr.bf16.mxu0 0
  %2191 = vmatpush1.bf16.msra.mxu0 0
  %2192 = vmatprep.subr.bf16.mxu0 0
  %2193 = vmatpush1.bf16.msra.mxu0 0
  %2194 = vmatprep.subr.bf16.mxu0 0
  %2195 = vmatpush1.bf16.msra.mxu0 0
  %2196 = vmatprep.subr.bf16.mxu0 0
  %2197 = vmatpush1.bf16.msra.mxu0 0
  %2198 = vmatprep.subr.bf16.mxu0 0
  %2199 = vmatpush1.bf16.msra.mxu0 0
  %2200 = vmatprep.subr.bf16.mxu0 0
  %2201 = vmatpush1.bf16.msra.mxu0 0
  %2202 = vmatprep.subr.bf16.mxu0 0
  %2203 = vmatpush1.bf16.msra.mxu0 0
  %2204 = vmatprep.subr.bf16.mxu0 0
  %2205 = vmatpush1.bf16.msra.mxu0 0
  %2206 = vmatprep.mubr.bf16.mxu0 0
  %2207 = vmatmul.mubr.bf16.gmra.mrb[0].mxu0 %v2172
  %v2208 = vpop.f32.mrb[0].mxu0
  %v2209 = vadd.f32 0.0, %v2208
  %v2210 = vpop.f32.mrb[0].mxu0
  %v2211 = vpop.f32.mrb[0].mxu0
  %v2212 = vadd.f32 0.0, %v2211
  %v2213 = vpop.f32.mrb[0].mxu0
  %2214 = vdwg.mxu0
  %v2215 = vadd.f32 %v2165, %v2209
  %v2216 = vadd.f32 %v2166, %v2212
  %v2217 = vxor.u32 %v2215, 2147483648
  %v2218 = vxor.u32 %v2216, 2147483648
  %v2219 = vmul.f32 %v2217, 1.442695
  %v2220 = vpow.pop %v2219
  %v2221 = vmul.f32 %v2218, 1.442695
  %v2222 = vpow.pop %v2221
  %v2223 = vadd.f32 %v2220, 1.0
  %v2224 = vadd.f32 %v2222, 1.0
  %v2225 = vrcp.pop %v2223
  %v2226 = vmul.f32 1.0, %v2225
  %v2227 = vrcp.pop %v2224
  %v2228 = vmul.f32 1.0, %v2227
  %v2229 = vtanh.pop %v2215
  %v2230 = vtanh.pop %v2216
  %v2231 = vmul.f32 %v2226, %v2002
  %v2232 = vmul.f32 %v2228, %v2003
  %2235 = vrot.lane.b32.xlu0 %v2229, 32
  %v2236 = vpop.permute.xlu0 %2235
  %2237 = vrot.lane.b32.xlu0 %v2230, 32
  %v2238 = vpop.permute.xlu0 %2237
  %v2241 = vmul.f32 %v2226, %v2236
  %v2242 = vmul.f32 %v2228, %v2238
  %2245 = vrot.lane.b32.xlu0 %v2241, 32
  %v2246 = vpop.permute.xlu0 %2245
  %2247 = vrot.lane.b32.xlu0 %v2242, 32
  %v2248 = vpop.permute.xlu0 %2247
  %v2251 = vadd.f32 %v2231, %v2246
  %v2252 = vadd.f32 %v2232, %v2248
  %v2253 = vtanh.pop %v2251
  %v2254 = vtanh.pop %v2252
  %2257 = vrot.lane.b32.xlu0 %v2253, 32
  %v2258 = vpop.permute.xlu0 %2257
  %2259 = vrot.lane.b32.xlu0 %v2254, 32
  %v2260 = vpop.permute.xlu0 %2259
  %v2263 = vmul.f32 %v2226, %v2258
  %v2264 = vmul.f32 %v2228, %v2260
  %2265 = vmatprep.subr.bf16.mxu0 0
  %2266 = vmatpush1.bf16.msra.mxu0 %v762
  %2267 = vmatprep.subr.bf16.mxu0 0
  %2268 = vmatpush1.bf16.msra.mxu0 %v763
  %2269 = vmatprep.subr.bf16.mxu0 0
  %2270 = vmatpush1.bf16.msra.mxu0 0
  %2271 = vmatprep.subr.bf16.mxu0 0
  %2272 = vmatpush1.bf16.msra.mxu0 0
  %2273 = vmatprep.subr.bf16.mxu0 0
  %2274 = vmatpush1.bf16.msra.mxu0 0
  %2275 = vmatprep.subr.bf16.mxu0 0
  %2276 = vmatpush1.bf16.msra.mxu0 0
  %2277 = vmatprep.subr.bf16.mxu0 0
  %2278 = vmatpush1.bf16.msra.mxu0 0
  %2279 = vmatprep.subr.bf16.mxu0 0
  %2280 = vmatpush1.bf16.msra.mxu0 0
  %2281 = vmatprep.subr.bf16.mxu0 0
  %2282 = vmatpush1.bf16.msra.mxu0 0
  %2283 = vmatprep.subr.bf16.mxu0 0
  %2284 = vmatpush1.bf16.msra.mxu0 0
  %2285 = vmatprep.subr.bf16.mxu0 0
  %2286 = vmatpush1.bf16.msra.mxu0 0
  %2287 = vmatprep.subr.bf16.mxu0 0
  %2288 = vmatpush1.bf16.msra.mxu0 0
  %2289 = vmatprep.subr.bf16.mxu0 0
  %2290 = vmatpush1.bf16.msra.mxu0 0
  %2291 = vmatprep.subr.bf16.mxu0 0
  %2292 = vmatpush1.bf16.msra.mxu0 0
  %2293 = vmatprep.subr.bf16.mxu0 0
  %2294 = vmatpush1.bf16.msra.mxu0 0
  %2295 = vmatprep.subr.bf16.mxu0 0
  %2296 = vmatpush1.bf16.msra.mxu0 0
  %2297 = vmatprep.mubr.bf16.mxu0 0
  %2298 = vmatmul.mubr.bf16.gmra.mrb[0].mxu0 %v2172
  %v2299 = vpop.f32.mrb[0].mxu0
  %v2300 = vadd.f32 %v753, %v2299
  %v2301 = vpop.f32.mrb[0].mxu0
  %v2302 = vpop.f32.mrb[0].mxu0
  %v2303 = vadd.f32 %v753, %v2302
  %v2304 = vpop.f32.mrb[0].mxu0
  %2305 = vdwg.mxu0
  %v2306 = vpack.c.bf16 %v2154, %v2153
  %2308 = vrot.lane.b32.xlu0 %v2306, 64
  %v2309 = vpop.permute.xlu0 %2308
  %v2311 = vsel %vm404, %v2309, 0
  %2313 = vmatprep.subr.bf16.mxu0 0
  %2314 = vmatpush1.bf16.msra.mxu0 %v815
  %2315 = vmatprep.subr.bf16.mxu0 0
  %2316 = vmatpush1.bf16.msra.mxu0 %v816
  %2317 = vmatprep.subr.bf16.mxu0 0
  %2318 = vmatpush1.bf16.msra.mxu0 0
  %2319 = vmatprep.subr.bf16.mxu0 0
  %2320 = vmatpush1.bf16.msra.mxu0 0
  %2321 = vmatprep.subr.bf16.mxu0 0
  %2322 = vmatpush1.bf16.msra.mxu0 0
  %2323 = vmatprep.subr.bf16.mxu0 0
  %2324 = vmatpush1.bf16.msra.mxu0 0
  %2325 = vmatprep.subr.bf16.mxu0 0
  %2326 = vmatpush1.bf16.msra.mxu0 0
  %2327 = vmatprep.subr.bf16.mxu0 0
  %2328 = vmatpush1.bf16.msra.mxu0 0
  %2329 = vmatprep.subr.bf16.mxu0 0
  %2330 = vmatpush1.bf16.msra.mxu0 0
  %2331 = vmatprep.subr.bf16.mxu0 0
  %2332 = vmatpush1.bf16.msra.mxu0 0
  %2333 = vmatprep.subr.bf16.mxu0 0
  %2334 = vmatpush1.bf16.msra.mxu0 0
  %2335 = vmatprep.subr.bf16.mxu0 0
  %2336 = vmatpush1.bf16.msra.mxu0 0
  %2337 = vmatprep.subr.bf16.mxu0 0
  %2338 = vmatpush1.bf16.msra.mxu0 0
  %2339 = vmatprep.subr.bf16.mxu0 0
  %2340 = vmatpush1.bf16.msra.mxu0 0
  %2341 = vmatprep.subr.bf16.mxu0 0
  %2342 = vmatpush1.bf16.msra.mxu0 0
  %2343 = vmatprep.subr.bf16.mxu0 0
  %2344 = vmatpush1.bf16.msra.mxu0 0
  %2345 = vmatprep.mubr.bf16.mxu0 0
  %2346 = vmatmul.mubr.bf16.gmra.mrb[0].mxu0 %v2311
  %v2347 = vpop.f32.mrb[0].mxu0
  %v2348 = vadd.f32 0.0, %v2347
  %v2349 = vpop.f32.mrb[0].mxu0
  %v2350 = vpop.f32.mrb[0].mxu0
  %v2351 = vadd.f32 0.0, %v2350
  %v2352 = vpop.f32.mrb[0].mxu0
  %2353 = vdwg.mxu0
  %v2354 = vadd.f32 %v2300, %v2348
  %v2355 = vadd.f32 %v2303, %v2351
  %v2356 = vxor.u32 %v2354, 2147483648
  %v2357 = vxor.u32 %v2355, 2147483648
  %v2358 = vmul.f32 %v2356, 1.442695
  %v2359 = vpow.pop %v2358
  %v2360 = vmul.f32 %v2357, 1.442695
  %v2361 = vpow.pop %v2360
  %v2362 = vadd.f32 %v2359, 1.0
  %v2363 = vadd.f32 %v2361, 1.0
  %v2364 = vrcp.pop %v2362
  %v2365 = vmul.f32 1.0, %v2364
  %v2366 = vrcp.pop %v2363
  %v2367 = vmul.f32 1.0, %v2366
  %v2368 = vtanh.pop %v2354
  %v2369 = vtanh.pop %v2355
  %v2370 = vmul.f32 %v2365, %v2141
  %v2371 = vmul.f32 %v2367, %v2142
  %2374 = vrot.lane.b32.xlu0 %v2368, 32
  %v2375 = vpop.permute.xlu0 %2374
  %2376 = vrot.lane.b32.xlu0 %v2369, 32
  %v2377 = vpop.permute.xlu0 %2376
  %v2380 = vmul.f32 %v2365, %v2375
  %v2381 = vmul.f32 %v2367, %v2377
  %2384 = vrot.lane.b32.xlu0 %v2380, 32
  %v2385 = vpop.permute.xlu0 %2384
  %2386 = vrot.lane.b32.xlu0 %v2381, 32
  %v2387 = vpop.permute.xlu0 %2386
  %v2390 = vadd.f32 %v2370, %v2385
  %v2391 = vadd.f32 %v2371, %v2387
  %v2392 = vtanh.pop %v2390
  %v2393 = vtanh.pop %v2391
  %2396 = vrot.lane.b32.xlu0 %v2392, 32
  %v2397 = vpop.permute.xlu0 %2396
  %2398 = vrot.lane.b32.xlu0 %v2393, 32
  %v2399 = vpop.permute.xlu0 %2398
  %v2402 = vmul.f32 %v2365, %v2397
  %v2403 = vmul.f32 %v2367, %v2399
  %2406 = vrot.lane.b32.xlu0 %v2402, 64
  %v2407 = vpop.permute.xlu0 %2406
  %2408 = vrot.lane.b32.xlu0 %v2403, 64
  %v2409 = vpop.permute.xlu0 %2408
  %2412 = vst.msk [vmem:[#allocation3 + $0x60] sm:$0xff] %vm404, %v2407
  %2413 = vst.msk [vmem:[#allocation3 + $0x68] sm:$0xff] %vm404, %v2409
  %v2414 = vpack.c.bf16 %v2264, %v2263
  %2416 = vrot.lane.b32.xlu0 %v2414, 64
  %v2417 = vpop.permute.xlu0 %2416
  %v2419 = vsel %vm404, %v2417, 0
  %2421 = vmatprep.subr.bf16.mxu0 0
  %2422 = vmatpush1.bf16.msra.mxu0 %v762
  %2423 = vmatprep.subr.bf16.mxu0 0
  %2424 = vmatpush1.bf16.msra.mxu0 %v763
  %2425 = vmatprep.subr.bf16.mxu0 0
  %2426 = vmatpush1.bf16.msra.mxu0 0
  %2427 = vmatprep.subr.bf16.mxu0 0
  %2428 = vmatpush1.bf16.msra.mxu0 0
  %2429 = vmatprep.subr.bf16.mxu0 0
  %2430 = vmatpush1.bf16.msra.mxu0 0
  %2431 = vmatprep.subr.bf16.mxu0 0
  %2432 = vmatpush1.bf16.msra.mxu0 0
  %2433 = vmatprep.subr.bf16.mxu0 0
  %2434 = vmatpush1.bf16.msra.mxu0 0
  %2435 = vmatprep.subr.bf16.mxu0 0
  %2436 = vmatpush1.bf16.msra.mxu0 0
  %2437 = vmatprep.subr.bf16.mxu0 0
  %2438 = vmatpush1.bf16.msra.mxu0 0
  %2439 = vmatprep.subr.bf16.mxu0 0
  %2440 = vmatpush1.bf16.msra.mxu0 0
  %2441 = vmatprep.subr.bf16.mxu0 0
  %2442 = vmatpush1.bf16.msra.mxu0 0
  %2443 = vmatprep.subr.bf16.mxu0 0
  %2444 = vmatpush1.bf16.msra.mxu0 0
  %2445 = vmatprep.subr.bf16.mxu0 0
  %2446 = vmatpush1.bf16.msra.mxu0 0
  %2447 = vmatprep.subr.bf16.mxu0 0
  %2448 = vmatpush1.bf16.msra.mxu0 0
  %2449 = vmatprep.subr.bf16.mxu0 0
  %2450 = vmatpush1.bf16.msra.mxu0 0
  %2451 = vmatprep.subr.bf16.mxu0 0
  %2452 = vmatpush1.bf16.msra.mxu0 0
  %2453 = vmatprep.mubr.bf16.mxu0 0
  %2454 = vmatmul.mubr.bf16.gmra.mrb[0].mxu0 %v2419
  %v2455 = vpop.f32.mrb[0].mxu0
  %v2456 = vadd.f32 %v753, %v2455
  %v2457 = vpop.f32.mrb[0].mxu0
  %v2458 = vpop.f32.mrb[0].mxu0
  %v2459 = vadd.f32 %v753, %v2458
  %v2460 = vpop.f32.mrb[0].mxu0
  %2461 = vdwg.mxu0
  %v2462 = vpack.c.bf16 %v2403, %v2402
  %2464 = vrot.lane.b32.xlu0 %v2462, 64
  %v2465 = vpop.permute.xlu0 %2464
  %v2467 = vsel %vm404, %v2465, 0
  %2469 = vmatprep.subr.bf16.mxu0 0
  %2470 = vmatpush1.bf16.msra.mxu0 %v815
  %2471 = vmatprep.subr.bf16.mxu0 0
  %2472 = vmatpush1.bf16.msra.mxu0 %v816
  %2473 = vmatprep.subr.bf16.mxu0 0
  %2474 = vmatpush1.bf16.msra.mxu0 0
  %2475 = vmatprep.subr.bf16.mxu0 0
  %2476 = vmatpush1.bf16.msra.mxu0 0
  %2477 = vmatprep.subr.bf16.mxu0 0
  %2478 = vmatpush1.bf16.msra.mxu0 0
  %2479 = vmatprep.subr.bf16.mxu0 0
  %2480 = vmatpush1.bf16.msra.mxu0 0
  %2481 = vmatprep.subr.bf16.mxu0 0
  %2482 = vmatpush1.bf16.msra.mxu0 0
  %2483 = vmatprep.subr.bf16.mxu0 0
  %2484 = vmatpush1.bf16.msra.mxu0 0
  %2485 = vmatprep.subr.bf16.mxu0 0
  %2486 = vmatpush1.bf16.msra.mxu0 0
  %2487 = vmatprep.subr.bf16.mxu0 0
  %2488 = vmatpush1.bf16.msra.mxu0 0
  %2489 = vmatprep.subr.bf16.mxu0 0
  %2490 = vmatpush1.bf16.msra.mxu0 0
  %2491 = vmatprep.subr.bf16.mxu0 0
  %2492 = vmatpush1.bf16.msra.mxu0 0
  %2493 = vmatprep.subr.bf16.mxu0 0
  %2494 = vmatpush1.bf16.msra.mxu0 0
  %2495 = vmatprep.subr.bf16.mxu0 0
  %2496 = vmatpush1.bf16.msra.mxu0 0
  %2497 = vmatprep.subr.bf16.mxu0 0
  %2498 = vmatpush1.bf16.msra.mxu0 0
  %2499 = vmatprep.subr.bf16.mxu0 0
  %2500 = vmatpush1.bf16.msra.mxu0 0
  %2501 = vmatprep.mubr.bf16.mxu0 0
  %2502 = vmatmul.mubr.bf16.gmra.mrb[0].mxu0 %v2467
  %v2503 = vpop.f32.mrb[0].mxu0
  %v2504 = vadd.f32 0.0, %v2503
  %v2505 = vpop.f32.mrb[0].mxu0
  %v2506 = vpop.f32.mrb[0].mxu0
  %v2507 = vadd.f32 0.0, %v2506
  %v2508 = vpop.f32.mrb[0].mxu0
  %2509 = vdwg.mxu0
  %v2510 = vadd.f32 %v2456, %v2504
  %v2511 = vadd.f32 %v2459, %v2507
  %v2512 = vxor.u32 %v2510, 2147483648
  %v2513 = vxor.u32 %v2511, 2147483648
  %v2514 = vmul.f32 %v2512, 1.442695
  %v2515 = vpow.pop %v2514
  %v2516 = vmul.f32 %v2513, 1.442695
  %v2517 = vpow.pop %v2516
  %v2518 = vadd.f32 %v2515, 1.0
  %v2519 = vadd.f32 %v2517, 1.0
  %v2520 = vrcp.pop %v2518
  %v2521 = vmul.f32 1.0, %v2520
  %v2522 = vrcp.pop %v2519
  %v2523 = vmul.f32 1.0, %v2522
  %v2524 = vtanh.pop %v2510
  %v2525 = vtanh.pop %v2511
  %v2526 = vmul.f32 %v2521, %v2390
  %v2527 = vmul.f32 %v2523, %v2391
  %2530 = vrot.lane.b32.xlu0 %v2524, 32
  %v2531 = vpop.permute.xlu0 %2530
  %2532 = vrot.lane.b32.xlu0 %v2525, 32
  %v2533 = vpop.permute.xlu0 %2532
  %v2536 = vmul.f32 %v2521, %v2531
  %v2537 = vmul.f32 %v2523, %v2533
  %2540 = vrot.lane.b32.xlu0 %v2536, 32
  %v2541 = vpop.permute.xlu0 %2540
  %2542 = vrot.lane.b32.xlu0 %v2537, 32
  %v2543 = vpop.permute.xlu0 %2542
  %v2546 = vadd.f32 %v2526, %v2541
  %v2547 = vadd.f32 %v2527, %v2543
  %v2548 = vtanh.pop %v2546
  %v2549 = vtanh.pop %v2547
  %2552 = vrot.lane.b32.xlu0 %v2548, 32
  %v2553 = vpop.permute.xlu0 %2552
  %2554 = vrot.lane.b32.xlu0 %v2549, 32
  %v2555 = vpop.permute.xlu0 %2554
  %v2558 = vmul.f32 %v2521, %v2553
  %v2559 = vmul.f32 %v2523, %v2555
  %2562 = vrot.lane.b32.xlu0 %v2558, 64
  %v2563 = vpop.permute.xlu0 %2562
  %2564 = vrot.lane.b32.xlu0 %v2559, 64
  %v2565 = vpop.permute.xlu0 %2564
  %2568 = vst.msk [vmem:[#allocation3 + $0x70] sm:$0xff] %vm404, %v2563
  %2569 = vst.msk [vmem:[#allocation3 + $0x78] sm:$0xff] %vm404, %v2565
  %v2570 = vld [vmem:[#allocation3] sm:$0xff]
  %v2571 = vld [vmem:[#allocation3 + $0x8] sm:$0xff]
  %v2572 = vld [vmem:[#allocation3 + $0x10] sm:$0xff]
  %v2573 = vld [vmem:[#allocation3 + $0x18] sm:$0xff]
  %v2574 = vld [vmem:[#allocation3 + $0x20] sm:$0xff]
  %v2575 = vld [vmem:[#allocation3 + $0x28] sm:$0xff]
  %v2576 = vld [vmem:[#allocation3 + $0x30] sm:$0xff]
  %v2577 = vld [vmem:[#allocation3 + $0x38] sm:$0xff]
  %v2578 = vld [vmem:[#allocation3 + $0x40] sm:$0xff]
  %v2579 = vld [vmem:[#allocation3 + $0x48] sm:$0xff]
  %v2580 = vld [vmem:[#allocation3 + $0x50] sm:$0xff]
  %v2581 = vld [vmem:[#allocation3 + $0x58] sm:$0xff]
  %v2582 = vld [vmem:[#allocation3 + $0x60] sm:$0xff]
  %v2583 = vld [vmem:[#allocation3 + $0x68] sm:$0xff]
  %v2584 = vld [vmem:[#allocation3 + $0x70] sm:$0xff]
  %v2585 = vld [vmem:[#allocation3 + $0x78] sm:$0xff]
  %v2586 = vld [vmem:[%s2 + $0x4] sm:$0xf]
  %v2587 = vld [vmem:[%s2 + $0x8] sm:$0xf]
  %v2588 = vld [vmem:[%s2 + $0xc] sm:$0xf]
  %v2589 = vld [vmem:[%s2 + $0x10] sm:$0xf]
  %v2590 = vpack.c.bf16 %v2571, %v2570
  %v2591 = vpack.c.bf16 %v2573, %v2572
  %v2592 = vpack.c.bf16 %v2575, %v2574
  %v2593 = vpack.c.bf16 %v2577, %v2576
  %v2594 = vpack.c.bf16 %v2579, %v2578
  %v2595 = vpack.c.bf16 %v2581, %v2580
  %v2596 = vpack.c.bf16 %v2583, %v2582
  %v2597 = vpack.c.bf16 %v2585, %v2584
  %v2602 = vunpack.c.l.b16 %v2586
  %v2603 = vunpack.c.l.b16 %v2587
  %v2604 = vunpack.c.l.b16 %v2588
  %v2605 = vunpack.c.l.b16 %v2589
  %v2606 = vpack.c.b16 %v2603, %v2602
  %v2607 = vpack.c.b16 %v2605, %v2604
  %v2611 = vsel %vm404, %v2590, 0
  %v2614 = vsel %vm404, %v2591, 0
  %v2617 = vsel %vm404, %v2592, 0
  %v2620 = vsel %vm404, %v2593, 0
  %v2623 = vsel %vm404, %v2594, 0
  %v2626 = vsel %vm404, %v2595, 0
  %v2629 = vsel %vm404, %v2596, 0
  %v2632 = vsel %vm404, %v2597, 0
  %2634 = vmatprep.subr.bf16.mxu0 0
  %2635 = vmatpush1.bf16.msra.mxu0 %v2606
  %2636 = vmatprep.subr.bf16.mxu0 0
  %2637 = vmatpush1.bf16.msra.mxu0 %v2607
  %2638 = vmatprep.subr.bf16.mxu0 0
  %2639 = vmatpush1.bf16.msra.mxu0 0
  %2640 = vmatprep.subr.bf16.mxu0 0
  %2641 = vmatpush1.bf16.msra.mxu0 0
  %2642 = vmatprep.subr.bf16.mxu0 0
  %2643 = vmatpush1.bf16.msra.mxu0 0
  %2644 = vmatprep.subr.bf16.mxu0 0
  %2645 = vmatpush1.bf16.msra.mxu0 0
  %2646 = vmatprep.subr.bf16.mxu0 0
  %2647 = vmatpush1.bf16.msra.mxu0 0
  %2648 = vmatprep.subr.bf16.mxu0 0
  %2649 = vmatpush1.bf16.msra.mxu0 0
  %2650 = vmatprep.subr.bf16.mxu0 0
  %2651 = vmatpush1.bf16.msra.mxu0 0
  %2652 = vmatprep.subr.bf16.mxu0 0
  %2653 = vmatpush1.bf16.msra.mxu0 0
  %2654 = vmatprep.subr.bf16.mxu0 0
  %2655 = vmatpush1.bf16.msra.mxu0 0
  %2656 = vmatprep.subr.bf16.mxu0 0
  %2657 = vmatpush1.bf16.msra.mxu0 0
  %2658 = vmatprep.subr.bf16.mxu0 0
  %2659 = vmatpush1.bf16.msra.mxu0 0
  %2660 = vmatprep.subr.bf16.mxu0 0
  %2661 = vmatpush1.bf16.msra.mxu0 0
  %2662 = vmatprep.subr.bf16.mxu0 0
  %2663 = vmatpush1.bf16.msra.mxu0 0
  %2664 = vmatprep.subr.bf16.mxu0 0
  %2665 = vmatpush1.bf16.msra.mxu0 0
  %2666 = vmatprep.mubr.bf16.mxu0 0
  %2667 = vmatmul.mubr.bf16.gmra.mrb[0].mxu0 %v2611
  %v2668 = vpop.f32.mrb[0].mxu0
  %v2669 = vadd.f32 0.0, %v2668
  %v2670 = vpop.f32.mrb[0].mxu0
  %v2671 = vpop.f32.mrb[0].mxu0
  %v2672 = vadd.f32 0.0, %v2671
  %v2673 = vpop.f32.mrb[0].mxu0
  %2674 = vmatprep.mubr.bf16.mxu0 0
  %2675 = vmatmul.mubr.bf16.gmra.mrb[0].mxu0 %v2614
  %v2676 = vpop.f32.mrb[0].mxu0
  %v2677 = vadd.f32 0.0, %v2676
  %v2678 = vpop.f32.mrb[0].mxu0
  %v2679 = vpop.f32.mrb[0].mxu0
  %v2680 = vadd.f32 0.0, %v2679
  %v2681 = vpop.f32.mrb[0].mxu0
  %2682 = vmatprep.mubr.bf16.mxu0 0
  %2683 = vmatmul.mubr.bf16.gmra.mrb[0].mxu0 %v2617
  %v2684 = vpop.f32.mrb[0].mxu0
  %v2685 = vadd.f32 0.0, %v2684
  %v2686 = vpop.f32.mrb[0].mxu0
  %v2687 = vpop.f32.mrb[0].mxu0
  %v2688 = vadd.f32 0.0, %v2687
  %v2689 = vpop.f32.mrb[0].mxu0
  %2690 = vmatprep.mubr.bf16.mxu0 0
  %2691 = vmatmul.mubr.bf16.gmra.mrb[0].mxu0 %v2620
  %v2692 = vpop.f32.mrb[0].mxu0
  %v2693 = vadd.f32 0.0, %v2692
  %v2694 = vpop.f32.mrb[0].mxu0
  %v2695 = vpop.f32.mrb[0].mxu0
  %v2696 = vadd.f32 0.0, %v2695
  %v2697 = vpop.f32.mrb[0].mxu0
  %2698 = vmatprep.mubr.bf16.mxu0 0
  %2699 = vmatmul.mubr.bf16.gmra.mrb[0].mxu0 %v2623
  %v2700 = vpop.f32.mrb[0].mxu0
  %v2701 = vadd.f32 0.0, %v2700
  %v2702 = vpop.f32.mrb[0].mxu0
  %v2703 = vpop.f32.mrb[0].mxu0
  %v2704 = vadd.f32 0.0, %v2703
  %v2705 = vpop.f32.mrb[0].mxu0
  %2706 = vmatprep.mubr.bf16.mxu0 0
  %2707 = vmatmul.mubr.bf16.gmra.mrb[0].mxu0 %v2626
  %v2708 = vpop.f32.mrb[0].mxu0
  %v2709 = vadd.f32 0.0, %v2708
  %v2710 = vpop.f32.mrb[0].mxu0
  %v2711 = vpop.f32.mrb[0].mxu0
  %v2712 = vadd.f32 0.0, %v2711
  %v2713 = vpop.f32.mrb[0].mxu0
  %2714 = vmatprep.mubr.bf16.mxu0 0
  %2715 = vmatmul.mubr.bf16.gmra.mrb[0].mxu0 %v2629
  %v2716 = vpop.f32.mrb[0].mxu0
  %v2717 = vadd.f32 0.0, %v2716
  %v2718 = vpop.f32.mrb[0].mxu0
  %v2719 = vpop.f32.mrb[0].mxu0
  %v2720 = vadd.f32 0.0, %v2719
  %v2721 = vpop.f32.mrb[0].mxu0
  %2722 = vmatprep.mubr.bf16.mxu0 0
  %2723 = vmatmul.mubr.bf16.gmra.mrb[0].mxu0 %v2632
  %v2724 = vpop.f32.mrb[0].mxu0
  %v2725 = vadd.f32 0.0, %v2724
  %v2726 = vpop.f32.mrb[0].mxu0
  %v2727 = vpop.f32.mrb[0].mxu0
  %v2728 = vadd.f32 0.0, %v2727
  %v2729 = vpop.f32.mrb[0].mxu0
  %2730 = vdwg.mxu0
  %v2731 = vld [vmem:[%s1 + $0x40] sm:$0xf]
  %v2732 = vld [vmem:[%s1 + $0x44] sm:$0xf]
  %v2733 = vld [vmem:[%s1 + $0x48] sm:$0xf]
  %v2734 = vld [vmem:[%s1 + $0x4c] sm:$0xf]
  %v2735 = vld [vmem:[%s1 + $0x50] sm:$0xf]
  %v2736 = vld [vmem:[%s1 + $0x54] sm:$0xf]
  %v2737 = vld [vmem:[%s1 + $0x58] sm:$0xf]
  %v2738 = vld [vmem:[%s1 + $0x5c] sm:$0xf]
  %v2739 = vld [vmem:[%s1 + $0x60] sm:$0xf]
  %v2740 = vld [vmem:[%s1 + $0x64] sm:$0xf]
  %v2741 = vld [vmem:[%s1 + $0x68] sm:$0xf]
  %v2742 = vld [vmem:[%s1 + $0x6c] sm:$0xf]
  %v2743 = vld [vmem:[%s1 + $0x70] sm:$0xf]
  %v2744 = vld [vmem:[%s1 + $0x74] sm:$0xf]
  %v2745 = vld [vmem:[%s1 + $0x78] sm:$0xf]
  %v2746 = vld [vmem:[%s1 + $0x7c] sm:$0xf]
  %v2747 = vpack.c.bf16 %v2672, %v2669
  %v2748 = vpack.c.bf16 %v2680, %v2677
  %v2749 = vpack.c.bf16 %v2688, %v2685
  %v2750 = vpack.c.bf16 %v2696, %v2693
  %v2751 = vpack.c.bf16 %v2704, %v2701
  %v2752 = vpack.c.bf16 %v2712, %v2709
  %v2753 = vpack.c.bf16 %v2720, %v2717
  %v2754 = vpack.c.bf16 %v2728, %v2725
  %v2755 = vld [vmem:[%s4 + $0x1] sm:$0x1]
  %v2756 = vlaneseq
  %v2757 = vshrl.u32 %v2756, 7
  %v2758 = vsub.s32 0, %v2757
  %v2759 = vrot.slane %v2755, %v2758
  %v2776 = vunpack.c.l.b16 %v2731
  %v2777 = vunpack.c.l.b16 %v2732
  %v2778 = vunpack.c.l.b16 %v2733
  %v2779 = vunpack.c.l.b16 %v2734
  %v2780 = vunpack.c.l.b16 %v2735
  %v2781 = vunpack.c.l.b16 %v2736
  %v2782 = vunpack.c.l.b16 %v2737
  %v2783 = vunpack.c.l.b16 %v2738
  %v2784 = vunpack.c.l.b16 %v2739
  %v2785 = vunpack.c.l.b16 %v2740
  %v2786 = vunpack.c.l.b16 %v2741
  %v2787 = vunpack.c.l.b16 %v2742
  %v2788 = vunpack.c.l.b16 %v2743
  %v2789 = vunpack.c.l.b16 %v2744
  %v2790 = vunpack.c.l.b16 %v2745
  %v2791 = vunpack.c.l.b16 %v2746
  %v2792 = vpack.c.b16 %v2777, %v2776
  %v2793 = vpack.c.b16 %v2779, %v2778
  %v2794 = vpack.c.b16 %v2781, %v2780
  %v2795 = vpack.c.b16 %v2783, %v2782
  %v2796 = vpack.c.b16 %v2785, %v2784
  %v2797 = vpack.c.b16 %v2787, %v2786
  %v2798 = vpack.c.b16 %v2789, %v2788
  %v2799 = vpack.c.b16 %v2791, %v2790
  %2808 = vmatprep.subr.bf16.mxu0 0
  %2809 = vmatpush1.bf16.msra.mxu0 %v2747
  %2810 = vmatprep.subr.bf16.mxu0 0
  %2811 = vmatpush1.bf16.msra.mxu0 %v2748
  %2812 = vmatprep.subr.bf16.mxu0 0
  %2813 = vmatpush1.bf16.msra.mxu0 %v2749
  %2814 = vmatprep.subr.bf16.mxu0 0
  %2815 = vmatpush1.bf16.msra.mxu0 %v2750
  %2816 = vmatprep.subr.bf16.mxu0 0
  %2817 = vmatpush1.bf16.msra.mxu0 %v2751
  %2818 = vmatprep.subr.bf16.mxu0 0
  %2819 = vmatpush1.bf16.msra.mxu0 %v2752
  %2820 = vmatprep.subr.bf16.mxu0 0
  %2821 = vmatpush1.bf16.msra.mxu0 %v2753
  %2822 = vmatprep.subr.bf16.mxu0 0
  %2823 = vmatpush1.bf16.msra.mxu0 %v2754
  %2824 = vmatprep.subr.bf16.mxu0 0
  %2825 = vmatpush1.bf16.msra.mxu0 0
  %2826 = vmatprep.subr.bf16.mxu0 0
  %2827 = vmatpush1.bf16.msra.mxu0 0
  %2828 = vmatprep.subr.bf16.mxu0 0
  %2829 = vmatpush1.bf16.msra.mxu0 0
  %2830 = vmatprep.subr.bf16.mxu0 0
  %2831 = vmatpush1.bf16.msra.mxu0 0
  %2832 = vmatprep.subr.bf16.mxu0 0
  %2833 = vmatpush1.bf16.msra.mxu0 0
  %2834 = vmatprep.subr.bf16.mxu0 0
  %2835 = vmatpush1.bf16.msra.mxu0 0
  %2836 = vmatprep.subr.bf16.mxu0 0
  %2837 = vmatpush1.bf16.msra.mxu0 0
  %2838 = vmatprep.subr.bf16.mxu0 0
  %2839 = vmatpush1.bf16.msra.mxu0 0
  %2840 = vmatprep.mubr.bf16.mxu0 0
  %2841 = vmatmul.mubr.bf16.gmra.mrb[0].mxu0 %v2792
  %v2842 = vpop.f32.mrb[0].mxu0
  %v2843 = vadd.f32 %v2759, %v2842
  %v2844 = vpop.f32.mrb[0].mxu0
  %v2845 = vpop.f32.mrb[0].mxu0
  %v2846 = vadd.f32 %v2759, %v2845
  %v2847 = vpop.f32.mrb[0].mxu0
  %2848 = vmatprep.mubr.bf16.mxu0 0
  %2849 = vmatmul.mubr.bf16.gmra.mrb[0].mxu0 %v2793
  %v2850 = vpop.f32.mrb[0].mxu0
  %v2851 = vadd.f32 %v2759, %v2850
  %v2852 = vpop.f32.mrb[0].mxu0
  %v2853 = vpop.f32.mrb[0].mxu0
  %v2854 = vadd.f32 %v2759, %v2853
  %v2855 = vpop.f32.mrb[0].mxu0
  %2856 = vmatprep.mubr.bf16.mxu0 0
  %2857 = vmatmul.mubr.bf16.gmra.mrb[0].mxu0 %v2794
  %v2858 = vpop.f32.mrb[0].mxu0
  %v2859 = vadd.f32 %v2759, %v2858
  %v2860 = vpop.f32.mrb[0].mxu0
  %v2861 = vpop.f32.mrb[0].mxu0
  %v2862 = vadd.f32 %v2759, %v2861
  %v2863 = vpop.f32.mrb[0].mxu0
  %2864 = vmatprep.mubr.bf16.mxu0 0
  %2865 = vmatmul.mubr.bf16.gmra.mrb[0].mxu0 %v2795
  %v2866 = vpop.f32.mrb[0].mxu0
  %v2867 = vadd.f32 %v2759, %v2866
  %v2868 = vpop.f32.mrb[0].mxu0
  %v2869 = vpop.f32.mrb[0].mxu0
  %v2870 = vadd.f32 %v2759, %v2869
  %v2871 = vpop.f32.mrb[0].mxu0
  %2872 = vmatprep.mubr.bf16.mxu0 0
  %2873 = vmatmul.mubr.bf16.gmra.mrb[0].mxu0 %v2796
  %v2874 = vpop.f32.mrb[0].mxu0
  %v2875 = vadd.f32 %v2759, %v2874
  %v2876 = vpop.f32.mrb[0].mxu0
  %v2877 = vpop.f32.mrb[0].mxu0
  %v2878 = vadd.f32 %v2759, %v2877
  %v2879 = vpop.f32.mrb[0].mxu0
  %2880 = vmatprep.mubr.bf16.mxu0 0
  %2881 = vmatmul.mubr.bf16.gmra.mrb[0].mxu0 %v2797
  %v2882 = vpop.f32.mrb[0].mxu0
  %v2883 = vadd.f32 %v2759, %v2882
  %v2884 = vpop.f32.mrb[0].mxu0
  %v2885 = vpop.f32.mrb[0].mxu0
  %v2886 = vadd.f32 %v2759, %v2885
  %v2887 = vpop.f32.mrb[0].mxu0
  %2888 = vmatprep.mubr.bf16.mxu0 0
  %2889 = vmatmul.mubr.bf16.gmra.mrb[0].mxu0 %v2798
  %v2890 = vpop.f32.mrb[0].mxu0
  %v2891 = vadd.f32 %v2759, %v2890
  %v2892 = vpop.f32.mrb[0].mxu0
  %v2893 = vpop.f32.mrb[0].mxu0
  %v2894 = vadd.f32 %v2759, %v2893
  %v2895 = vpop.f32.mrb[0].mxu0
  %2896 = vmatprep.mubr.bf16.mxu0 0
  %2897 = vmatmul.mubr.bf16.gmra.mrb[0].mxu0 %v2799
  %v2898 = vpop.f32.mrb[0].mxu0
  %v2899 = vadd.f32 %v2759, %v2898
  %v2900 = vpop.f32.mrb[0].mxu0
  %v2901 = vpop.f32.mrb[0].mxu0
  %v2902 = vadd.f32 %v2759, %v2901
  %v2903 = vpop.f32.mrb[0].mxu0
  %2904 = vdwg.mxu0
  %v2905 = vmax.f32 %v2843, 0.0
  %v2906 = vmax.f32 %v2846, 0.0
  %v2907 = vmax.f32 %v2851, 0.0
  %v2908 = vmax.f32 %v2854, 0.0
  %v2909 = vmax.f32 %v2859, 0.0
  %v2910 = vmax.f32 %v2862, 0.0
  %v2911 = vmax.f32 %v2867, 0.0
  %v2912 = vmax.f32 %v2870, 0.0
  %v2913 = vmax.f32 %v2875, 0.0
  %v2914 = vmax.f32 %v2878, 0.0
  %v2915 = vmax.f32 %v2883, 0.0
  %v2916 = vmax.f32 %v2886, 0.0
  %v2917 = vmax.f32 %v2891, 0.0
  %v2918 = vmax.f32 %v2894, 0.0
  %v2919 = vmax.f32 %v2899, 0.0
  %v2920 = vmax.f32 %v2902, 0.0
  %v2921 = vld [vmem:[%s2 + $0x14] sm:$0xf]
  %v2922 = vld [vmem:[%s2 + $0x18] sm:$0xf]
  %v2923 = vld [vmem:[%s2 + $0x1c] sm:$0xf]
  %v2924 = vld [vmem:[%s2 + $0x20] sm:$0xf]
  %v2925 = vpack.c.bf16 %v2906, %v2905
  %v2926 = vpack.c.bf16 %v2908, %v2907
  %v2927 = vpack.c.bf16 %v2910, %v2909
  %v2928 = vpack.c.bf16 %v2912, %v2911
  %v2929 = vpack.c.bf16 %v2914, %v2913
  %v2930 = vpack.c.bf16 %v2916, %v2915
  %v2931 = vpack.c.bf16 %v2918, %v2917
  %v2932 = vpack.c.bf16 %v2920, %v2919
  %v2937 = vunpack.c.l.b16 %v2921
  %v2938 = vunpack.c.l.b16 %v2922
  %v2939 = vunpack.c.l.b16 %v2923
  %v2940 = vunpack.c.l.b16 %v2924
  %v2941 = vpack.c.b16 %v2938, %v2937
  %v2942 = vpack.c.b16 %v2940, %v2939
  %v2946 = vsel %vm404, %v2925, 0
  %v2949 = vsel %vm404, %v2926, 0
  %v2952 = vsel %vm404, %v2927, 0
  %v2955 = vsel %vm404, %v2928, 0
  %v2958 = vsel %vm404, %v2929, 0
  %v2961 = vsel %vm404, %v2930, 0
  %v2964 = vsel %vm404, %v2931, 0
  %v2967 = vsel %vm404, %v2932, 0
  %2969 = vmatprep.subr.bf16.mxu0 0
  %2970 = vmatpush1.bf16.msra.mxu0 %v2941
  %2971 = vmatprep.subr.bf16.mxu0 0
  %2972 = vmatpush1.bf16.msra.mxu0 %v2942
  %2973 = vmatprep.subr.bf16.mxu0 0
  %2974 = vmatpush1.bf16.msra.mxu0 0
  %2975 = vmatprep.subr.bf16.mxu0 0
  %2976 = vmatpush1.bf16.msra.mxu0 0
  %2977 = vmatprep.subr.bf16.mxu0 0
  %2978 = vmatpush1.bf16.msra.mxu0 0
  %2979 = vmatprep.subr.bf16.mxu0 0
  %2980 = vmatpush1.bf16.msra.mxu0 0
  %2981 = vmatprep.subr.bf16.mxu0 0
  %2982 = vmatpush1.bf16.msra.mxu0 0
  %2983 = vmatprep.subr.bf16.mxu0 0
  %2984 = vmatpush1.bf16.msra.mxu0 0
  %2985 = vmatprep.subr.bf16.mxu0 0
  %2986 = vmatpush1.bf16.msra.mxu0 0
  %2987 = vmatprep.subr.bf16.mxu0 0
  %2988 = vmatpush1.bf16.msra.mxu0 0
  %2989 = vmatprep.subr.bf16.mxu0 0
  %2990 = vmatpush1.bf16.msra.mxu0 0
  %2991 = vmatprep.subr.bf16.mxu0 0
  %2992 = vmatpush1.bf16.msra.mxu0 0
  %2993 = vmatprep.subr.bf16.mxu0 0
  %2994 = vmatpush1.bf16.msra.mxu0 0
  %2995 = vmatprep.subr.bf16.mxu0 0
  %2996 = vmatpush1.bf16.msra.mxu0 0
  %2997 = vmatprep.subr.bf16.mxu0 0
  %2998 = vmatpush1.bf16.msra.mxu0 0
  %2999 = vmatprep.subr.bf16.mxu0 0
  %3000 = vmatpush1.bf16.msra.mxu0 0
  %3001 = vmatprep.mubr.bf16.mxu0 0
  %3002 = vmatmul.mubr.bf16.gmra.mrb[0].mxu0 %v2946
  %v3003 = vpop.f32.mrb[0].mxu0
  %v3004 = vadd.f32 0.0, %v3003
  %v3005 = vpop.f32.mrb[0].mxu0
  %v3006 = vpop.f32.mrb[0].mxu0
  %v3007 = vadd.f32 0.0, %v3006
  %v3008 = vpop.f32.mrb[0].mxu0
  %3009 = vmatprep.mubr.bf16.mxu0 0
  %3010 = vmatmul.mubr.bf16.gmra.mrb[0].mxu0 %v2949
  %v3011 = vpop.f32.mrb[0].mxu0
  %v3012 = vadd.f32 0.0, %v3011
  %v3013 = vpop.f32.mrb[0].mxu0
  %v3014 = vpop.f32.mrb[0].mxu0
  %v3015 = vadd.f32 0.0, %v3014
  %v3016 = vpop.f32.mrb[0].mxu0
  %3017 = vmatprep.mubr.bf16.mxu0 0
  %3018 = vmatmul.mubr.bf16.gmra.mrb[0].mxu0 %v2952
  %v3019 = vpop.f32.mrb[0].mxu0
  %v3020 = vadd.f32 0.0, %v3019
  %v3021 = vpop.f32.mrb[0].mxu0
  %v3022 = vpop.f32.mrb[0].mxu0
  %v3023 = vadd.f32 0.0, %v3022
  %v3024 = vpop.f32.mrb[0].mxu0
  %3025 = vmatprep.mubr.bf16.mxu0 0
  %3026 = vmatmul.mubr.bf16.gmra.mrb[0].mxu0 %v2955
  %v3027 = vpop.f32.mrb[0].mxu0
  %v3028 = vadd.f32 0.0, %v3027
  %v3029 = vpop.f32.mrb[0].mxu0
  %v3030 = vpop.f32.mrb[0].mxu0
  %v3031 = vadd.f32 0.0, %v3030
  %v3032 = vpop.f32.mrb[0].mxu0
  %3033 = vmatprep.mubr.bf16.mxu0 0
  %3034 = vmatmul.mubr.bf16.gmra.mrb[0].mxu0 %v2958
  %v3035 = vpop.f32.mrb[0].mxu0
  %v3036 = vadd.f32 0.0, %v3035
  %v3037 = vpop.f32.mrb[0].mxu0
  %v3038 = vpop.f32.mrb[0].mxu0
  %v3039 = vadd.f32 0.0, %v3038
  %v3040 = vpop.f32.mrb[0].mxu0
  %3041 = vmatprep.mubr.bf16.mxu0 0
  %3042 = vmatmul.mubr.bf16.gmra.mrb[0].mxu0 %v2961
  %v3043 = vpop.f32.mrb[0].mxu0
  %v3044 = vadd.f32 0.0, %v3043
  %v3045 = vpop.f32.mrb[0].mxu0
  %v3046 = vpop.f32.mrb[0].mxu0
  %v3047 = vadd.f32 0.0, %v3046
  %v3048 = vpop.f32.mrb[0].mxu0
  %3049 = vmatprep.mubr.bf16.mxu0 0
  %3050 = vmatmul.mubr.bf16.gmra.mrb[0].mxu0 %v2964
  %v3051 = vpop.f32.mrb[0].mxu0
  %v3052 = vadd.f32 0.0, %v3051
  %v3053 = vpop.f32.mrb[0].mxu0
  %v3054 = vpop.f32.mrb[0].mxu0
  %v3055 = vadd.f32 0.0, %v3054
  %v3056 = vpop.f32.mrb[0].mxu0
  %3057 = vmatprep.mubr.bf16.mxu0 0
  %3058 = vmatmul.mubr.bf16.gmra.mrb[0].mxu0 %v2967
  %v3059 = vpop.f32.mrb[0].mxu0
  %v3060 = vadd.f32 0.0, %v3059
  %v3061 = vpop.f32.mrb[0].mxu0
  %v3062 = vpop.f32.mrb[0].mxu0
  %v3063 = vadd.f32 0.0, %v3062
  %v3064 = vpop.f32.mrb[0].mxu0
  %3065 = vdwg.mxu0
  %v3066 = vpack.c.bf16 %v3007, %v3004
  %v3067 = vpack.c.bf16 %v3015, %v3012
  %v3068 = vpack.c.bf16 %v3023, %v3020
  %v3069 = vpack.c.bf16 %v3031, %v3028
  %v3070 = vpack.c.bf16 %v3039, %v3036
  %v3071 = vpack.c.bf16 %v3047, %v3044
  %v3072 = vpack.c.bf16 %v3055, %v3052
  %v3073 = vpack.c.bf16 %v3063, %v3060
  %v3074 = vld [vmem:[%s4 + $0x2] sm:$0x1]
  %v3075 = vlaneseq
  %v3076 = vshrl.u32 %v3075, 7
  %v3077 = vsub.s32 0, %v3076
  %v3078 = vrot.slane %v3074, %v3077
  %3079 = vmatprep.subr.bf16.mxu0 0
  %3080 = vmatpush1.bf16.msra.mxu0 %v3066
  %3081 = vmatprep.subr.bf16.mxu0 0
  %3082 = vmatpush1.bf16.msra.mxu0 %v3067
  %3083 = vmatprep.subr.bf16.mxu0 0
  %3084 = vmatpush1.bf16.msra.mxu0 %v3068
  %3085 = vmatprep.subr.bf16.mxu0 0
  %3086 = vmatpush1.bf16.msra.mxu0 %v3069
  %3087 = vmatprep.subr.bf16.mxu0 0
  %3088 = vmatpush1.bf16.msra.mxu0 %v3070
  %3089 = vmatprep.subr.bf16.mxu0 0
  %3090 = vmatpush1.bf16.msra.mxu0 %v3071
  %3091 = vmatprep.subr.bf16.mxu0 0
  %3092 = vmatpush1.bf16.msra.mxu0 %v3072
  %3093 = vmatprep.subr.bf16.mxu0 0
  %3094 = vmatpush1.bf16.msra.mxu0 %v3073
  %3095 = vmatprep.subr.bf16.mxu0 0
  %3096 = vmatpush1.bf16.msra.mxu0 0
  %3097 = vmatprep.subr.bf16.mxu0 0
  %3098 = vmatpush1.bf16.msra.mxu0 0
  %3099 = vmatprep.subr.bf16.mxu0 0
  %3100 = vmatpush1.bf16.msra.mxu0 0
  %3101 = vmatprep.subr.bf16.mxu0 0
  %3102 = vmatpush1.bf16.msra.mxu0 0
  %3103 = vmatprep.subr.bf16.mxu0 0
  %3104 = vmatpush1.bf16.msra.mxu0 0
  %3105 = vmatprep.subr.bf16.mxu0 0
  %3106 = vmatpush1.bf16.msra.mxu0 0
  %3107 = vmatprep.subr.bf16.mxu0 0
  %3108 = vmatpush1.bf16.msra.mxu0 0
  %3109 = vmatprep.subr.bf16.mxu0 0
  %3110 = vmatpush1.bf16.msra.mxu0 0
  %3111 = vmatprep.mubr.bf16.mxu0 0
  %3112 = vmatmul.mubr.bf16.gmra.mrb[0].mxu0 %v2792
  %v3113 = vpop.f32.mrb[0].mxu0
  %v3114 = vadd.f32 %v3078, %v3113
  %v3115 = vpop.f32.mrb[0].mxu0
  %v3116 = vpop.f32.mrb[0].mxu0
  %v3117 = vadd.f32 %v3078, %v3116
  %v3118 = vpop.f32.mrb[0].mxu0
  %3119 = vmatprep.mubr.bf16.mxu0 0
  %3120 = vmatmul.mubr.bf16.gmra.mrb[0].mxu0 %v2793
  %v3121 = vpop.f32.mrb[0].mxu0
  %v3122 = vadd.f32 %v3078, %v3121
  %v3123 = vpop.f32.mrb[0].mxu0
  %v3124 = vpop.f32.mrb[0].mxu0
  %v3125 = vadd.f32 %v3078, %v3124
  %v3126 = vpop.f32.mrb[0].mxu0
  %3127 = vmatprep.mubr.bf16.mxu0 0
  %3128 = vmatmul.mubr.bf16.gmra.mrb[0].mxu0 %v2794
  %v3129 = vpop.f32.mrb[0].mxu0
  %v3130 = vadd.f32 %v3078, %v3129
  %v3131 = vpop.f32.mrb[0].mxu0
  %v3132 = vpop.f32.mrb[0].mxu0
  %v3133 = vadd.f32 %v3078, %v3132
  %v3134 = vpop.f32.mrb[0].mxu0
  %3135 = vmatprep.mubr.bf16.mxu0 0
  %3136 = vmatmul.mubr.bf16.gmra.mrb[0].mxu0 %v2795
  %v3137 = vpop.f32.mrb[0].mxu0
  %v3138 = vadd.f32 %v3078, %v3137
  %v3139 = vpop.f32.mrb[0].mxu0
  %v3140 = vpop.f32.mrb[0].mxu0
  %v3141 = vadd.f32 %v3078, %v3140
  %v3142 = vpop.f32.mrb[0].mxu0
  %3143 = vmatprep.mubr.bf16.mxu0 0
  %3144 = vmatmul.mubr.bf16.gmra.mrb[0].mxu0 %v2796
  %v3145 = vpop.f32.mrb[0].mxu0
  %v3146 = vadd.f32 %v3078, %v3145
  %v3147 = vpop.f32.mrb[0].mxu0
  %v3148 = vpop.f32.mrb[0].mxu0
  %v3149 = vadd.f32 %v3078, %v3148
  %v3150 = vpop.f32.mrb[0].mxu0
  %3151 = vmatprep.mubr.bf16.mxu0 0
  %3152 = vmatmul.mubr.bf16.gmra.mrb[0].mxu0 %v2797
  %v3153 = vpop.f32.mrb[0].mxu0
  %v3154 = vadd.f32 %v3078, %v3153
  %v3155 = vpop.f32.mrb[0].mxu0
  %v3156 = vpop.f32.mrb[0].mxu0
  %v3157 = vadd.f32 %v3078, %v3156
  %v3158 = vpop.f32.mrb[0].mxu0
  %3159 = vmatprep.mubr.bf16.mxu0 0
  %3160 = vmatmul.mubr.bf16.gmra.mrb[0].mxu0 %v2798
  %v3161 = vpop.f32.mrb[0].mxu0
  %v3162 = vadd.f32 %v3078, %v3161
  %v3163 = vpop.f32.mrb[0].mxu0
  %v3164 = vpop.f32.mrb[0].mxu0
  %v3165 = vadd.f32 %v3078, %v3164
  %v3166 = vpop.f32.mrb[0].mxu0
  %3167 = vmatprep.mubr.bf16.mxu0 0
  %3168 = vmatmul.mubr.bf16.gmra.mrb[0].mxu0 %v2799
  %v3169 = vpop.f32.mrb[0].mxu0
  %v3170 = vadd.f32 %v3078, %v3169
  %v3171 = vpop.f32.mrb[0].mxu0
  %v3172 = vpop.f32.mrb[0].mxu0
  %v3173 = vadd.f32 %v3078, %v3172
  %v3174 = vpop.f32.mrb[0].mxu0
  %3175 = vdwg.mxu0
  %v3176 = vmax.f32 %v3114, 0.0
  %v3177 = vmax.f32 %v3117, 0.0
  %v3178 = vmax.f32 %v3122, 0.0
  %v3179 = vmax.f32 %v3125, 0.0
  %v3180 = vmax.f32 %v3130, 0.0
  %v3181 = vmax.f32 %v3133, 0.0
  %v3182 = vmax.f32 %v3138, 0.0
  %v3183 = vmax.f32 %v3141, 0.0
  %v3184 = vmax.f32 %v3146, 0.0
  %v3185 = vmax.f32 %v3149, 0.0
  %v3186 = vmax.f32 %v3154, 0.0
  %v3187 = vmax.f32 %v3157, 0.0
  %v3188 = vmax.f32 %v3162, 0.0
  %v3189 = vmax.f32 %v3165, 0.0
  %v3190 = vmax.f32 %v3170, 0.0
  %v3191 = vmax.f32 %v3173, 0.0
  %v3192 = vld [vmem:[%s2 + $0x24] sm:$0xf]
  %v3193 = vld [vmem:[%s2 + $0x28] sm:$0xf]
  %v3194 = vld [vmem:[%s2 + $0x2c] sm:$0xf]
  %v3195 = vld [vmem:[%s2 + $0x30] sm:$0xf]
  %v3196 = vpack.c.bf16 %v3177, %v3176
  %v3197 = vpack.c.bf16 %v3179, %v3178
  %v3198 = vpack.c.bf16 %v3181, %v3180
  %v3199 = vpack.c.bf16 %v3183, %v3182
  %v3200 = vpack.c.bf16 %v3185, %v3184
  %v3201 = vpack.c.bf16 %v3187, %v3186
  %v3202 = vpack.c.bf16 %v3189, %v3188
  %v3203 = vpack.c.bf16 %v3191, %v3190
  %v3208 = vunpack.c.l.b16 %v3192
  %v3209 = vunpack.c.l.b16 %v3193
  %v3210 = vunpack.c.l.b16 %v3194
  %v3211 = vunpack.c.l.b16 %v3195
  %v3212 = vpack.c.b16 %v3209, %v3208
  %v3213 = vpack.c.b16 %v3211, %v3210
  %v3217 = vsel %vm404, %v3196, 0
  %v3220 = vsel %vm404, %v3197, 0
  %v3223 = vsel %vm404, %v3198, 0
  %v3226 = vsel %vm404, %v3199, 0
  %v3229 = vsel %vm404, %v3200, 0
  %v3232 = vsel %vm404, %v3201, 0
  %v3235 = vsel %vm404, %v3202, 0
  %v3238 = vsel %vm404, %v3203, 0
  %3240 = vmatprep.subr.bf16.mxu0 0
  %3241 = vmatpush1.bf16.msra.mxu0 %v3212
  %3242 = vmatprep.subr.bf16.mxu0 0
  %3243 = vmatpush1.bf16.msra.mxu0 %v3213
  %3244 = vmatprep.subr.bf16.mxu0 0
  %3245 = vmatpush1.bf16.msra.mxu0 0
  %3246 = vmatprep.subr.bf16.mxu0 0
  %3247 = vmatpush1.bf16.msra.mxu0 0
  %3248 = vmatprep.subr.bf16.mxu0 0
  %3249 = vmatpush1.bf16.msra.mxu0 0
  %3250 = vmatprep.subr.bf16.mxu0 0
  %3251 = vmatpush1.bf16.msra.mxu0 0
  %3252 = vmatprep.subr.bf16.mxu0 0
  %3253 = vmatpush1.bf16.msra.mxu0 0
  %3254 = vmatprep.subr.bf16.mxu0 0
  %3255 = vmatpush1.bf16.msra.mxu0 0
  %3256 = vmatprep.subr.bf16.mxu0 0
  %3257 = vmatpush1.bf16.msra.mxu0 0
  %3258 = vmatprep.subr.bf16.mxu0 0
  %3259 = vmatpush1.bf16.msra.mxu0 0
  %3260 = vmatprep.subr.bf16.mxu0 0
  %3261 = vmatpush1.bf16.msra.mxu0 0
  %3262 = vmatprep.subr.bf16.mxu0 0
  %3263 = vmatpush1.bf16.msra.mxu0 0
  %3264 = vmatprep.subr.bf16.mxu0 0
  %3265 = vmatpush1.bf16.msra.mxu0 0
  %3266 = vmatprep.subr.bf16.mxu0 0
  %3267 = vmatpush1.bf16.msra.mxu0 0
  %3268 = vmatprep.subr.bf16.mxu0 0
  %3269 = vmatpush1.bf16.msra.mxu0 0
  %3270 = vmatprep.subr.bf16.mxu0 0
  %3271 = vmatpush1.bf16.msra.mxu0 0
  %3272 = vmatprep.mubr.bf16.mxu0 0
  %3273 = vmatmul.mubr.bf16.gmra.mrb[0].mxu0 %v3217
  %v3274 = vpop.f32.mrb[0].mxu0
  %v3275 = vadd.f32 0.0, %v3274
  %v3276 = vpop.f32.mrb[0].mxu0
  %v3277 = vpop.f32.mrb[0].mxu0
  %v3278 = vadd.f32 0.0, %v3277
  %v3279 = vpop.f32.mrb[0].mxu0
  %3280 = vmatprep.mubr.bf16.mxu0 0
  %3281 = vmatmul.mubr.bf16.gmra.mrb[0].mxu0 %v3220
  %v3282 = vpop.f32.mrb[0].mxu0
  %v3283 = vadd.f32 0.0, %v3282
  %v3284 = vpop.f32.mrb[0].mxu0
  %v3285 = vpop.f32.mrb[0].mxu0
  %v3286 = vadd.f32 0.0, %v3285
  %v3287 = vpop.f32.mrb[0].mxu0
  %3288 = vmatprep.mubr.bf16.mxu0 0
  %3289 = vmatmul.mubr.bf16.gmra.mrb[0].mxu0 %v3223
  %v3290 = vpop.f32.mrb[0].mxu0
  %v3291 = vadd.f32 0.0, %v3290
  %v3292 = vpop.f32.mrb[0].mxu0
  %v3293 = vpop.f32.mrb[0].mxu0
  %v3294 = vadd.f32 0.0, %v3293
  %v3295 = vpop.f32.mrb[0].mxu0
  %3296 = vmatprep.mubr.bf16.mxu0 0
  %3297 = vmatmul.mubr.bf16.gmra.mrb[0].mxu0 %v3226
  %v3298 = vpop.f32.mrb[0].mxu0
  %v3299 = vadd.f32 0.0, %v3298
  %v3300 = vpop.f32.mrb[0].mxu0
  %v3301 = vpop.f32.mrb[0].mxu0
  %v3302 = vadd.f32 0.0, %v3301
  %v3303 = vpop.f32.mrb[0].mxu0
  %3304 = vmatprep.mubr.bf16.mxu0 0
  %3305 = vmatmul.mubr.bf16.gmra.mrb[0].mxu0 %v3229
  %v3306 = vpop.f32.mrb[0].mxu0
  %v3307 = vadd.f32 0.0, %v3306
  %v3308 = vpop.f32.mrb[0].mxu0
  %v3309 = vpop.f32.mrb[0].mxu0
  %v3310 = vadd.f32 0.0, %v3309
  %v3311 = vpop.f32.mrb[0].mxu0
  %3312 = vmatprep.mubr.bf16.mxu0 0
  %3313 = vmatmul.mubr.bf16.gmra.mrb[0].mxu0 %v3232
  %v3314 = vpop.f32.mrb[0].mxu0
  %v3315 = vadd.f32 0.0, %v3314
  %v3316 = vpop.f32.mrb[0].mxu0
  %v3317 = vpop.f32.mrb[0].mxu0
  %v3318 = vadd.f32 0.0, %v3317
  %v3319 = vpop.f32.mrb[0].mxu0
  %3320 = vmatprep.mubr.bf16.mxu0 0
  %3321 = vmatmul.mubr.bf16.gmra.mrb[0].mxu0 %v3235
  %v3322 = vpop.f32.mrb[0].mxu0
  %v3323 = vadd.f32 0.0, %v3322
  %v3324 = vpop.f32.mrb[0].mxu0
  %v3325 = vpop.f32.mrb[0].mxu0
  %v3326 = vadd.f32 0.0, %v3325
  %v3327 = vpop.f32.mrb[0].mxu0
  %3328 = vmatprep.mubr.bf16.mxu0 0
  %3329 = vmatmul.mubr.bf16.gmra.mrb[0].mxu0 %v3238
  %v3330 = vpop.f32.mrb[0].mxu0
  %v3331 = vadd.f32 0.0, %v3330
  %v3332 = vpop.f32.mrb[0].mxu0
  %v3333 = vpop.f32.mrb[0].mxu0
  %v3334 = vadd.f32 0.0, %v3333
  %v3335 = vpop.f32.mrb[0].mxu0
  %3336 = vdwg.mxu0
  %v3337 = vpack.c.bf16 %v3278, %v3275
  %v3338 = vpack.c.bf16 %v3286, %v3283
  %v3339 = vpack.c.bf16 %v3294, %v3291
  %v3340 = vpack.c.bf16 %v3302, %v3299
  %v3341 = vpack.c.bf16 %v3310, %v3307
  %v3342 = vpack.c.bf16 %v3318, %v3315
  %v3343 = vpack.c.bf16 %v3326, %v3323
  %v3344 = vpack.c.bf16 %v3334, %v3331
  %v3345 = vld [vmem:[%s4 + $0x3] sm:$0x1]
  %v3346 = vlaneseq
  %v3347 = vshrl.u32 %v3346, 7
  %v3348 = vsub.s32 0, %v3347
  %v3349 = vrot.slane %v3345, %v3348
  %3350 = vmatprep.subr.bf16.mxu0 0
  %3351 = vmatpush1.bf16.msra.mxu0 %v3337
  %3352 = vmatprep.subr.bf16.mxu0 0
  %3353 = vmatpush1.bf16.msra.mxu0 %v3338
  %3354 = vmatprep.subr.bf16.mxu0 0
  %3355 = vmatpush1.bf16.msra.mxu0 %v3339
  %3356 = vmatprep.subr.bf16.mxu0 0
  %3357 = vmatpush1.bf16.msra.mxu0 %v3340
  %3358 = vmatprep.subr.bf16.mxu0 0
  %3359 = vmatpush1.bf16.msra.mxu0 %v3341
  %3360 = vmatprep.subr.bf16.mxu0 0
  %3361 = vmatpush1.bf16.msra.mxu0 %v3342
  %3362 = vmatprep.subr.bf16.mxu0 0
  %3363 = vmatpush1.bf16.msra.mxu0 %v3343
  %3364 = vmatprep.subr.bf16.mxu0 0
  %3365 = vmatpush1.bf16.msra.mxu0 %v3344
  %3366 = vmatprep.subr.bf16.mxu0 0
  %3367 = vmatpush1.bf16.msra.mxu0 0
  %3368 = vmatprep.subr.bf16.mxu0 0
  %3369 = vmatpush1.bf16.msra.mxu0 0
  %3370 = vmatprep.subr.bf16.mxu0 0
  %3371 = vmatpush1.bf16.msra.mxu0 0
  %3372 = vmatprep.subr.bf16.mxu0 0
  %3373 = vmatpush1.bf16.msra.mxu0 0
  %3374 = vmatprep.subr.bf16.mxu0 0
  %3375 = vmatpush1.bf16.msra.mxu0 0
  %3376 = vmatprep.subr.bf16.mxu0 0
  %3377 = vmatpush1.bf16.msra.mxu0 0
  %3378 = vmatprep.subr.bf16.mxu0 0
  %3379 = vmatpush1.bf16.msra.mxu0 0
  %3380 = vmatprep.subr.bf16.mxu0 0
  %3381 = vmatpush1.bf16.msra.mxu0 0
  %3382 = vmatprep.mubr.bf16.mxu0 0
  %3383 = vmatmul.mubr.bf16.gmra.mrb[0].mxu0 %v2792
  %v3384 = vpop.f32.mrb[0].mxu0
  %v3385 = vadd.f32 %v3349, %v3384
  %v3386 = vpop.f32.mrb[0].mxu0
  %v3387 = vpop.f32.mrb[0].mxu0
  %v3388 = vadd.f32 %v3349, %v3387
  %v3389 = vpop.f32.mrb[0].mxu0
  %3390 = vmatprep.mubr.bf16.mxu0 0
  %3391 = vmatmul.mubr.bf16.gmra.mrb[0].mxu0 %v2793
  %v3392 = vpop.f32.mrb[0].mxu0
  %v3393 = vadd.f32 %v3349, %v3392
  %v3394 = vpop.f32.mrb[0].mxu0
  %v3395 = vpop.f32.mrb[0].mxu0
  %v3396 = vadd.f32 %v3349, %v3395
  %v3397 = vpop.f32.mrb[0].mxu0
  %3398 = vmatprep.mubr.bf16.mxu0 0
  %3399 = vmatmul.mubr.bf16.gmra.mrb[0].mxu0 %v2794
  %v3400 = vpop.f32.mrb[0].mxu0
  %v3401 = vadd.f32 %v3349, %v3400
  %v3402 = vpop.f32.mrb[0].mxu0
  %v3403 = vpop.f32.mrb[0].mxu0
  %v3404 = vadd.f32 %v3349, %v3403
  %v3405 = vpop.f32.mrb[0].mxu0
  %3406 = vmatprep.mubr.bf16.mxu0 0
  %3407 = vmatmul.mubr.bf16.gmra.mrb[0].mxu0 %v2795
  %v3408 = vpop.f32.mrb[0].mxu0
  %v3409 = vadd.f32 %v3349, %v3408
  %v3410 = vpop.f32.mrb[0].mxu0
  %v3411 = vpop.f32.mrb[0].mxu0
  %v3412 = vadd.f32 %v3349, %v3411
  %v3413 = vpop.f32.mrb[0].mxu0
  %3414 = vmatprep.mubr.bf16.mxu0 0
  %3415 = vmatmul.mubr.bf16.gmra.mrb[0].mxu0 %v2796
  %v3416 = vpop.f32.mrb[0].mxu0
  %v3417 = vadd.f32 %v3349, %v3416
  %v3418 = vpop.f32.mrb[0].mxu0
  %v3419 = vpop.f32.mrb[0].mxu0
  %v3420 = vadd.f32 %v3349, %v3419
  %v3421 = vpop.f32.mrb[0].mxu0
  %3422 = vmatprep.mubr.bf16.mxu0 0
  %3423 = vmatmul.mubr.bf16.gmra.mrb[0].mxu0 %v2797
  %v3424 = vpop.f32.mrb[0].mxu0
  %v3425 = vadd.f32 %v3349, %v3424
  %v3426 = vpop.f32.mrb[0].mxu0
  %v3427 = vpop.f32.mrb[0].mxu0
  %v3428 = vadd.f32 %v3349, %v3427
  %v3429 = vpop.f32.mrb[0].mxu0
  %3430 = vmatprep.mubr.bf16.mxu0 0
  %3431 = vmatmul.mubr.bf16.gmra.mrb[0].mxu0 %v2798
  %v3432 = vpop.f32.mrb[0].mxu0
  %v3433 = vadd.f32 %v3349, %v3432
  %v3434 = vpop.f32.mrb[0].mxu0
  %v3435 = vpop.f32.mrb[0].mxu0
  %v3436 = vadd.f32 %v3349, %v3435
  %v3437 = vpop.f32.mrb[0].mxu0
  %3438 = vmatprep.mubr.bf16.mxu0 0
  %3439 = vmatmul.mubr.bf16.gmra.mrb[0].mxu0 %v2799
  %v3440 = vpop.f32.mrb[0].mxu0
  %v3441 = vadd.f32 %v3349, %v3440
  %v3442 = vpop.f32.mrb[0].mxu0
  %v3443 = vpop.f32.mrb[0].mxu0
  %v3444 = vadd.f32 %v3349, %v3443
  %v3445 = vpop.f32.mrb[0].mxu0
  %3446 = vdwg.mxu0
  %v3447 = vmax.f32 %v3385, 0.0
  %v3448 = vmax.f32 %v3388, 0.0
  %v3449 = vmax.f32 %v3393, 0.0
  %v3450 = vmax.f32 %v3396, 0.0
  %v3451 = vmax.f32 %v3401, 0.0
  %v3452 = vmax.f32 %v3404, 0.0
  %v3453 = vmax.f32 %v3409, 0.0
  %v3454 = vmax.f32 %v3412, 0.0
  %v3455 = vmax.f32 %v3417, 0.0
  %v3456 = vmax.f32 %v3420, 0.0
  %v3457 = vmax.f32 %v3425, 0.0
  %v3458 = vmax.f32 %v3428, 0.0
  %v3459 = vmax.f32 %v3433, 0.0
  %v3460 = vmax.f32 %v3436, 0.0
  %v3461 = vmax.f32 %v3441, 0.0
  %v3462 = vmax.f32 %v3444, 0.0
  %v3463 = vld [vmem:[%s2 + $0x34] sm:$0xf]
  %v3464 = vld [vmem:[%s2 + $0x38] sm:$0xf]
  %v3465 = vld [vmem:[%s2 + $0x3c] sm:$0xf]
  %v3466 = vld [vmem:[%s2 + $0x40] sm:$0xf]
  %v3467 = vpack.c.bf16 %v3448, %v3447
  %v3468 = vpack.c.bf16 %v3450, %v3449
  %v3469 = vpack.c.bf16 %v3452, %v3451
  %v3470 = vpack.c.bf16 %v3454, %v3453
  %v3471 = vpack.c.bf16 %v3456, %v3455
  %v3472 = vpack.c.bf16 %v3458, %v3457
  %v3473 = vpack.c.bf16 %v3460, %v3459
  %v3474 = vpack.c.bf16 %v3462, %v3461
  %v3479 = vunpack.c.l.b16 %v3463
  %v3480 = vunpack.c.l.b16 %v3464
  %v3481 = vunpack.c.l.b16 %v3465
  %v3482 = vunpack.c.l.b16 %v3466
  %v3483 = vpack.c.b16 %v3480, %v3479
  %v3484 = vpack.c.b16 %v3482, %v3481
  %v3488 = vsel %vm404, %v3467, 0
  %v3491 = vsel %vm404, %v3468, 0
  %v3494 = vsel %vm404, %v3469, 0
  %v3497 = vsel %vm404, %v3470, 0
  %v3500 = vsel %vm404, %v3471, 0
  %v3503 = vsel %vm404, %v3472, 0
  %v3506 = vsel %vm404, %v3473, 0
  %v3509 = vsel %vm404, %v3474, 0
  %3511 = vmatprep.subr.bf16.mxu0 0
  %3512 = vmatpush1.bf16.msra.mxu0 %v3483
  %3513 = vmatprep.subr.bf16.mxu0 0
  %3514 = vmatpush1.bf16.msra.mxu0 %v3484
  %3515 = vmatprep.subr.bf16.mxu0 0
  %3516 = vmatpush1.bf16.msra.mxu0 0
  %3517 = vmatprep.subr.bf16.mxu0 0
  %3518 = vmatpush1.bf16.msra.mxu0 0
  %3519 = vmatprep.subr.bf16.mxu0 0
  %3520 = vmatpush1.bf16.msra.mxu0 0
  %3521 = vmatprep.subr.bf16.mxu0 0
  %3522 = vmatpush1.bf16.msra.mxu0 0
  %3523 = vmatprep.subr.bf16.mxu0 0
  %3524 = vmatpush1.bf16.msra.mxu0 0
  %3525 = vmatprep.subr.bf16.mxu0 0
  %3526 = vmatpush1.bf16.msra.mxu0 0
  %3527 = vmatprep.subr.bf16.mxu0 0
  %3528 = vmatpush1.bf16.msra.mxu0 0
  %3529 = vmatprep.subr.bf16.mxu0 0
  %3530 = vmatpush1.bf16.msra.mxu0 0
  %3531 = vmatprep.subr.bf16.mxu0 0
  %3532 = vmatpush1.bf16.msra.mxu0 0
  %3533 = vmatprep.subr.bf16.mxu0 0
  %3534 = vmatpush1.bf16.msra.mxu0 0
  %3535 = vmatprep.subr.bf16.mxu0 0
  %3536 = vmatpush1.bf16.msra.mxu0 0
  %3537 = vmatprep.subr.bf16.mxu0 0
  %3538 = vmatpush1.bf16.msra.mxu0 0
  %3539 = vmatprep.subr.bf16.mxu0 0
  %3540 = vmatpush1.bf16.msra.mxu0 0
  %3541 = vmatprep.subr.bf16.mxu0 0
  %3542 = vmatpush1.bf16.msra.mxu0 0
  %3543 = vmatprep.mubr.bf16.mxu0 0
  %3544 = vmatmul.mubr.bf16.gmra.mrb[0].mxu0 %v3488
  %v3545 = vpop.f32.mrb[0].mxu0
  %v3546 = vadd.f32 0.0, %v3545
  %v3547 = vpop.f32.mrb[0].mxu0
  %v3548 = vpop.f32.mrb[0].mxu0
  %v3549 = vadd.f32 0.0, %v3548
  %v3550 = vpop.f32.mrb[0].mxu0
  %3551 = vmatprep.mubr.bf16.mxu0 0
  %3552 = vmatmul.mubr.bf16.gmra.mrb[0].mxu0 %v3491
  %v3553 = vpop.f32.mrb[0].mxu0
  %v3554 = vadd.f32 0.0, %v3553
  %v3555 = vpop.f32.mrb[0].mxu0
  %v3556 = vpop.f32.mrb[0].mxu0
  %v3557 = vadd.f32 0.0, %v3556
  %v3558 = vpop.f32.mrb[0].mxu0
  %3559 = vmatprep.mubr.bf16.mxu0 0
  %3560 = vmatmul.mubr.bf16.gmra.mrb[0].mxu0 %v3494
  %v3561 = vpop.f32.mrb[0].mxu0
  %v3562 = vadd.f32 0.0, %v3561
  %v3563 = vpop.f32.mrb[0].mxu0
  %v3564 = vpop.f32.mrb[0].mxu0
  %v3565 = vadd.f32 0.0, %v3564
  %v3566 = vpop.f32.mrb[0].mxu0
  %3567 = vmatprep.mubr.bf16.mxu0 0
  %3568 = vmatmul.mubr.bf16.gmra.mrb[0].mxu0 %v3497
  %v3569 = vpop.f32.mrb[0].mxu0
  %v3570 = vadd.f32 0.0, %v3569
  %v3571 = vpop.f32.mrb[0].mxu0
  %v3572 = vpop.f32.mrb[0].mxu0
  %v3573 = vadd.f32 0.0, %v3572
  %v3574 = vpop.f32.mrb[0].mxu0
  %3575 = vmatprep.mubr.bf16.mxu0 0
  %3576 = vmatmul.mubr.bf16.gmra.mrb[0].mxu0 %v3500
  %v3577 = vpop.f32.mrb[0].mxu0
  %v3578 = vadd.f32 0.0, %v3577
  %v3579 = vpop.f32.mrb[0].mxu0
  %v3580 = vpop.f32.mrb[0].mxu0
  %v3581 = vadd.f32 0.0, %v3580
  %v3582 = vpop.f32.mrb[0].mxu0
  %3583 = vmatprep.mubr.bf16.mxu0 0
  %3584 = vmatmul.mubr.bf16.gmra.mrb[0].mxu0 %v3503
  %v3585 = vpop.f32.mrb[0].mxu0
  %v3586 = vadd.f32 0.0, %v3585
  %v3587 = vpop.f32.mrb[0].mxu0
  %v3588 = vpop.f32.mrb[0].mxu0
  %v3589 = vadd.f32 0.0, %v3588
  %v3590 = vpop.f32.mrb[0].mxu0
  %3591 = vmatprep.mubr.bf16.mxu0 0
  %3592 = vmatmul.mubr.bf16.gmra.mrb[0].mxu0 %v3506
  %v3593 = vpop.f32.mrb[0].mxu0
  %v3594 = vadd.f32 0.0, %v3593
  %v3595 = vpop.f32.mrb[0].mxu0
  %v3596 = vpop.f32.mrb[0].mxu0
  %v3597 = vadd.f32 0.0, %v3596
  %v3598 = vpop.f32.mrb[0].mxu0
  %3599 = vmatprep.mubr.bf16.mxu0 0
  %3600 = vmatmul.mubr.bf16.gmra.mrb[0].mxu0 %v3509
  %v3601 = vpop.f32.mrb[0].mxu0
  %v3602 = vadd.f32 0.0, %v3601
  %v3603 = vpop.f32.mrb[0].mxu0
  %v3604 = vpop.f32.mrb[0].mxu0
  %v3605 = vadd.f32 0.0, %v3604
  %v3606 = vpop.f32.mrb[0].mxu0
  %3607 = vdwg.mxu0
  %v3608 = vld [vmem:[%s1 + $0x80] sm:$0xf]
  %v3609 = vld [vmem:[%s1 + $0x84] sm:$0xf]
  %v3610 = vld [vmem:[%s1 + $0x88] sm:$0xf]
  %v3611 = vld [vmem:[%s1 + $0x8c] sm:$0xf]
  %v3612 = vld [vmem:[%s1 + $0x90] sm:$0xf]
  %v3613 = vld [vmem:[%s1 + $0x94] sm:$0xf]
  %v3614 = vld [vmem:[%s1 + $0x98] sm:$0xf]
  %v3615 = vld [vmem:[%s1 + $0x9c] sm:$0xf]
  %v3616 = vld [vmem:[%s1 + $0xa0] sm:$0xf]
  %v3617 = vld [vmem:[%s1 + $0xa4] sm:$0xf]
  %v3618 = vld [vmem:[%s1 + $0xa8] sm:$0xf]
  %v3619 = vld [vmem:[%s1 + $0xac] sm:$0xf]
  %v3620 = vld [vmem:[%s1 + $0xb0] sm:$0xf]
  %v3621 = vld [vmem:[%s1 + $0xb4] sm:$0xf]
  %v3622 = vld [vmem:[%s1 + $0xb8] sm:$0xf]
  %v3623 = vld [vmem:[%s1 + $0xbc] sm:$0xf]
  %v3624 = vpack.c.bf16 %v3549, %v3546
  %v3625 = vpack.c.bf16 %v3557, %v3554
  %v3626 = vpack.c.bf16 %v3565, %v3562
  %v3627 = vpack.c.bf16 %v3573, %v3570
  %v3628 = vpack.c.bf16 %v3581, %v3578
  %v3629 = vpack.c.bf16 %v3589, %v3586
  %v3630 = vpack.c.bf16 %v3597, %v3594
  %v3631 = vpack.c.bf16 %v3605, %v3602
  %v3632 = vld [vmem:[%s4 + $0x4] sm:$0x1]
  %v3633 = vlaneseq
  %v3634 = vshrl.u32 %v3633, 7
  %v3635 = vsub.s32 0, %v3634
  %v3636 = vrot.slane %v3632, %v3635
  %v3653 = vunpack.c.l.b16 %v3608
  %v3654 = vunpack.c.l.b16 %v3609
  %v3655 = vunpack.c.l.b16 %v3610
  %v3656 = vunpack.c.l.b16 %v3611
  %v3657 = vunpack.c.l.b16 %v3612
  %v3658 = vunpack.c.l.b16 %v3613
  %v3659 = vunpack.c.l.b16 %v3614
  %v3660 = vunpack.c.l.b16 %v3615
  %v3661 = vunpack.c.l.b16 %v3616
  %v3662 = vunpack.c.l.b16 %v3617
  %v3663 = vunpack.c.l.b16 %v3618
  %v3664 = vunpack.c.l.b16 %v3619
  %v3665 = vunpack.c.l.b16 %v3620
  %v3666 = vunpack.c.l.b16 %v3621
  %v3667 = vunpack.c.l.b16 %v3622
  %v3668 = vunpack.c.l.b16 %v3623
  %v3669 = vpack.c.b16 %v3654, %v3653
  %v3670 = vpack.c.b16 %v3656, %v3655
  %v3671 = vpack.c.b16 %v3658, %v3657
  %v3672 = vpack.c.b16 %v3660, %v3659
  %v3673 = vpack.c.b16 %v3662, %v3661
  %v3674 = vpack.c.b16 %v3664, %v3663
  %v3675 = vpack.c.b16 %v3666, %v3665
  %v3676 = vpack.c.b16 %v3668, %v3667
  %3685 = vmatprep.subr.bf16.mxu0 0
  %3686 = vmatpush1.bf16.msra.mxu0 %v3624
  %3687 = vmatprep.subr.bf16.mxu0 0
  %3688 = vmatpush1.bf16.msra.mxu0 %v3625
  %3689 = vmatprep.subr.bf16.mxu0 0
  %3690 = vmatpush1.bf16.msra.mxu0 %v3626
  %3691 = vmatprep.subr.bf16.mxu0 0
  %3692 = vmatpush1.bf16.msra.mxu0 %v3627
  %3693 = vmatprep.subr.bf16.mxu0 0
  %3694 = vmatpush1.bf16.msra.mxu0 %v3628
  %3695 = vmatprep.subr.bf16.mxu0 0
  %3696 = vmatpush1.bf16.msra.mxu0 %v3629
  %3697 = vmatprep.subr.bf16.mxu0 0
  %3698 = vmatpush1.bf16.msra.mxu0 %v3630
  %3699 = vmatprep.subr.bf16.mxu0 0
  %3700 = vmatpush1.bf16.msra.mxu0 %v3631
  %3701 = vmatprep.subr.bf16.mxu0 0
  %3702 = vmatpush1.bf16.msra.mxu0 0
  %3703 = vmatprep.subr.bf16.mxu0 0
  %3704 = vmatpush1.bf16.msra.mxu0 0
  %3705 = vmatprep.subr.bf16.mxu0 0
  %3706 = vmatpush1.bf16.msra.mxu0 0
  %3707 = vmatprep.subr.bf16.mxu0 0
  %3708 = vmatpush1.bf16.msra.mxu0 0
  %3709 = vmatprep.subr.bf16.mxu0 0
  %3710 = vmatpush1.bf16.msra.mxu0 0
  %3711 = vmatprep.subr.bf16.mxu0 0
  %3712 = vmatpush1.bf16.msra.mxu0 0
  %3713 = vmatprep.subr.bf16.mxu0 0
  %3714 = vmatpush1.bf16.msra.mxu0 0
  %3715 = vmatprep.subr.bf16.mxu0 0
  %3716 = vmatpush1.bf16.msra.mxu0 0
  %3717 = vmatprep.mubr.bf16.mxu0 0
  %3718 = vmatmul.mubr.bf16.gmra.mrb[0].mxu0 %v3669
  %v3719 = vpop.f32.mrb[0].mxu0
  %v3720 = vadd.f32 %v3636, %v3719
  %v3721 = vpop.f32.mrb[0].mxu0
  %v3722 = vpop.f32.mrb[0].mxu0
  %v3723 = vadd.f32 %v3636, %v3722
  %v3724 = vpop.f32.mrb[0].mxu0
  %3725 = vmatprep.mubr.bf16.mxu0 0
  %3726 = vmatmul.mubr.bf16.gmra.mrb[0].mxu0 %v3670
  %v3727 = vpop.f32.mrb[0].mxu0
  %v3728 = vadd.f32 %v3636, %v3727
  %v3729 = vpop.f32.mrb[0].mxu0
  %v3730 = vpop.f32.mrb[0].mxu0
  %v3731 = vadd.f32 %v3636, %v3730
  %v3732 = vpop.f32.mrb[0].mxu0
  %3733 = vmatprep.mubr.bf16.mxu0 0
  %3734 = vmatmul.mubr.bf16.gmra.mrb[0].mxu0 %v3671
  %v3735 = vpop.f32.mrb[0].mxu0
  %v3736 = vadd.f32 %v3636, %v3735
  %v3737 = vpop.f32.mrb[0].mxu0
  %v3738 = vpop.f32.mrb[0].mxu0
  %v3739 = vadd.f32 %v3636, %v3738
  %v3740 = vpop.f32.mrb[0].mxu0
  %3741 = vmatprep.mubr.bf16.mxu0 0
  %3742 = vmatmul.mubr.bf16.gmra.mrb[0].mxu0 %v3672
  %v3743 = vpop.f32.mrb[0].mxu0
  %v3744 = vadd.f32 %v3636, %v3743
  %v3745 = vpop.f32.mrb[0].mxu0
  %v3746 = vpop.f32.mrb[0].mxu0
  %v3747 = vadd.f32 %v3636, %v3746
  %v3748 = vpop.f32.mrb[0].mxu0
  %3749 = vmatprep.mubr.bf16.mxu0 0
  %3750 = vmatmul.mubr.bf16.gmra.mrb[0].mxu0 %v3673
  %v3751 = vpop.f32.mrb[0].mxu0
  %v3752 = vadd.f32 %v3636, %v3751
  %v3753 = vpop.f32.mrb[0].mxu0
  %v3754 = vpop.f32.mrb[0].mxu0
  %v3755 = vadd.f32 %v3636, %v3754
  %v3756 = vpop.f32.mrb[0].mxu0
  %3757 = vmatprep.mubr.bf16.mxu0 0
  %3758 = vmatmul.mubr.bf16.gmra.mrb[0].mxu0 %v3674
  %v3759 = vpop.f32.mrb[0].mxu0
  %v3760 = vadd.f32 %v3636, %v3759
  %v3761 = vpop.f32.mrb[0].mxu0
  %v3762 = vpop.f32.mrb[0].mxu0
  %v3763 = vadd.f32 %v3636, %v3762
  %v3764 = vpop.f32.mrb[0].mxu0
  %3765 = vmatprep.mubr.bf16.mxu0 0
  %3766 = vmatmul.mubr.bf16.gmra.mrb[0].mxu0 %v3675
  %v3767 = vpop.f32.mrb[0].mxu0
  %v3768 = vadd.f32 %v3636, %v3767
  %v3769 = vpop.f32.mrb[0].mxu0
  %v3770 = vpop.f32.mrb[0].mxu0
  %v3771 = vadd.f32 %v3636, %v3770
  %v3772 = vpop.f32.mrb[0].mxu0
  %3773 = vmatprep.mubr.bf16.mxu0 0
  %3774 = vmatmul.mubr.bf16.gmra.mrb[0].mxu0 %v3676
  %v3775 = vpop.f32.mrb[0].mxu0
  %v3776 = vadd.f32 %v3636, %v3775
  %v3777 = vpop.f32.mrb[0].mxu0
  %v3778 = vpop.f32.mrb[0].mxu0
  %v3779 = vadd.f32 %v3636, %v3778
  %v3780 = vpop.f32.mrb[0].mxu0
  %3781 = vdwg.mxu0
  %v3782 = vmax.f32 %v3720, 0.0
  %v3783 = vmax.f32 %v3723, 0.0
  %v3784 = vmax.f32 %v3728, 0.0
  %v3785 = vmax.f32 %v3731, 0.0
  %v3786 = vmax.f32 %v3736, 0.0
  %v3787 = vmax.f32 %v3739, 0.0
  %v3788 = vmax.f32 %v3744, 0.0
  %v3789 = vmax.f32 %v3747, 0.0
  %v3790 = vmax.f32 %v3752, 0.0
  %v3791 = vmax.f32 %v3755, 0.0
  %v3792 = vmax.f32 %v3760, 0.0
  %v3793 = vmax.f32 %v3763, 0.0
  %v3794 = vmax.f32 %v3768, 0.0
  %v3795 = vmax.f32 %v3771, 0.0
  %v3796 = vmax.f32 %v3776, 0.0
  %v3797 = vmax.f32 %v3779, 0.0
  %v3798 = vld [vmem:[%s3 + $0x40] sm:$0xf]
  %v3799 = vld [vmem:[%s3 + $0x44] sm:$0xf]
  %v3800 = vld [vmem:[%s3 + $0x48] sm:$0xf]
  %v3801 = vld [vmem:[%s3 + $0x4c] sm:$0xf]
  %v3802 = vld [vmem:[%s4 + $0x7] sm:$0x1]
  %v3803 = vpack.c.bf16 %v3783, %v3782
  %v3804 = vpack.c.bf16 %v3785, %v3784
  %v3805 = vpack.c.bf16 %v3787, %v3786
  %v3806 = vpack.c.bf16 %v3789, %v3788
  %v3807 = vpack.c.bf16 %v3791, %v3790
  %v3808 = vpack.c.bf16 %v3793, %v3792
  %v3809 = vpack.c.bf16 %v3795, %v3794
  %v3810 = vpack.c.bf16 %v3797, %v3796
  %v3811 = vlaneseq
  %v3812 = vshrl.u32 %v3811, 7
  %v3813 = vsub.s32 0, %v3812
  %v3814 = vrot.slane %v3802, %v3813
  %v3819 = vunpack.c.l.b16 %v3798
  %v3820 = vunpack.c.l.b16 %v3799
  %v3821 = vunpack.c.l.b16 %v3800
  %v3822 = vunpack.c.l.b16 %v3801
  %v3823 = vpack.c.b16 %v3820, %v3819
  %v3824 = vpack.c.b16 %v3822, %v3821
  %v3828 = vsel %vm404, %v3803, 0
  %v3831 = vsel %vm404, %v3804, 0
  %v3834 = vsel %vm404, %v3805, 0
  %v3837 = vsel %vm404, %v3806, 0
  %v3840 = vsel %vm404, %v3807, 0
  %v3843 = vsel %vm404, %v3808, 0
  %v3846 = vsel %vm404, %v3809, 0
  %v3849 = vsel %vm404, %v3810, 0
  %3851 = vmatprep.subr.bf16.mxu0 0
  %3852 = vmatpush1.bf16.msra.mxu0 %v3823
  %3853 = vmatprep.subr.bf16.mxu0 0
  %3854 = vmatpush1.bf16.msra.mxu0 %v3824
  %3855 = vmatprep.subr.bf16.mxu0 0
  %3856 = vmatpush1.bf16.msra.mxu0 0
  %3857 = vmatprep.subr.bf16.mxu0 0
  %3858 = vmatpush1.bf16.msra.mxu0 0
  %3859 = vmatprep.subr.bf16.mxu0 0
  %3860 = vmatpush1.bf16.msra.mxu0 0
  %3861 = vmatprep.subr.bf16.mxu0 0
  %3862 = vmatpush1.bf16.msra.mxu0 0
  %3863 = vmatprep.subr.bf16.mxu0 0
  %3864 = vmatpush1.bf16.msra.mxu0 0
  %3865 = vmatprep.subr.bf16.mxu0 0
  %3866 = vmatpush1.bf16.msra.mxu0 0
  %3867 = vmatprep.subr.bf16.mxu0 0
  %3868 = vmatpush1.bf16.msra.mxu0 0
  %3869 = vmatprep.subr.bf16.mxu0 0
  %3870 = vmatpush1.bf16.msra.mxu0 0
  %3871 = vmatprep.subr.bf16.mxu0 0
  %3872 = vmatpush1.bf16.msra.mxu0 0
  %3873 = vmatprep.subr.bf16.mxu0 0
  %3874 = vmatpush1.bf16.msra.mxu0 0
  %3875 = vmatprep.subr.bf16.mxu0 0
  %3876 = vmatpush1.bf16.msra.mxu0 0
  %3877 = vmatprep.subr.bf16.mxu0 0
  %3878 = vmatpush1.bf16.msra.mxu0 0
  %3879 = vmatprep.subr.bf16.mxu0 0
  %3880 = vmatpush1.bf16.msra.mxu0 0
  %3881 = vmatprep.subr.bf16.mxu0 0
  %3882 = vmatpush1.bf16.msra.mxu0 0
  %3883 = vmatprep.mubr.bf16.mxu0 0
  %3884 = vmatmul.mubr.bf16.gmra.mrb[0].mxu0 %v3828
  %v3885 = vpop.f32.mrb[0].mxu0
  %v3886 = vadd.f32 %v3814, %v3885
  %v3887 = vpop.f32.mrb[0].mxu0
  %v3888 = vpop.f32.mrb[0].mxu0
  %v3889 = vadd.f32 %v3814, %v3888
  %v3890 = vpop.f32.mrb[0].mxu0
  %3891 = vmatprep.mubr.bf16.mxu0 0
  %3892 = vmatmul.mubr.bf16.gmra.mrb[0].mxu0 %v3831
  %v3893 = vpop.f32.mrb[0].mxu0
  %v3894 = vadd.f32 %v3814, %v3893
  %v3895 = vpop.f32.mrb[0].mxu0
  %v3896 = vpop.f32.mrb[0].mxu0
  %v3897 = vadd.f32 %v3814, %v3896
  %v3898 = vpop.f32.mrb[0].mxu0
  %3899 = vmatprep.mubr.bf16.mxu0 0
  %3900 = vmatmul.mubr.bf16.gmra.mrb[0].mxu0 %v3834
  %v3901 = vpop.f32.mrb[0].mxu0
  %v3902 = vadd.f32 %v3814, %v3901
  %v3903 = vpop.f32.mrb[0].mxu0
  %v3904 = vpop.f32.mrb[0].mxu0
  %v3905 = vadd.f32 %v3814, %v3904
  %v3906 = vpop.f32.mrb[0].mxu0
  %3907 = vmatprep.mubr.bf16.mxu0 0
  %3908 = vmatmul.mubr.bf16.gmra.mrb[0].mxu0 %v3837
  %v3909 = vpop.f32.mrb[0].mxu0
  %v3910 = vadd.f32 %v3814, %v3909
  %v3911 = vpop.f32.mrb[0].mxu0
  %v3912 = vpop.f32.mrb[0].mxu0
  %v3913 = vadd.f32 %v3814, %v3912
  %v3914 = vpop.f32.mrb[0].mxu0
  %3915 = vmatprep.mubr.bf16.mxu0 0
  %3916 = vmatmul.mubr.bf16.gmra.mrb[0].mxu0 %v3840
  %v3917 = vpop.f32.mrb[0].mxu0
  %v3918 = vadd.f32 %v3814, %v3917
  %v3919 = vpop.f32.mrb[0].mxu0
  %v3920 = vpop.f32.mrb[0].mxu0
  %v3921 = vadd.f32 %v3814, %v3920
  %v3922 = vpop.f32.mrb[0].mxu0
  %3923 = vmatprep.mubr.bf16.mxu0 0
  %3924 = vmatmul.mubr.bf16.gmra.mrb[0].mxu0 %v3843
  %v3925 = vpop.f32.mrb[0].mxu0
  %v3926 = vadd.f32 %v3814, %v3925
  %v3927 = vpop.f32.mrb[0].mxu0
  %v3928 = vpop.f32.mrb[0].mxu0
  %v3929 = vadd.f32 %v3814, %v3928
  %v3930 = vpop.f32.mrb[0].mxu0
  %3931 = vmatprep.mubr.bf16.mxu0 0
  %3932 = vmatmul.mubr.bf16.gmra.mrb[0].mxu0 %v3846
  %v3933 = vpop.f32.mrb[0].mxu0
  %v3934 = vadd.f32 %v3814, %v3933
  %v3935 = vpop.f32.mrb[0].mxu0
  %v3936 = vpop.f32.mrb[0].mxu0
  %v3937 = vadd.f32 %v3814, %v3936
  %v3938 = vpop.f32.mrb[0].mxu0
  %3939 = vmatprep.mubr.bf16.mxu0 0
  %3940 = vmatmul.mubr.bf16.gmra.mrb[0].mxu0 %v3849
  %v3941 = vpop.f32.mrb[0].mxu0
  %v3942 = vadd.f32 %v3814, %v3941
  %v3943 = vpop.f32.mrb[0].mxu0
  %v3944 = vpop.f32.mrb[0].mxu0
  %v3945 = vadd.f32 %v3814, %v3944
  %v3946 = vpop.f32.mrb[0].mxu0
  %3947 = vdwg.mxu0
  %v3948 = vxor.u32 %v3886, 2147483648
  %v3949 = vxor.u32 %v3889, 2147483648
  %v3950 = vxor.u32 %v3894, 2147483648
  %v3951 = vxor.u32 %v3897, 2147483648
  %v3952 = vxor.u32 %v3902, 2147483648
  %v3953 = vxor.u32 %v3905, 2147483648
  %v3954 = vxor.u32 %v3910, 2147483648
  %v3955 = vxor.u32 %v3913, 2147483648
  %v3956 = vxor.u32 %v3918, 2147483648
  %v3957 = vxor.u32 %v3921, 2147483648
  %v3958 = vxor.u32 %v3926, 2147483648
  %v3959 = vxor.u32 %v3929, 2147483648
  %v3960 = vxor.u32 %v3934, 2147483648
  %v3961 = vxor.u32 %v3937, 2147483648
  %v3962 = vxor.u32 %v3942, 2147483648
  %v3963 = vxor.u32 %v3945, 2147483648
  %v3964 = vmul.f32 %v3948, 1.442695
  %v3965 = vpow.pop %v3964
  %v3966 = vmul.f32 %v3949, 1.442695
  %v3967 = vpow.pop %v3966
  %v3968 = vmul.f32 %v3950, 1.442695
  %v3969 = vpow.pop %v3968
  %v3970 = vmul.f32 %v3951, 1.442695
  %v3971 = vpow.pop %v3970
  %v3972 = vmul.f32 %v3952, 1.442695
  %v3973 = vpow.pop %v3972
  %v3974 = vmul.f32 %v3953, 1.442695
  %v3975 = vpow.pop %v3974
  %v3976 = vmul.f32 %v3954, 1.442695
  %v3977 = vpow.pop %v3976
  %v3978 = vmul.f32 %v3955, 1.442695
  %v3979 = vpow.pop %v3978
  %v3980 = vmul.f32 %v3956, 1.442695
  %v3981 = vpow.pop %v3980
  %v3982 = vmul.f32 %v3957, 1.442695
  %v3983 = vpow.pop %v3982
  %v3984 = vmul.f32 %v3958, 1.442695
  %v3985 = vpow.pop %v3984
  %v3986 = vmul.f32 %v3959, 1.442695
  %v3987 = vpow.pop %v3986
  %v3988 = vmul.f32 %v3960, 1.442695
  %v3989 = vpow.pop %v3988
  %v3990 = vmul.f32 %v3961, 1.442695
  %v3991 = vpow.pop %v3990
  %v3992 = vmul.f32 %v3962, 1.442695
  %v3993 = vpow.pop %v3992
  %v3994 = vmul.f32 %v3963, 1.442695
  %v3995 = vpow.pop %v3994
  %v3996 = vadd.f32 %v3965, 1.0
  %v3997 = vadd.f32 %v3967, 1.0
  %v3998 = vadd.f32 %v3969, 1.0
  %v3999 = vadd.f32 %v3971, 1.0
  %v4000 = vadd.f32 %v3973, 1.0
  %v4001 = vadd.f32 %v3975, 1.0
  %v4002 = vadd.f32 %v3977, 1.0
  %v4003 = vadd.f32 %v3979, 1.0
  %v4004 = vadd.f32 %v3981, 1.0
  %v4005 = vadd.f32 %v3983, 1.0
  %v4006 = vadd.f32 %v3985, 1.0
  %v4007 = vadd.f32 %v3987, 1.0
  %v4008 = vadd.f32 %v3989, 1.0
  %v4009 = vadd.f32 %v3991, 1.0
  %v4010 = vadd.f32 %v3993, 1.0
  %v4011 = vadd.f32 %v3995, 1.0
  %v4012 = vrcp.pop %v3996
  %v4013 = vmul.f32 1.0, %v4012
  %v4014 = vrcp.pop %v3997
  %v4015 = vmul.f32 1.0, %v4014
  %v4016 = vrcp.pop %v3998
  %v4017 = vmul.f32 1.0, %v4016
  %v4018 = vrcp.pop %v3999
  %v4019 = vmul.f32 1.0, %v4018
  %v4020 = vrcp.pop %v4000
  %v4021 = vmul.f32 1.0, %v4020
  %v4022 = vrcp.pop %v4001
  %v4023 = vmul.f32 1.0, %v4022
  %v4024 = vrcp.pop %v4002
  %v4025 = vmul.f32 1.0, %v4024
  %v4026 = vrcp.pop %v4003
  %v4027 = vmul.f32 1.0, %v4026
  %v4028 = vrcp.pop %v4004
  %v4029 = vmul.f32 1.0, %v4028
  %v4030 = vrcp.pop %v4005
  %v4031 = vmul.f32 1.0, %v4030
  %v4032 = vrcp.pop %v4006
  %v4033 = vmul.f32 1.0, %v4032
  %v4034 = vrcp.pop %v4007
  %v4035 = vmul.f32 1.0, %v4034
  %v4036 = vrcp.pop %v4008
  %v4037 = vmul.f32 1.0, %v4036
  %v4038 = vrcp.pop %v4009
  %v4039 = vmul.f32 1.0, %v4038
  %v4040 = vrcp.pop %v4010
  %v4041 = vmul.f32 1.0, %v4040
  %v4042 = vrcp.pop %v4011
  %v4043 = vmul.f32 1.0, %v4042
  %4044 = vst [vmem:[%s5] sm:$0xff] %v4013
  %4045 = vst [vmem:[%s5 + $0x8] sm:$0xff] %v4015
  %4046 = vst [vmem:[%s5 + $0x10] sm:$0xff] %v4017
  %4047 = vst [vmem:[%s5 + $0x18] sm:$0xff] %v4019
  %4048 = vst [vmem:[%s5 + $0x20] sm:$0xff] %v4021
  %4049 = vst [vmem:[%s5 + $0x28] sm:$0xff] %v4023
  %4050 = vst [vmem:[%s5 + $0x30] sm:$0xff] %v4025
  %4051 = vst [vmem:[%s5 + $0x38] sm:$0xff] %v4027
  %4052 = vst [vmem:[%s5 + $0x40] sm:$0xff] %v4029
  %4053 = vst [vmem:[%s5 + $0x48] sm:$0xff] %v4031
  %4054 = vst [vmem:[%s5 + $0x50] sm:$0xff] %v4033
  %4055 = vst [vmem:[%s5 + $0x58] sm:$0xff] %v4035
  %4056 = vst [vmem:[%s5 + $0x60] sm:$0xff] %v4037
  %4057 = vst [vmem:[%s5 + $0x68] sm:$0xff] %v4039
  %4058 = vst [vmem:[%s5 + $0x70] sm:$0xff] %v4041
  %4059 = vst [vmem:[%s5 + $0x78] sm:$0xff] %v4043
  // Predicated region
  $region22: #{glstm7_forward.1} parent=0 // pred_check
    _
  $region23: #{glstm7_forward.1} parent=0 // pred_check_branch
    %4061 = sbr.rel (0) target = $region25
  $region24: #{glstm7_forward.1} parent=0 // pred_region
    _
  $region25: #{glstm7_forward.1} parent=0 // pred_fallthru
    _
  // Predicated region
  $region26: #{glstm7_forward.1} parent=0 // pred_check
    _
  $region27: #{glstm7_forward.1} parent=0 // pred_check_branch
    %4063 = sbr.rel (0) target = $region29
  $region28: #{glstm7_forward.1} parent=0 // pred_region
    _
  $region29: #{glstm7_forward.1} parent=0 // pred_fallthru
    _

</llo_original>
